<compile_context>
chip_gen: v7x
topology: tpu7x:2x2x1
jax: 0.10.0
libtpu: 0.0.40
codegen_flags: <defaults>
</compile_context>

<pallas_src>
import functools

import numpy as np
import jax
import jax.numpy as jnp
from jax.experimental import pallas as pl
from jax.experimental.pallas import tpu as pltpu

# --- MelSpectrogram(sample_rate=16000, n_fft=1024, hop_length=320, win_length=1024,
#                    f_min=0, f_max=16000, n_mels=64) constants ---------------------
SAMPLE_RATE = 16000
N_FFT = 1024
HOP = 320
WIN = 1024
N_MELS = 64
N_MELS_PAD = 128                 # lane-dense output width (sliced back to 64 in wrapper)
F_MIN = 0.0
F_MAX = 16000.0
N_FREQS = N_FFT // 2 + 1         # 513 one-sided bins
EPS = 1e-5


def _round_up(x, m):
    return (x + m - 1) // m * m


def _mel_filterbank():
    """torchaudio.functional.melscale_fbanks (htk scale, norm=None) -> (513, 64)."""
    all_freqs = np.linspace(0, SAMPLE_RATE // 2, N_FREQS)

    def hz_to_mel(f):
        return 2595.0 * np.log10(1.0 + f / 700.0)

    def mel_to_hz(m):
        return 700.0 * (10.0 ** (m / 2595.0) - 1.0)

    m_pts = np.linspace(hz_to_mel(F_MIN), hz_to_mel(F_MAX), N_MELS + 2)
    f_pts = mel_to_hz(m_pts)
    f_diff = f_pts[1:] - f_pts[:-1]                       # (n_mels + 1,)
    slopes = f_pts[None, :] - all_freqs[:, None]          # (n_freqs, n_mels + 2)
    down = -slopes[:, :-2] / f_diff[:-1]
    up = slopes[:, 2:] / f_diff[1:]
    return np.maximum(0.0, np.minimum(down, up)).astype(np.float32)   # (513, 64)


def _weights():
    """Windowed DFT matrix W (1024, 1024) and expanded mel matrix FB2 (1024, 128), both bf16.

    W columns 0..512   : hann[n] *  cos(2*pi*n*k/N), k = 0..512   (real parts, incl. DC & Nyquist)
    W columns 513..1023: hann[n] * -sin(2*pi*n*k/N), k = 1..511   (imag parts; DC/Nyquist imag == 0)
    FB2 rows follow the same column order so (Y*Y) @ FB2 == power_spectrum @ mel_fb exactly.
    """
    n = np.arange(N_FFT, dtype=np.float64)
    hann = 0.5 - 0.5 * np.cos(2.0 * np.pi * n / N_FFT)     # torch.hann_window(periodic=True)
    k_re = np.arange(N_FREQS, dtype=np.float64)
    k_im = np.arange(1, N_FREQS - 1, dtype=np.float64)
    ang_re = 2.0 * np.pi * n[:, None] * k_re[None, :] / N_FFT
    ang_im = 2.0 * np.pi * n[:, None] * k_im[None, :] / N_FFT
    w = np.concatenate([np.cos(ang_re), -np.sin(ang_im)], axis=1)   # (1024, 1024)
    w *= hann[:, None]

    fb = _mel_filterbank()                                  # (513, 64)
    fb2 = np.zeros((N_FFT, N_MELS_PAD), np.float32)
    fb2[:N_FREQS, :N_MELS] = fb                             # real^2 rows: bins 0..512
    fb2[N_FREQS:, :N_MELS] = fb[1:N_FREQS - 1]              # imag^2 rows: bins 1..511
    return (jnp.asarray(w, dtype=jnp.bfloat16),
            jnp.asarray(fb2, dtype=jnp.bfloat16))


# ----------------------------- Pallas kernel ---------------------------------------
def mel_featurizer_kernel(num_frames, tile_f,
                          frames_ref, w_ref, fb_ref,
                          out_ref, mean_ref, rstd_ref,
                          sum_ref, ssq_ref):
    t = pl.program_id(1)
    nt = pl.num_programs(1)

    # Windowed one-sided DFT (real+imag in one MXU matmul; window folded into W).
    y = jnp.dot(frames_ref[0], w_ref[...], preferred_element_type=jnp.float32)  # (tile_f, 1024)
    sq = y * y                                                                   # power components
    mel = jnp.dot(sq.astype(jnp.bfloat16), fb_ref[...],
                  preferred_element_type=jnp.float32)                            # (tile_f, 128)

    out_ref[0] = mel                          # unnormalized mel, lane-dense 128-wide store

    # Streaming per-utterance sum / sum-of-squares over valid frames only.
    row = t * tile_f + jax.lax.broadcasted_iota(jnp.int32, (tile_f, 1), 0)
    mel_v = jnp.where(row < num_frames, mel, 0.0)

    @pl.when(t == 0)
    def _():
        sum_ref[...] = jnp.zeros_like(sum_ref)
        ssq_ref[...] = jnp.zeros_like(ssq_ref)

    sum_ref[...] += jnp.sum(mel_v, axis=0, keepdims=True)
    ssq_ref[...] += jnp.sum(mel_v * mel_v, axis=0, keepdims=True)

    @pl.when(t == nt - 1)
    def _():
        n = jnp.float32(num_frames)
        s = sum_ref[...]
        mean = s / n
        # torch.std default is unbiased (divide by n-1); n==1 gives inf/NaN, same as torch.
        var = jnp.maximum(ssq_ref[...] - s * mean, 0.0) / (n - 1.0)
        mean_ref[0] = mean
        rstd_ref[0] = 1.0 / (jnp.sqrt(var) + EPS)


# ----------------------------- Wrapper ----------------------------------------------
def mel_featurizer(waveforms, input_lens_ratio):
    waveforms = waveforms.astype(jnp.float32)
    B, T = waveforms.shape
    num_frames = T // HOP + 1                       # center=True STFT frame count
    tile_f = min(256, _round_up(num_frames, 16))    # time tile (bf16-friendly multiple of 16)
    f_pad = _round_up(num_frames, tile_f)
    nt = f_pad // tile_f

    # Glue: reflect padding (center=True, pad_mode='reflect') + framing via static slices.
    padded = jnp.pad(waveforms, ((0, 0), (N_FFT // 2, N_FFT // 2)), mode="reflect")
    need = (num_frames + 3) * HOP
    if need > padded.shape[1]:
        padded = jnp.pad(padded, ((0, 0), (0, need - padded.shape[1])))
    q = padded[:, :need].reshape(B, num_frames + 3, HOP)
    rem = N_FFT - 3 * HOP                           # 1024 = 3*320 + 64
    frames = jnp.concatenate(
        [q[:, 0:num_frames],
         q[:, 1:num_frames + 1],
         q[:, 2:num_frames + 2],
         q[:, 3:num_frames + 3, :rem]], axis=2).astype(jnp.bfloat16)   # (B, F, 1024)
    frames = jnp.pad(frames, ((0, 0), (0, f_pad - num_frames), (0, 0)))

    w_mat, fb2 = _weights()

    kernel = functools.partial(mel_featurizer_kernel, num_frames, tile_f)
    out_mel, mean, rstd = pl.pallas_call(
        kernel,
        out_shape=(
            jax.ShapeDtypeStruct((B, f_pad, N_MELS_PAD), jnp.float32),   # unnormalized mel
            jax.ShapeDtypeStruct((B, 1, N_MELS_PAD), jnp.float32),       # per-utterance mean
            jax.ShapeDtypeStruct((B, 1, N_MELS_PAD), jnp.float32),       # 1 / (std + eps)
        ),
        grid_spec=pltpu.PrefetchScalarGridSpec(
            num_scalar_prefetch=0,
            grid=(B, nt),
            in_specs=[
                pl.BlockSpec((1, tile_f, N_FFT), lambda b, t: (b, t, 0)),     # framed audio
                pl.BlockSpec((N_FFT, N_FFT), lambda b, t: (0, 0)),            # windowed DFT matrix
                pl.BlockSpec((N_FFT, N_MELS_PAD), lambda b, t: (0, 0)),       # expanded mel fb
            ],
            out_specs=[
                pl.BlockSpec((1, tile_f, N_MELS_PAD), lambda b, t: (b, t, 0)),
                pl.BlockSpec((1, 1, N_MELS_PAD), lambda b, t: (b, 0, 0)),
                pl.BlockSpec((1, 1, N_MELS_PAD), lambda b, t: (b, 0, 0)),
            ],
            scratch_shapes=[pltpu.VMEM((1, N_MELS_PAD), jnp.float32),
                            pltpu.VMEM((1, N_MELS_PAD), jnp.float32)],
        ),
        compiler_params=pltpu.CompilerParams(
            dimension_semantics=("parallel", "arbitrary")),
    )(frames, w_mat, fb2)

    # input_lens = (ratio * n_frames).int()  (truncation toward zero)
    input_lens = (input_lens_ratio.astype(jnp.float32) * num_frames).astype(jnp.int32)

    # Cheap elementwise epilogue: apply CMVN + ~make_pad_mask, slice away padding.
    mel = out_mel[:, :num_frames, :N_MELS]
    feat = (mel - mean[:, :, :N_MELS]) * rstd[:, :, :N_MELS]
    mask = jnp.arange(num_frames)[None, :, None] < input_lens[:, None, None]
    feature = jnp.where(mask, feat, 0.0)
    return feature, input_lens


# ----------------------------- Pure-JAX reference (for sanity check) ----------------
def _reference(waveforms, input_lens_ratio):
    B, T = waveforms.shape
    num_frames = T // HOP + 1
    padded = jnp.pad(waveforms, ((0, 0), (N_FFT // 2, N_FFT // 2)), mode="reflect")
    idx = jnp.arange(num_frames)[:, None] * HOP + jnp.arange(N_FFT)[None, :]
    hann = 0.5 - 0.5 * jnp.cos(2.0 * jnp.pi * jnp.arange(N_FFT) / N_FFT)
    frames = padded[:, idx] * hann[None, None, :]
    spec = jnp.fft.rfft(frames, n=N_FFT, axis=-1)
    power = jnp.abs(spec) ** 2                                      # (B, F, 513)
    fb = jnp.asarray(_mel_filterbank())                             # (513, 64)
    mel = power @ fb                                                # (B, F, 64)
    mean = jnp.mean(mel, axis=1, keepdims=True)
    std = jnp.std(mel, axis=1, keepdims=True, ddof=1)
    feat = (mel - mean) / (std + EPS)
    lens = (input_lens_ratio.astype(jnp.float32) * num_frames).astype(jnp.int32)
    mask = (jnp.arange(num_frames)[None, :, None] < lens[:, None, None]).astype(feat.dtype)
    return feat * mask, lens


if __name__ == "__main__":
    key = jax.random.PRNGKey(0)
    B = 2
    T = 3200                                  # 0.2 s @ 16 kHz -> 11 frames of 64 mels
    k1, _ = jax.random.split(key)
    waveforms = 0.1 * jax.random.normal(k1, (B, T), dtype=jnp.float32)
    input_lens_ratio = jnp.array([1.0, 0.6], dtype=jnp.float32)

    feature, input_lens = mel_featurizer(waveforms, input_lens_ratio)
    feature = jax.block_until_ready(feature)
    input_lens = jax.block_until_ready(input_lens)

    ref_feat, ref_lens = _reference(waveforms, input_lens_ratio)
    ref_feat = jax.block_until_ready(ref_feat)

    assert feature.shape == (B, T // HOP + 1, N_MELS)
    assert np.array_equal(np.asarray(input_lens), np.asarray(ref_lens))
    np.testing.assert_allclose(np.asarray(feature), np.asarray(ref_feat),
                               rtol=5e-2, atol=5e-2)
    print("KERNEL_OK")
</pallas_src>

<mosaic_0001>
module attributes {stable_mosaic.version = 11 : i64} {
  func.func @mel_featurizer_kernel(%arg0: i32, %arg1: i32, %arg2: memref<1x16x1024xbf16, #tpu.memory_space<vmem>>, %arg3: memref<1024x1024xbf16, #tpu.memory_space<vmem>>, %arg4: memref<1024x128xbf16, #tpu.memory_space<vmem>>, %arg5: memref<1x16x128xf32, #tpu.memory_space<vmem>>, %arg6: memref<1x1x128xf32, #tpu.memory_space<vmem>>, %arg7: memref<1x1x128xf32, #tpu.memory_space<vmem>>, %arg8: memref<1x128xf32, #tpu.memory_space<vmem>>, %arg9: memref<1x128xf32, #tpu.memory_space<vmem>>) attributes {dimension_semantics = [#tpu.dimension_semantics<parallel>, #tpu.dimension_semantics<arbitrary>], iteration_bounds = array<i64: 2, 1>, scalar_prefetch = 0 : i64, scratch_operands = 2 : i64, tpu.core_type = #tpu.core_type<tc>, window_params = [{transform_indices = @transform_0, window_bounds = array<i64: 1, 16, 1024>}, {pipeline_mode = #tpu.pipeline_mode<synchronous>, transform_indices = @transform_1, window_bounds = array<i64: 1024, 1024>}, {pipeline_mode = #tpu.pipeline_mode<synchronous>, transform_indices = @transform_2, window_bounds = array<i64: 1024, 128>}, {transform_indices = @transform_3, window_bounds = array<i64: 1, 16, 128>}, {transform_indices = @transform_4, window_bounds = array<i64: 1, 1, 128>}, {transform_indices = @transform_5, window_bounds = array<i64: 1, 1, 128>}]} {
    %c0 = arith.constant 0 : index
    %c0_0 = arith.constant 0 : index
    %c0_1 = arith.constant 0 : index
    %0 = vector.load %arg2[%c0, %c0_0, %c0_1] : memref<1x16x1024xbf16, #tpu.memory_space<vmem>>, vector<1x16x1024xbf16>
    %1 = vector.shape_cast %0 : vector<1x16x1024xbf16> to vector<16x1024xbf16>
    %c0_2 = arith.constant 0 : index
    %c0_3 = arith.constant 0 : index
    %2 = vector.load %arg3[%c0_2, %c0_3] : memref<1024x1024xbf16, #tpu.memory_space<vmem>>, vector<1024x1024xbf16>
    %cst = arith.constant dense<0.000000e+00> : vector<16x1024xf32>
    %3 = tpu.matmul %1, %2, %cst {dimension_numbers = #tpu.dot_dimension_numbers<[1], [0], [0], [1], [0, 0, 1, 1], [], []>} : vector<16x1024xbf16>, vector<1024x1024xbf16>, vector<16x1024xf32> -> vector<16x1024xf32>
    %4 = arith.mulf %3, %3 : vector<16x1024xf32>
    %5 = arith.truncf %4 : vector<16x1024xf32> to vector<16x1024xbf16>
    %c0_4 = arith.constant 0 : index
    %c0_5 = arith.constant 0 : index
    %6 = vector.load %arg4[%c0_4, %c0_5] : memref<1024x128xbf16, #tpu.memory_space<vmem>>, vector<1024x128xbf16>
    %cst_6 = arith.constant dense<0.000000e+00> : vector<16x128xf32>
    %7 = tpu.matmul %5, %6, %cst_6 {dimension_numbers = #tpu.dot_dimension_numbers<[1], [0], [0], [1], [0, 0, 1, 1], [], []>} : vector<16x1024xbf16>, vector<1024x128xbf16>, vector<16x128xf32> -> vector<16x128xf32>
    %c0_7 = arith.constant 0 : index
    %c0_8 = arith.constant 0 : index
    %c0_9 = arith.constant 0 : index
    %8 = vector.load %arg5[%c0_7, %c0_8, %c0_9] : memref<1x16x128xf32, #tpu.memory_space<vmem>>, vector<1x16x128xf32>
    %9 = vector.shape_cast %8 : vector<1x16x128xf32> to vector<16x128xf32>
    %10 = vector.shape_cast %7 : vector<16x128xf32> to vector<1x16x128xf32>
    tpu.vector_store %arg5[%c0_7, %c0_8, %c0_9], %10 {strides = array<i32>} : memref<1x16x128xf32, #tpu.memory_space<vmem>>, vector<1x16x128xf32>,
    %c16_i32 = arith.constant 16 : i32
    %11 = arith.muli %arg1, %c16_i32 : i32
    %12 = tpu.iota {dimensions = array<i32: 0>} : vector<16x1xi32>
    %13 = vector.broadcast %11 : i32 to vector<16x1xi32>
    %14 = arith.addi %13, %12 : vector<16x1xi32>
    %c11_i32 = arith.constant 11 : i32
    %15 = vector.broadcast %c11_i32 : i32 to vector<16x1xi32>
    %16 = arith.cmpi slt, %14, %15 : vector<16x1xi32>
    %cst_10 = arith.constant 0.000000e+00 : f32
    %17 = vector.shape_cast %16 : vector<16x1xi1> to vector<16x1xi1>
    %18 = vector.broadcast %17 : vector<16x1xi1> to vector<16x128xi1>
    %19 = vector.broadcast %cst_10 : f32 to vector<16x128xf32>
    %20 = arith.select %18, %7, %19 : vector<16x128xi1>, vector<16x128xf32>
    %c0_i32 = arith.constant 0 : i32
    %21 = arith.cmpi eq, %arg1, %c0_i32 : i32
    %22 = arith.extui %21 : i1 to i32
    %c0_i32_11 = arith.constant 0 : i32
    %23 = arith.cmpi ne, %22, %c0_i32_11 : i32
    scf.if %23 {
      %cst_24 = arith.constant 0.000000e+00 : f32
      %38 = vector.broadcast %cst_24 : f32 to vector<1x128xf32>
      %c0_25 = arith.constant 0 : index
      %c0_26 = arith.constant 0 : index
      %39 = vector.load %arg8[%c0_25, %c0_26] : memref<1x128xf32, #tpu.memory_space<vmem>>, vector<1x128xf32>
      tpu.vector_store %arg8[%c0_25, %c0_26], %38 {strides = array<i32>} : memref<1x128xf32, #tpu.memory_space<vmem>>, vector<1x128xf32>,
      %cst_27 = arith.constant 0.000000e+00 : f32
      %40 = vector.broadcast %cst_27 : f32 to vector<1x128xf32>
      %c0_28 = arith.constant 0 : index
      %c0_29 = arith.constant 0 : index
      %41 = vector.load %arg9[%c0_28, %c0_29] : memref<1x128xf32, #tpu.memory_space<vmem>>, vector<1x128xf32>
      tpu.vector_store %arg9[%c0_28, %c0_29], %40 {strides = array<i32>} : memref<1x128xf32, #tpu.memory_space<vmem>>, vector<1x128xf32>,
    } else {
    }
    %c0_12 = arith.constant 0 : index
    %c0_13 = arith.constant 0 : index
    %24 = vector.load %arg8[%c0_12, %c0_13] : memref<1x128xf32, #tpu.memory_space<vmem>>, vector<1x128xf32>
    %cst_14 = arith.constant dense<0.000000e+00> : vector<128xf32>
    %25 = vector.multi_reduction <add>, %20, %cst_14 [0] : vector<16x128xf32> to vector<128xf32>
    %26 = vector.shape_cast %25 : vector<128xf32> to vector<1x128xf32>
    %27 = arith.addf %24, %26 : vector<1x128xf32>
    %c0_15 = arith.constant 0 : index
    %c0_16 = arith.constant 0 : index
    %28 = vector.load %arg8[%c0_15, %c0_16] : memref<1x128xf32, #tpu.memory_space<vmem>>, vector<1x128xf32>
    tpu.vector_store %arg8[%c0_15, %c0_16], %27 {strides = array<i32>} : memref<1x128xf32, #tpu.memory_space<vmem>>, vector<1x128xf32>,
    %c0_17 = arith.constant 0 : index
    %c0_18 = arith.constant 0 : index
    %29 = vector.load %arg9[%c0_17, %c0_18] : memref<1x128xf32, #tpu.memory_space<vmem>>, vector<1x128xf32>
    %30 = arith.mulf %20, %20 : vector<16x128xf32>
    %cst_19 = arith.constant dense<0.000000e+00> : vector<128xf32>
    %31 = vector.multi_reduction <add>, %30, %cst_19 [0] : vector<16x128xf32> to vector<128xf32>
    %32 = vector.shape_cast %31 : vector<128xf32> to vector<1x128xf32>
    %33 = arith.addf %29, %32 : vector<1x128xf32>
    %c0_20 = arith.constant 0 : index
    %c0_21 = arith.constant 0 : index
    %34 = vector.load %arg9[%c0_20, %c0_21] : memref<1x128xf32, #tpu.memory_space<vmem>>, vector<1x128xf32>
    tpu.vector_store %arg9[%c0_20, %c0_21], %33 {strides = array<i32>} : memref<1x128xf32, #tpu.memory_space<vmem>>, vector<1x128xf32>,
    %c0_i32_22 = arith.constant 0 : i32
    %35 = arith.cmpi eq, %arg1, %c0_i32_22 : i32
    %36 = arith.extui %35 : i1 to i32
    %c0_i32_23 = arith.constant 0 : i32
    %37 = arith.cmpi ne, %36, %c0_i32_23 : i32
    scf.if %37 {
      %c0_24 = arith.constant 0 : index
      %c0_25 = arith.constant 0 : index
      %38 = vector.load %arg8[%c0_24, %c0_25] : memref<1x128xf32, #tpu.memory_space<vmem>>, vector<1x128xf32>
      %cst_26 = arith.constant 1.100000e+01 : f32
      %39 = vector.broadcast %cst_26 : f32 to vector<1x128xf32>
      %40 = arith.divf %38, %39 : vector<1x128xf32>
      %c0_27 = arith.constant 0 : index
      %c0_28 = arith.constant 0 : index
      %41 = vector.load %arg9[%c0_27, %c0_28] : memref<1x128xf32, #tpu.memory_space<vmem>>, vector<1x128xf32>
      %42 = arith.mulf %38, %40 : vector<1x128xf32>
      %43 = arith.subf %41, %42 : vector<1x128xf32>
      %cst_29 = arith.constant 0.000000e+00 : f32
      %44 = vector.broadcast %cst_29 : f32 to vector<1x128xf32>
      %45 = arith.maximumf %43, %44 : vector<1x128xf32>
      %cst_30 = arith.constant 1.100000e+01 : f32
      %cst_31 = arith.constant 1.000000e+00 : f32
      %46 = arith.subf %cst_30, %cst_31 : f32
      %47 = vector.broadcast %46 : f32 to vector<1x128xf32>
      %48 = arith.divf %45, %47 : vector<1x128xf32>
      %c0_32 = arith.constant 0 : index
      %c0_33 = arith.constant 0 : index
      %c0_34 = arith.constant 0 : index
      %49 = vector.load %arg6[%c0_32, %c0_33, %c0_34] : memref<1x1x128xf32, #tpu.memory_space<vmem>>, vector<1x1x128xf32>
      %50 = vector.shape_cast %49 : vector<1x1x128xf32> to vector<1x128xf32>
      %51 = vector.shape_cast %40 : vector<1x128xf32> to vector<1x1x128xf32>
      tpu.vector_store %arg6[%c0_32, %c0_33, %c0_34], %51 {strides = array<i32>} : memref<1x1x128xf32, #tpu.memory_space<vmem>>, vector<1x1x128xf32>,
      %52 = math.sqrt %48 : vector<1x128xf32>
      %cst_35 = arith.constant 9.99999974E-6 : f32
      %53 = vector.broadcast %cst_35 : f32 to vector<1x128xf32>
      %54 = arith.addf %52, %53 : vector<1x128xf32>
      %cst_36 = arith.constant 1.000000e+00 : f32
      %55 = vector.broadcast %cst_36 : f32 to vector<1x128xf32>
      %56 = arith.divf %55, %54 : vector<1x128xf32>
      %c0_37 = arith.constant 0 : index
      %c0_38 = arith.constant 0 : index
      %c0_39 = arith.constant 0 : index
      %57 = vector.load %arg7[%c0_37, %c0_38, %c0_39] : memref<1x1x128xf32, #tpu.memory_space<vmem>>, vector<1x1x128xf32>
      %58 = vector.shape_cast %57 : vector<1x1x128xf32> to vector<1x128xf32>
      %59 = vector.shape_cast %56 : vector<1x128xf32> to vector<1x1x128xf32>
      tpu.vector_store %arg7[%c0_37, %c0_38, %c0_39], %59 {strides = array<i32>} : memref<1x1x128xf32, #tpu.memory_space<vmem>>, vector<1x1x128xf32>,
    } else {
    }
    return
  }
  func.func @transform_0(%arg0: i32, %arg1: i32) -> (i32, i32, i32) {
    %c0_i32 = arith.constant 0 : i32
    %c0_i32_0 = arith.constant 0 : i32
    return %arg0, %arg1, %c0_i32 : i32, i32, i32
  }
  func.func @transform_1(%arg0: i32, %arg1: i32) -> (i32, i32) {
    %c0_i32 = arith.constant 0 : i32
    %c0_i32_0 = arith.constant 0 : i32
    %c0_i32_1 = arith.constant 0 : i32
    return %c0_i32, %c0_i32_0 : i32, i32
  }
  func.func @transform_2(%arg0: i32, %arg1: i32) -> (i32, i32) {
    %c0_i32 = arith.constant 0 : i32
    %c0_i32_0 = arith.constant 0 : i32
    %c0_i32_1 = arith.constant 0 : i32
    return %c0_i32, %c0_i32_0 : i32, i32
  }
  func.func @transform_3(%arg0: i32, %arg1: i32) -> (i32, i32, i32) {
    %c0_i32 = arith.constant 0 : i32
    %c0_i32_0 = arith.constant 0 : i32
    return %arg0, %arg1, %c0_i32 : i32, i32, i32
  }
  func.func @transform_4(%arg0: i32, %arg1: i32) -> (i32, i32, i32) {
    %c0_i32 = arith.constant 0 : i32
    %c0_i32_0 = arith.constant 0 : i32
    %c0_i32_1 = arith.constant 0 : i32
    return %arg0, %c0_i32, %c0_i32_0 : i32, i32, i32
  }
  func.func @transform_5(%arg0: i32, %arg1: i32) -> (i32, i32, i32) {
    %c0_i32 = arith.constant 0 : i32
    %c0_i32_0 = arith.constant 0 : i32
    %c0_i32_1 = arith.constant 0 : i32
    return %arg0, %c0_i32, %c0_i32_0 : i32, i32, i32
  }
}

</mosaic_0001>

<llo_original>
// kernel: tpu_custom_call.1
$region0: #{tpu_custom_call.1}
  #allocation0 [shape = 'u32[]', space=smem, size = 0x4, offset = 0x4, fixed_abs, tag = 'smem constant byte address 0x4 - core index']
  #allocation1 [shape = 'u32[144,128]{1,0:T(1,128)}', space=vmem, size = 0x12000, scoped, tag = 'internal scratch']
  #allocation2 [shape = 'f32[1,128]{1,0:T(1,128)}', space=vmem, size = 0x200, scoped, tag = 'scratch operand']
  #allocation3 [shape = 'f32[1,128]{1,0:T(1,128)}', space=vmem, size = 0x200, scoped, tag = 'scratch operand']
  %s0 = inlined_call_operand.hbm [shape: bf16[2,16,1024], index: 0, kind: input, shape index: {}]
  %s1 = inlined_call_operand.hbm [shape: bf16[1024,1024], index: 1, kind: input, shape index: {}]
  %s2 = inlined_call_operand.hbm [shape: bf16[1024,128], index: 2, kind: input, shape index: {}]
  %s3 = inlined_call_operand.hbm [shape: f32[2,16,128], index: 3, kind: output, shape index: {0}]
  %s4 = inlined_call_operand.hbm [shape: f32[2,1,128], index: 4, kind: output, shape index: {1}]
  %s5 = inlined_call_operand.hbm [shape: f32[2,1,128], index: 5, kind: output, shape index: {2}]
  %6 = xla_tuple %s3, %s4, %s5
  %s7 = sld [smem:[#allocation0]]
  $region81: #{tpu_custom_call.1} parent=0
    _
  %s9 = ssub.s32 1, %s7
  %s10 = scalar_select 0, %s9, %s7
  $region1: #{tpu_custom_call.1} parent=0
    #allocation4 [shape = 'u8[65536]{0}', space=vmem, size = 0x10000, scoped, tag = 'input window, operand 0']
    #allocation5 [shape = 's32[2]{0}', space=sflag, size = 0x8, scoped, tag = 'scoped memory for tpu_custom_call.1']
    #allocation6 [shape = 's32[2]{0}', space=sflag, size = 0x8, scoped, tag = 'scoped memory for tpu_custom_call.1']
    #allocation7 [shape = 'u8[2097152]{0}', space=vmem, size = 0x200000, scoped, tag = 'input window, operand 1, single buffered']
    #allocation8 [shape = 's32[1]{0}', space=sflag, size = 0x4, scoped, tag = 'scoped memory for tpu_custom_call.1']
    #allocation9 [shape = 'u8[262144]{0}', space=vmem, size = 0x40000, scoped, tag = 'input window, operand 2, single buffered']
    #allocation10 [shape = 'u8[16384]{0}', space=vmem, size = 0x4000, scoped, tag = 'output window, operand 0']
    #allocation11 [shape = 'u8[1024]{0}', space=vmem, size = 0x400, scoped, tag = 'output window, operand 1']
    #allocation12 [shape = 's32[2]{0}', space=sflag, size = 0x8, scoped, tag = 'scoped memory for tpu_custom_call.1']
    #allocation13 [shape = 'u8[1024]{0}', space=vmem, size = 0x400, scoped, tag = 'output window, operand 2']
    %11 = vsyncpa [#allocation5], 0
    %s12 = scalar_lea.sflag [#allocation5], 1
    %13 = vsyncpa %s12, 0
    %14 = vsyncpa [#allocation8], 0
    %15 = vsyncpa [#allocation6], 0
    %s16 = scalar_lea.sflag [#allocation6], 1
    %17 = vsyncpa %s16, 0
    %18 = vsyncpa [#allocation12], 0
    %s19 = scalar_lea.sflag [#allocation12], 1
    %20 = vsyncpa %s19, 0
    loop: start=0, step=1, limit=4
    $region2: #{tpu_custom_call.1} parent=1 // loop_pre_header
      _
    $region3: #{tpu_custom_call.1} parent=1 // loop_header
      %s22 = sphi 0, %s26
      %p23 = scmp.ge.s32.totalorder %s22, 4
      %s29 = sphi 0, %s41
      %s30 = sphi 0, %s37
      %s31 = sphi 0, %s29
      %s32 = sphi 0, %s30
      %s33 = sphi 0, %s31
      %s34 = sphi 0, %s32
      %s46 = sphi 0, %s48
      %s49 = sphi 0, %s46
      %s50 = sphi 0, %s49
      %s66 = sphi 0, %s50
      %s70 = sphi 0, %s70
      %s72 = sphi 0, %s70
      %s73 = sphi 0, %s72
      %s87 = sphi 0, %s73
      %s91 = sphi 0, %s91
      %s93 = sphi 0, %s91
      %s94 = sphi 0, %s93
      %s108 = sphi 0, %s94
      %s116 = sphi 0, %s118
      %s119 = sphi 0, %s116
      %s120 = sphi 0, %s119
      %s136 = sphi 0, %s120
      %s142 = sphi 0, %s144
      %s145 = sphi 0, %s142
      %s146 = sphi 0, %s145
      %s162 = sphi 0, %s146
      %s168 = sphi 0, %s170
      %s171 = sphi 0, %s168
      %s172 = sphi 0, %s171
      %s188 = sphi 0, %s172
    $region4: #{tpu_custom_call.1} parent=1 // loop_header_branch
      %25 = sbr.rel (%p23) target = $region8
    $region5: #{tpu_custom_call.1} parent=1 // loop_body
      %s27 = ssub.s32 %s22, 1
      %s28 = ssub.s32 %s22, 2
      %s35 = sadd.s32 1, %s30
      %p36 = scmp.ge.s32.totalorder %s35, 1
      %s37 = scalar_select %p36, 0, %s35
      %s38 = sadd.s32 1, %s29
      %s39 = scalar_select %p36, %s38, %s29
      %p40 = scmp.ge.s32.totalorder %s39, 2
      %s41 = scalar_select %p40, 0, %s39
      %s42 = ssub.s32 %s29, %s41
      %s43 = ssub.s32 %s30, %s37
      %s44 = sor.u32 %s42, %s43
      %p45 = scmp.eq.s32.totalorder %s44, 0
      %s47 = sadd.s32 %s46, 1
      %s48 = scalar_select %p45, %s46, %s47
      %p51 = pneg %p45
      %p52 = scmp.eq.s32.totalorder %s22, 1
      %p53 = por %p51, %p52
      %p54 = scmp.ne.s32.totalorder %s46, %s49
      %p55 = scmp.eq.s32.totalorder %s22, 0
      %p56 = por %p54, %p55
      %p57 = scmp.ne.s32.totalorder %s46, %s49
      %p58 = scmp.eq.s32.totalorder %s27, 1
      %p59 = por %p57, %p58
      %p60 = scmp.ne.s32.totalorder %s49, %s50
      %p61 = scmp.eq.s32.totalorder %s27, 0
      %p62 = por %p60, %p61
      %p63 = scmp.ne.s32.totalorder %s49, %s50
      %p64 = scmp.eq.s32.totalorder %s28, 1
      %p65 = por %p63, %p64
      %p67 = scmp.ne.s32.totalorder %s50, %s66
      %p68 = scmp.eq.s32.totalorder %s28, 0
      %p69 = por %p67, %p68
      %s71 = sadd.s32 %s70, 1
      %p74 = scmp.eq.s32.totalorder %s22, 1
      %p75 = scmp.ne.s32.totalorder %s70, %s72
      %p76 = scmp.eq.s32.totalorder %s22, 0
      %p77 = por %p75, %p76
      %p78 = scmp.ne.s32.totalorder %s70, %s72
      %p79 = scmp.eq.s32.totalorder %s27, 1
      %p80 = por %p78, %p79
      %p81 = scmp.ne.s32.totalorder %s72, %s73
      %p82 = scmp.eq.s32.totalorder %s27, 0
      %p83 = por %p81, %p82
      %p84 = scmp.ne.s32.totalorder %s72, %s73
      %p85 = scmp.eq.s32.totalorder %s28, 1
      %p86 = por %p84, %p85
      %p88 = scmp.ne.s32.totalorder %s73, %s87
      %p89 = scmp.eq.s32.totalorder %s28, 0
      %p90 = por %p88, %p89
      %s92 = sadd.s32 %s91, 1
      %p95 = scmp.eq.s32.totalorder %s22, 1
      %p96 = scmp.ne.s32.totalorder %s91, %s93
      %p97 = scmp.eq.s32.totalorder %s22, 0
      %p98 = por %p96, %p97
      %p99 = scmp.ne.s32.totalorder %s91, %s93
      %p100 = scmp.eq.s32.totalorder %s27, 1
      %p101 = por %p99, %p100
      %p102 = scmp.ne.s32.totalorder %s93, %s94
      %p103 = scmp.eq.s32.totalorder %s27, 0
      %p104 = por %p102, %p103
      %p105 = scmp.ne.s32.totalorder %s93, %s94
      %p106 = scmp.eq.s32.totalorder %s28, 1
      %p107 = por %p105, %p106
      %p109 = scmp.ne.s32.totalorder %s94, %s108
      %p110 = scmp.eq.s32.totalorder %s28, 0
      %p111 = por %p109, %p110
      %s112 = ssub.s32 %s29, %s41
      %s113 = ssub.s32 %s30, %s37
      %s114 = sor.u32 %s112, %s113
      %p115 = scmp.eq.s32.totalorder %s114, 0
      %s117 = sadd.s32 %s116, 1
      %s118 = scalar_select %p115, %s116, %s117
      %p121 = pneg %p115
      %p122 = scmp.eq.s32.totalorder %s22, 1
      %p123 = por %p121, %p122
      %p124 = scmp.ne.s32.totalorder %s116, %s119
      %p125 = scmp.eq.s32.totalorder %s22, 0
      %p126 = por %p124, %p125
      %p127 = scmp.ne.s32.totalorder %s116, %s119
      %p128 = scmp.eq.s32.totalorder %s27, 1
      %p129 = por %p127, %p128
      %p130 = scmp.ne.s32.totalorder %s119, %s120
      %p131 = scmp.eq.s32.totalorder %s27, 0
      %p132 = por %p130, %p131
      %p133 = scmp.ne.s32.totalorder %s119, %s120
      %p134 = scmp.eq.s32.totalorder %s28, 1
      %p135 = por %p133, %p134
      %p137 = scmp.ne.s32.totalorder %s120, %s136
      %p138 = scmp.eq.s32.totalorder %s28, 0
      %p139 = por %p137, %p138
      %s140 = ssub.s32 %s29, %s41
      %p141 = scmp.eq.s32.totalorder %s140, 0
      %s143 = sadd.s32 %s142, 1
      %s144 = scalar_select %p141, %s142, %s143
      %p147 = pneg %p141
      %p148 = scmp.eq.s32.totalorder %s22, 1
      %p149 = por %p147, %p148
      %p150 = scmp.ne.s32.totalorder %s142, %s145
      %p151 = scmp.eq.s32.totalorder %s22, 0
      %p152 = por %p150, %p151
      %p153 = scmp.ne.s32.totalorder %s142, %s145
      %p154 = scmp.eq.s32.totalorder %s27, 1
      %p155 = por %p153, %p154
      %p156 = scmp.ne.s32.totalorder %s145, %s146
      %p157 = scmp.eq.s32.totalorder %s27, 0
      %p158 = por %p156, %p157
      %p159 = scmp.ne.s32.totalorder %s145, %s146
      %p160 = scmp.eq.s32.totalorder %s28, 1
      %p161 = por %p159, %p160
      %p163 = scmp.ne.s32.totalorder %s146, %s162
      %p164 = scmp.eq.s32.totalorder %s28, 0
      %p165 = por %p163, %p164
      %s166 = ssub.s32 %s29, %s41
      %p167 = scmp.eq.s32.totalorder %s166, 0
      %s169 = sadd.s32 %s168, 1
      %s170 = scalar_select %p167, %s168, %s169
      %p173 = pneg %p167
      %p174 = scmp.eq.s32.totalorder %s22, 1
      %p175 = por %p173, %p174
      %p176 = scmp.ne.s32.totalorder %s168, %s171
      %p177 = scmp.eq.s32.totalorder %s22, 0
      %p178 = por %p176, %p177
      %p179 = scmp.ne.s32.totalorder %s168, %s171
      %p180 = scmp.eq.s32.totalorder %s27, 1
      %p181 = por %p179, %p180
      %p182 = scmp.ne.s32.totalorder %s171, %s172
      %p183 = scmp.eq.s32.totalorder %s27, 0
      %p184 = por %p182, %p183
      %p185 = scmp.ne.s32.totalorder %s171, %s172
      %p186 = scmp.eq.s32.totalorder %s28, 1
      %p187 = por %p185, %p186
      %p189 = scmp.ne.s32.totalorder %s172, %s188
      %p190 = scmp.eq.s32.totalorder %s28, 0
      %p191 = por %p189, %p190
      %p192 = scmp.le.s32.totalorder 1, %s22
      %p193 = scmp.lt.s32.totalorder %s22, 3
      %p194 = pnand %p192, %p193
      %p195 = pneg %p194
      // Predicated region
      $region9: #{tpu_custom_call.1} parent=5 // pred_check
        _
      $region10: #{tpu_custom_call.1} parent=5 // pred_check_branch
        %197 = sbr.rel (%p194) target = $region12
      $region11: #{tpu_custom_call.1} parent=5 // pred_region
        %s198 = ssub.s32 %s22, 1
        // Predicated region
        $region13: #{tpu_custom_call.1} parent=11 // pred_check
          %p199 = pneg %p83
        $region14: #{tpu_custom_call.1} parent=11 // pred_check_branch
          %201 = sbr.rel (%p199) target = $region16
        $region15: #{tpu_custom_call.1} parent=11 // pred_region
          %s203 = ssub.s32 65536, 65536
          %204 = vsyncadd [#allocation8], %s203
          %s205 = sshll.u32 [#allocation7], 4
          %s206 = int_to_ptr.vmem [resolvable:$true] %s205
          %211 = dma.hbm_to_vmem [thread:$0]  %s1, 65536, %s206, [#allocation8], 512, 512, 32
        $region16: #{tpu_custom_call.1} parent=11 // pred_fallthru
          _
        // Predicated region
        $region17: #{tpu_custom_call.1} parent=11 // pred_check
          %p212 = pneg %p104
        $region18: #{tpu_custom_call.1} parent=11 // pred_check_branch
          %214 = sbr.rel (%p212) target = $region20
        $region19: #{tpu_custom_call.1} parent=11 // pred_region
          %s216 = ssub.s32 8192, 8192
          %217 = vsyncadd [#allocation8], %s216
          %s218 = sshll.u32 [#allocation9], 4
          %s219 = int_to_ptr.vmem [resolvable:$true] %s218
          %224 = dma.hbm_to_vmem [thread:$0]  %s2, 8192, %s219, [#allocation8], 64, 64, 4
        $region20: #{tpu_custom_call.1} parent=11 // pred_fallthru
          _
      $region12: #{tpu_custom_call.1} parent=5 // pred_fallthru
        _
      %p225 = scmp.lt.s32.totalorder %s22, 2
      // Predicated region
      $region21: #{tpu_custom_call.1} parent=5 // pred_check
        %p226 = pneg %p225
      $region22: #{tpu_custom_call.1} parent=5 // pred_check_branch
        %228 = sbr.rel (%p226) target = $region24
      $region23: #{tpu_custom_call.1} parent=5 // pred_region
        // Predicated region
        $region25: #{tpu_custom_call.1} parent=23 // pred_check
          %p229 = pneg %p56
        $region26: #{tpu_custom_call.1} parent=23 // pred_check_branch
          %231 = sbr.rel (%p229) target = $region28
        $region27: #{tpu_custom_call.1} parent=23 // pred_region
          %s232 = sand.u32 %s46, 1
          %s233 = scalar_lea.sflag [#allocation5], %s232
          %s234 = sand.u32 %s46, 1
          %s235 = smul.addr %s234, 64
          %s236 = scalar_lea.vmem [#allocation4], %s235
          %s237 = smul.u32 2, %s30
          %s239 = ssub.s32 1024, 1024
          %240 = vsyncadd %s233, %s239
          %s241 = smul.addr %s237, 8
          %s242 = smul.addr %s29, 16
          %s243 = sadd.s32 %s241, %s242
          %s244 = smul.addr %s243, 64
          %s245 = scalar_lea.hbm %s0, %s244
          %s246 = sshll.u32 %s236, 4
          %s247 = int_to_ptr.vmem [resolvable:$true] %s246
          %252 = dma.hbm_to_vmem [thread:$0]  %s245, 1024, %s247, %s233, 512, 512, 32
        $region28: #{tpu_custom_call.1} parent=23 // pred_fallthru
          _
      $region24: #{tpu_custom_call.1} parent=5 // pred_fallthru
        _
      %p253 = scmp.le.s32.totalorder 1, %s22
      %p254 = scmp.lt.s32.totalorder %s22, 3
      %p255 = pnand %p253, %p254
      %p256 = pneg %p255
      // Predicated region
      $region29: #{tpu_custom_call.1} parent=5 // pred_check
        _
      $region30: #{tpu_custom_call.1} parent=5 // pred_check_branch
        %258 = sbr.rel (%p255) target = $region32
      $region31: #{tpu_custom_call.1} parent=5 // pred_region
        %s259 = ssub.s32 %s22, 1
        %s260 = sand.u32 %s49, 1
        %s261 = scalar_lea.sflag [#allocation5], %s260
        %s262 = sand.u32 %s49, 1
        %s263 = smul.addr %s262, 64
        %s264 = scalar_lea.vmem [#allocation4], %s263
        // Predicated region
        $region33: #{tpu_custom_call.1} parent=31 // pred_check
          %p265 = pneg %p62
        $region34: #{tpu_custom_call.1} parent=31 // pred_check_branch
          %267 = sbr.rel (%p265) target = $region36
        $region35: #{tpu_custom_call.1} parent=31 // pred_region
          %268 = dma.done %s261, 1024
        $region36: #{tpu_custom_call.1} parent=31 // pred_fallthru
          _
        // Predicated region
        $region37: #{tpu_custom_call.1} parent=31 // pred_check
          %p269 = pneg %p83
        $region38: #{tpu_custom_call.1} parent=31 // pred_check_branch
          %271 = sbr.rel (%p269) target = $region40
        $region39: #{tpu_custom_call.1} parent=31 // pred_region
          %272 = dma.done [#allocation8], 65536
        $region40: #{tpu_custom_call.1} parent=31 // pred_fallthru
          _
        // Predicated region
        $region41: #{tpu_custom_call.1} parent=31 // pred_check
          %p273 = pneg %p104
        $region42: #{tpu_custom_call.1} parent=31 // pred_check_branch
          %275 = sbr.rel (%p273) target = $region44
        $region43: #{tpu_custom_call.1} parent=31 // pred_region
          %276 = dma.done [#allocation8], 8192
        $region44: #{tpu_custom_call.1} parent=31 // pred_fallthru
          _
        %s277 = sand.u32 %s49, 1
        %s278 = scalar_lea.sflag [#allocation5], %s277
        %s279 = sand.u32 %s49, 1
        %s280 = smul.addr %s279, 64
        %s281 = scalar_lea.vmem [#allocation4], %s280
        %p282 = pneg %p62
        %p283 = pneg %p59
        %p284 = pneg %p83
        %p285 = pneg %p80
        %p286 = pneg %p104
        %p287 = pneg %p101
        %p288 = pneg %p132
        %p289 = pneg %p129
        %s290 = sand.u32 %s119, 1
        %s291 = scalar_lea.sflag [#allocation6], %s290
        %s292 = sand.u32 %s119, 1
        %s293 = smul.addr %s292, 16
        %s294 = scalar_lea.vmem [#allocation10], %s293
        %p295 = pneg %p158
        %p296 = pneg %p155
        %s297 = sand.u32 %s27, 1
        %s298 = scalar_lea.sflag [#allocation12], %s297
        %s299 = sand.u32 %s145, 1
        %s300 = scalar_lea.vmem [#allocation11], %s299
        %p301 = pneg %p184
        %p302 = pneg %p181
        %s303 = sand.u32 %s27, 1
        %s304 = scalar_lea.sflag [#allocation12], %s303
        %s305 = sand.u32 %s171, 1
        %s306 = scalar_lea.vmem [#allocation13], %s305
        %s307 = smul.u32 2, %s32
        %s308 = smul.u32 2, %s32
        %v310 = vld [vmem:[%s264] sm:$0xff]
        %v311 = vld [vmem:[%s264 + $0x8] sm:$0xff]
        %v312 = vld [vmem:[%s264 + $0x10] sm:$0xff]
        %v313 = vld [vmem:[%s264 + $0x18] sm:$0xff]
        %v314 = vld [vmem:[%s264 + $0x20] sm:$0xff]
        %v315 = vld [vmem:[%s264 + $0x28] sm:$0xff]
        %v316 = vld [vmem:[%s264 + $0x30] sm:$0xff]
        %v317 = vld [vmem:[%s264 + $0x38] sm:$0xff]
        %v318 = vld [vmem:[#allocation7] sm:$0xff]
        %v319 = vld [vmem:[#allocation7 + $0x8] sm:$0xff]
        %v320 = vld [vmem:[#allocation7 + $0x10] sm:$0xff]
        %v321 = vld [vmem:[#allocation7 + $0x18] sm:$0xff]
        %v322 = vld [vmem:[#allocation7 + $0x20] sm:$0xff]
        %v323 = vld [vmem:[#allocation7 + $0x28] sm:$0xff]
        %v324 = vld [vmem:[#allocation7 + $0x30] sm:$0xff]
        %v325 = vld [vmem:[#allocation7 + $0x38] sm:$0xff]
        %v326 = vld [vmem:[#allocation7 + $0x40] sm:$0xff]
        %v327 = vld [vmem:[#allocation7 + $0x48] sm:$0xff]
        %v328 = vld [vmem:[#allocation7 + $0x50] sm:$0xff]
        %v329 = vld [vmem:[#allocation7 + $0x58] sm:$0xff]
        %v330 = vld [vmem:[#allocation7 + $0x60] sm:$0xff]
        %v331 = vld [vmem:[#allocation7 + $0x68] sm:$0xff]
        %v332 = vld [vmem:[#allocation7 + $0x70] sm:$0xff]
        %v333 = vld [vmem:[#allocation7 + $0x78] sm:$0xff]
        %v334 = vld [vmem:[#allocation7 + $0x80] sm:$0xff]
        %v335 = vld [vmem:[#allocation7 + $0x88] sm:$0xff]
        %v336 = vld [vmem:[#allocation7 + $0x90] sm:$0xff]
        %v337 = vld [vmem:[#allocation7 + $0x98] sm:$0xff]
        %v338 = vld [vmem:[#allocation7 + $0xa0] sm:$0xff]
        %v339 = vld [vmem:[#allocation7 + $0xa8] sm:$0xff]
        %v340 = vld [vmem:[#allocation7 + $0xb0] sm:$0xff]
        %v341 = vld [vmem:[#allocation7 + $0xb8] sm:$0xff]
        %v342 = vld [vmem:[#allocation7 + $0xc0] sm:$0xff]
        %v343 = vld [vmem:[#allocation7 + $0xc8] sm:$0xff]
        %v344 = vld [vmem:[#allocation7 + $0xd0] sm:$0xff]
        %v345 = vld [vmem:[#allocation7 + $0xd8] sm:$0xff]
        %v346 = vld [vmem:[#allocation7 + $0xe0] sm:$0xff]
        %v347 = vld [vmem:[#allocation7 + $0xe8] sm:$0xff]
        %v348 = vld [vmem:[#allocation7 + $0xf0] sm:$0xff]
        %v349 = vld [vmem:[#allocation7 + $0xf8] sm:$0xff]
        %v350 = vld [vmem:[#allocation7 + $0x100] sm:$0xff]
        %v351 = vld [vmem:[#allocation7 + $0x108] sm:$0xff]
        %v352 = vld [vmem:[#allocation7 + $0x110] sm:$0xff]
        %v353 = vld [vmem:[#allocation7 + $0x118] sm:$0xff]
        %v354 = vld [vmem:[#allocation7 + $0x120] sm:$0xff]
        %v355 = vld [vmem:[#allocation7 + $0x128] sm:$0xff]
        %v356 = vld [vmem:[#allocation7 + $0x130] sm:$0xff]
        %v357 = vld [vmem:[#allocation7 + $0x138] sm:$0xff]
        %v358 = vld [vmem:[#allocation7 + $0x140] sm:$0xff]
        %v359 = vld [vmem:[#allocation7 + $0x148] sm:$0xff]
        %v360 = vld [vmem:[#allocation7 + $0x150] sm:$0xff]
        %v361 = vld [vmem:[#allocation7 + $0x158] sm:$0xff]
        %v362 = vld [vmem:[#allocation7 + $0x160] sm:$0xff]
        %v363 = vld [vmem:[#allocation7 + $0x168] sm:$0xff]
        %v364 = vld [vmem:[#allocation7 + $0x170] sm:$0xff]
        %v365 = vld [vmem:[#allocation7 + $0x178] sm:$0xff]
        %v366 = vld [vmem:[#allocation7 + $0x180] sm:$0xff]
        %v367 = vld [vmem:[#allocation7 + $0x188] sm:$0xff]
        %v368 = vld [vmem:[#allocation7 + $0x190] sm:$0xff]
        %v369 = vld [vmem:[#allocation7 + $0x198] sm:$0xff]
        %v370 = vld [vmem:[#allocation7 + $0x1a0] sm:$0xff]
        %v371 = vld [vmem:[#allocation7 + $0x1a8] sm:$0xff]
        %v372 = vld [vmem:[#allocation7 + $0x1b0] sm:$0xff]
        %v373 = vld [vmem:[#allocation7 + $0x1b8] sm:$0xff]
        %v374 = vld [vmem:[#allocation7 + $0x1c0] sm:$0xff]
        %v375 = vld [vmem:[#allocation7 + $0x1c8] sm:$0xff]
        %v376 = vld [vmem:[#allocation7 + $0x1d0] sm:$0xff]
        %v377 = vld [vmem:[#allocation7 + $0x1d8] sm:$0xff]
        %v378 = vld [vmem:[#allocation7 + $0x1e0] sm:$0xff]
        %v379 = vld [vmem:[#allocation7 + $0x1e8] sm:$0xff]
        %v380 = vld [vmem:[#allocation7 + $0x1f0] sm:$0xff]
        %v381 = vld [vmem:[#allocation7 + $0x1f8] sm:$0xff]
        %v382 = vld [vmem:[#allocation7 + $0x200] sm:$0xff]
        %v383 = vld [vmem:[#allocation7 + $0x208] sm:$0xff]
        %v384 = vld [vmem:[#allocation7 + $0x210] sm:$0xff]
        %v385 = vld [vmem:[#allocation7 + $0x218] sm:$0xff]
        %v386 = vld [vmem:[#allocation7 + $0x220] sm:$0xff]
        %v387 = vld [vmem:[#allocation7 + $0x228] sm:$0xff]
        %v388 = vld [vmem:[#allocation7 + $0x230] sm:$0xff]
        %v389 = vld [vmem:[#allocation7 + $0x238] sm:$0xff]
        %v390 = vld [vmem:[#allocation7 + $0x240] sm:$0xff]
        %v391 = vld [vmem:[#allocation7 + $0x248] sm:$0xff]
        %v392 = vld [vmem:[#allocation7 + $0x250] sm:$0xff]
        %v393 = vld [vmem:[#allocation7 + $0x258] sm:$0xff]
        %v394 = vld [vmem:[#allocation7 + $0x260] sm:$0xff]
        %v395 = vld [vmem:[#allocation7 + $0x268] sm:$0xff]
        %v396 = vld [vmem:[#allocation7 + $0x270] sm:$0xff]
        %v397 = vld [vmem:[#allocation7 + $0x278] sm:$0xff]
        %v398 = vld [vmem:[#allocation7 + $0x280] sm:$0xff]
        %v399 = vld [vmem:[#allocation7 + $0x288] sm:$0xff]
        %v400 = vld [vmem:[#allocation7 + $0x290] sm:$0xff]
        %v401 = vld [vmem:[#allocation7 + $0x298] sm:$0xff]
        %v402 = vld [vmem:[#allocation7 + $0x2a0] sm:$0xff]
        %v403 = vld [vmem:[#allocation7 + $0x2a8] sm:$0xff]
        %v404 = vld [vmem:[#allocation7 + $0x2b0] sm:$0xff]
        %v405 = vld [vmem:[#allocation7 + $0x2b8] sm:$0xff]
        %v406 = vld [vmem:[#allocation7 + $0x2c0] sm:$0xff]
        %v407 = vld [vmem:[#allocation7 + $0x2c8] sm:$0xff]
        %v408 = vld [vmem:[#allocation7 + $0x2d0] sm:$0xff]
        %v409 = vld [vmem:[#allocation7 + $0x2d8] sm:$0xff]
        %v410 = vld [vmem:[#allocation7 + $0x2e0] sm:$0xff]
        %v411 = vld [vmem:[#allocation7 + $0x2e8] sm:$0xff]
        %v412 = vld [vmem:[#allocation7 + $0x2f0] sm:$0xff]
        %v413 = vld [vmem:[#allocation7 + $0x2f8] sm:$0xff]
        %v414 = vld [vmem:[#allocation7 + $0x300] sm:$0xff]
        %v415 = vld [vmem:[#allocation7 + $0x308] sm:$0xff]
        %v416 = vld [vmem:[#allocation7 + $0x310] sm:$0xff]
        %v417 = vld [vmem:[#allocation7 + $0x318] sm:$0xff]
        %v418 = vld [vmem:[#allocation7 + $0x320] sm:$0xff]
        %v419 = vld [vmem:[#allocation7 + $0x328] sm:$0xff]
        %v420 = vld [vmem:[#allocation7 + $0x330] sm:$0xff]
        %v421 = vld [vmem:[#allocation7 + $0x338] sm:$0xff]
        %v422 = vld [vmem:[#allocation7 + $0x340] sm:$0xff]
        %v423 = vld [vmem:[#allocation7 + $0x348] sm:$0xff]
        %v424 = vld [vmem:[#allocation7 + $0x350] sm:$0xff]
        %v425 = vld [vmem:[#allocation7 + $0x358] sm:$0xff]
        %v426 = vld [vmem:[#allocation7 + $0x360] sm:$0xff]
        %v427 = vld [vmem:[#allocation7 + $0x368] sm:$0xff]
        %v428 = vld [vmem:[#allocation7 + $0x370] sm:$0xff]
        %v429 = vld [vmem:[#allocation7 + $0x378] sm:$0xff]
        %v430 = vld [vmem:[#allocation7 + $0x380] sm:$0xff]
        %v431 = vld [vmem:[#allocation7 + $0x388] sm:$0xff]
        %v432 = vld [vmem:[#allocation7 + $0x390] sm:$0xff]
        %v433 = vld [vmem:[#allocation7 + $0x398] sm:$0xff]
        %v434 = vld [vmem:[#allocation7 + $0x3a0] sm:$0xff]
        %v435 = vld [vmem:[#allocation7 + $0x3a8] sm:$0xff]
        %v436 = vld [vmem:[#allocation7 + $0x3b0] sm:$0xff]
        %v437 = vld [vmem:[#allocation7 + $0x3b8] sm:$0xff]
        %v438 = vld [vmem:[#allocation7 + $0x3c0] sm:$0xff]
        %v439 = vld [vmem:[#allocation7 + $0x3c8] sm:$0xff]
        %v440 = vld [vmem:[#allocation7 + $0x3d0] sm:$0xff]
        %v441 = vld [vmem:[#allocation7 + $0x3d8] sm:$0xff]
        %v442 = vld [vmem:[#allocation7 + $0x3e0] sm:$0xff]
        %v443 = vld [vmem:[#allocation7 + $0x3e8] sm:$0xff]
        %v444 = vld [vmem:[#allocation7 + $0x3f0] sm:$0xff]
        %v445 = vld [vmem:[#allocation7 + $0x3f8] sm:$0xff]
        %v446 = vld [vmem:[#allocation7 + $0x400] sm:$0xff]
        %v447 = vld [vmem:[#allocation7 + $0x408] sm:$0xff]
        %v448 = vld [vmem:[#allocation7 + $0x410] sm:$0xff]
        %v449 = vld [vmem:[#allocation7 + $0x418] sm:$0xff]
        %v450 = vld [vmem:[#allocation7 + $0x420] sm:$0xff]
        %v451 = vld [vmem:[#allocation7 + $0x428] sm:$0xff]
        %v452 = vld [vmem:[#allocation7 + $0x430] sm:$0xff]
        %v453 = vld [vmem:[#allocation7 + $0x438] sm:$0xff]
        %v454 = vld [vmem:[#allocation7 + $0x440] sm:$0xff]
        %v455 = vld [vmem:[#allocation7 + $0x448] sm:$0xff]
        %v456 = vld [vmem:[#allocation7 + $0x450] sm:$0xff]
        %v457 = vld [vmem:[#allocation7 + $0x458] sm:$0xff]
        %v458 = vld [vmem:[#allocation7 + $0x460] sm:$0xff]
        %v459 = vld [vmem:[#allocation7 + $0x468] sm:$0xff]
        %v460 = vld [vmem:[#allocation7 + $0x470] sm:$0xff]
        %v461 = vld [vmem:[#allocation7 + $0x478] sm:$0xff]
        %v462 = vld [vmem:[#allocation7 + $0x480] sm:$0xff]
        %v463 = vld [vmem:[#allocation7 + $0x488] sm:$0xff]
        %v464 = vld [vmem:[#allocation7 + $0x490] sm:$0xff]
        %v465 = vld [vmem:[#allocation7 + $0x498] sm:$0xff]
        %v466 = vld [vmem:[#allocation7 + $0x4a0] sm:$0xff]
        %v467 = vld [vmem:[#allocation7 + $0x4a8] sm:$0xff]
        %v468 = vld [vmem:[#allocation7 + $0x4b0] sm:$0xff]
        %v469 = vld [vmem:[#allocation7 + $0x4b8] sm:$0xff]
        %v470 = vld [vmem:[#allocation7 + $0x4c0] sm:$0xff]
        %v471 = vld [vmem:[#allocation7 + $0x4c8] sm:$0xff]
        %v472 = vld [vmem:[#allocation7 + $0x4d0] sm:$0xff]
        %v473 = vld [vmem:[#allocation7 + $0x4d8] sm:$0xff]
        %v474 = vld [vmem:[#allocation7 + $0x4e0] sm:$0xff]
        %v475 = vld [vmem:[#allocation7 + $0x4e8] sm:$0xff]
        %v476 = vld [vmem:[#allocation7 + $0x4f0] sm:$0xff]
        %v477 = vld [vmem:[#allocation7 + $0x4f8] sm:$0xff]
        %v478 = vld [vmem:[#allocation7 + $0x500] sm:$0xff]
        %v479 = vld [vmem:[#allocation7 + $0x508] sm:$0xff]
        %v480 = vld [vmem:[#allocation7 + $0x510] sm:$0xff]
        %v481 = vld [vmem:[#allocation7 + $0x518] sm:$0xff]
        %v482 = vld [vmem:[#allocation7 + $0x520] sm:$0xff]
        %v483 = vld [vmem:[#allocation7 + $0x528] sm:$0xff]
        %v484 = vld [vmem:[#allocation7 + $0x530] sm:$0xff]
        %v485 = vld [vmem:[#allocation7 + $0x538] sm:$0xff]
        %v486 = vld [vmem:[#allocation7 + $0x540] sm:$0xff]
        %v487 = vld [vmem:[#allocation7 + $0x548] sm:$0xff]
        %v488 = vld [vmem:[#allocation7 + $0x550] sm:$0xff]
        %v489 = vld [vmem:[#allocation7 + $0x558] sm:$0xff]
        %v490 = vld [vmem:[#allocation7 + $0x560] sm:$0xff]
        %v491 = vld [vmem:[#allocation7 + $0x568] sm:$0xff]
        %v492 = vld [vmem:[#allocation7 + $0x570] sm:$0xff]
        %v493 = vld [vmem:[#allocation7 + $0x578] sm:$0xff]
        %v494 = vld [vmem:[#allocation7 + $0x580] sm:$0xff]
        %v495 = vld [vmem:[#allocation7 + $0x588] sm:$0xff]
        %v496 = vld [vmem:[#allocation7 + $0x590] sm:$0xff]
        %v497 = vld [vmem:[#allocation7 + $0x598] sm:$0xff]
        %v498 = vld [vmem:[#allocation7 + $0x5a0] sm:$0xff]
        %v499 = vld [vmem:[#allocation7 + $0x5a8] sm:$0xff]
        %v500 = vld [vmem:[#allocation7 + $0x5b0] sm:$0xff]
        %v501 = vld [vmem:[#allocation7 + $0x5b8] sm:$0xff]
        %v502 = vld [vmem:[#allocation7 + $0x5c0] sm:$0xff]
        %v503 = vld [vmem:[#allocation7 + $0x5c8] sm:$0xff]
        %v504 = vld [vmem:[#allocation7 + $0x5d0] sm:$0xff]
        %v505 = vld [vmem:[#allocation7 + $0x5d8] sm:$0xff]
        %v506 = vld [vmem:[#allocation7 + $0x5e0] sm:$0xff]
        %v507 = vld [vmem:[#allocation7 + $0x5e8] sm:$0xff]
        %v508 = vld [vmem:[#allocation7 + $0x5f0] sm:$0xff]
        %v509 = vld [vmem:[#allocation7 + $0x5f8] sm:$0xff]
        %v510 = vld [vmem:[#allocation7 + $0x600] sm:$0xff]
        %v511 = vld [vmem:[#allocation7 + $0x608] sm:$0xff]
        %v512 = vld [vmem:[#allocation7 + $0x610] sm:$0xff]
        %v513 = vld [vmem:[#allocation7 + $0x618] sm:$0xff]
        %v514 = vld [vmem:[#allocation7 + $0x620] sm:$0xff]
        %v515 = vld [vmem:[#allocation7 + $0x628] sm:$0xff]
        %v516 = vld [vmem:[#allocation7 + $0x630] sm:$0xff]
        %v517 = vld [vmem:[#allocation7 + $0x638] sm:$0xff]
        %v518 = vld [vmem:[#allocation7 + $0x640] sm:$0xff]
        %v519 = vld [vmem:[#allocation7 + $0x648] sm:$0xff]
        %v520 = vld [vmem:[#allocation7 + $0x650] sm:$0xff]
        %v521 = vld [vmem:[#allocation7 + $0x658] sm:$0xff]
        %v522 = vld [vmem:[#allocation7 + $0x660] sm:$0xff]
        %v523 = vld [vmem:[#allocation7 + $0x668] sm:$0xff]
        %v524 = vld [vmem:[#allocation7 + $0x670] sm:$0xff]
        %v525 = vld [vmem:[#allocation7 + $0x678] sm:$0xff]
        %v526 = vld [vmem:[#allocation7 + $0x680] sm:$0xff]
        %v527 = vld [vmem:[#allocation7 + $0x688] sm:$0xff]
        %v528 = vld [vmem:[#allocation7 + $0x690] sm:$0xff]
        %v529 = vld [vmem:[#allocation7 + $0x698] sm:$0xff]
        %v530 = vld [vmem:[#allocation7 + $0x6a0] sm:$0xff]
        %v531 = vld [vmem:[#allocation7 + $0x6a8] sm:$0xff]
        %v532 = vld [vmem:[#allocation7 + $0x6b0] sm:$0xff]
        %v533 = vld [vmem:[#allocation7 + $0x6b8] sm:$0xff]
        %v534 = vld [vmem:[#allocation7 + $0x6c0] sm:$0xff]
        %v535 = vld [vmem:[#allocation7 + $0x6c8] sm:$0xff]
        %v536 = vld [vmem:[#allocation7 + $0x6d0] sm:$0xff]
        %v537 = vld [vmem:[#allocation7 + $0x6d8] sm:$0xff]
        %v538 = vld [vmem:[#allocation7 + $0x6e0] sm:$0xff]
        %v539 = vld [vmem:[#allocation7 + $0x6e8] sm:$0xff]
        %v540 = vld [vmem:[#allocation7 + $0x6f0] sm:$0xff]
        %v541 = vld [vmem:[#allocation7 + $0x6f8] sm:$0xff]
        %v542 = vld [vmem:[#allocation7 + $0x700] sm:$0xff]
        %v543 = vld [vmem:[#allocation7 + $0x708] sm:$0xff]
        %v544 = vld [vmem:[#allocation7 + $0x710] sm:$0xff]
        %v545 = vld [vmem:[#allocation7 + $0x718] sm:$0xff]
        %v546 = vld [vmem:[#allocation7 + $0x720] sm:$0xff]
        %v547 = vld [vmem:[#allocation7 + $0x728] sm:$0xff]
        %v548 = vld [vmem:[#allocation7 + $0x730] sm:$0xff]
        %v549 = vld [vmem:[#allocation7 + $0x738] sm:$0xff]
        %v550 = vld [vmem:[#allocation7 + $0x740] sm:$0xff]
        %v551 = vld [vmem:[#allocation7 + $0x748] sm:$0xff]
        %v552 = vld [vmem:[#allocation7 + $0x750] sm:$0xff]
        %v553 = vld [vmem:[#allocation7 + $0x758] sm:$0xff]
        %v554 = vld [vmem:[#allocation7 + $0x760] sm:$0xff]
        %v555 = vld [vmem:[#allocation7 + $0x768] sm:$0xff]
        %v556 = vld [vmem:[#allocation7 + $0x770] sm:$0xff]
        %v557 = vld [vmem:[#allocation7 + $0x778] sm:$0xff]
        %v558 = vld [vmem:[#allocation7 + $0x780] sm:$0xff]
        %v559 = vld [vmem:[#allocation7 + $0x788] sm:$0xff]
        %v560 = vld [vmem:[#allocation7 + $0x790] sm:$0xff]
        %v561 = vld [vmem:[#allocation7 + $0x798] sm:$0xff]
        %v562 = vld [vmem:[#allocation7 + $0x7a0] sm:$0xff]
        %v563 = vld [vmem:[#allocation7 + $0x7a8] sm:$0xff]
        %v564 = vld [vmem:[#allocation7 + $0x7b0] sm:$0xff]
        %v565 = vld [vmem:[#allocation7 + $0x7b8] sm:$0xff]
        %v566 = vld [vmem:[#allocation7 + $0x7c0] sm:$0xff]
        %v567 = vld [vmem:[#allocation7 + $0x7c8] sm:$0xff]
        %v568 = vld [vmem:[#allocation7 + $0x7d0] sm:$0xff]
        %v569 = vld [vmem:[#allocation7 + $0x7d8] sm:$0xff]
        %v570 = vld [vmem:[#allocation7 + $0x7e0] sm:$0xff]
        %v571 = vld [vmem:[#allocation7 + $0x7e8] sm:$0xff]
        %v572 = vld [vmem:[#allocation7 + $0x7f0] sm:$0xff]
        %v573 = vld [vmem:[#allocation7 + $0x7f8] sm:$0xff]
        %v574 = vld [vmem:[#allocation7 + $0x800] sm:$0xff]
        %v575 = vld [vmem:[#allocation7 + $0x808] sm:$0xff]
        %v576 = vld [vmem:[#allocation7 + $0x810] sm:$0xff]
        %v577 = vld [vmem:[#allocation7 + $0x818] sm:$0xff]
        %v578 = vld [vmem:[#allocation7 + $0x820] sm:$0xff]
        %v579 = vld [vmem:[#allocation7 + $0x828] sm:$0xff]
        %v580 = vld [vmem:[#allocation7 + $0x830] sm:$0xff]
        %v581 = vld [vmem:[#allocation7 + $0x838] sm:$0xff]
        %v582 = vld [vmem:[#allocation7 + $0x840] sm:$0xff]
        %v583 = vld [vmem:[#allocation7 + $0x848] sm:$0xff]
        %v584 = vld [vmem:[#allocation7 + $0x850] sm:$0xff]
        %v585 = vld [vmem:[#allocation7 + $0x858] sm:$0xff]
        %v586 = vld [vmem:[#allocation7 + $0x860] sm:$0xff]
        %v587 = vld [vmem:[#allocation7 + $0x868] sm:$0xff]
        %v588 = vld [vmem:[#allocation7 + $0x870] sm:$0xff]
        %v589 = vld [vmem:[#allocation7 + $0x878] sm:$0xff]
        %v590 = vld [vmem:[#allocation7 + $0x880] sm:$0xff]
        %v591 = vld [vmem:[#allocation7 + $0x888] sm:$0xff]
        %v592 = vld [vmem:[#allocation7 + $0x890] sm:$0xff]
        %v593 = vld [vmem:[#allocation7 + $0x898] sm:$0xff]
        %v594 = vld [vmem:[#allocation7 + $0x8a0] sm:$0xff]
        %v595 = vld [vmem:[#allocation7 + $0x8a8] sm:$0xff]
        %v596 = vld [vmem:[#allocation7 + $0x8b0] sm:$0xff]
        %v597 = vld [vmem:[#allocation7 + $0x8b8] sm:$0xff]
        %v598 = vld [vmem:[#allocation7 + $0x8c0] sm:$0xff]
        %v599 = vld [vmem:[#allocation7 + $0x8c8] sm:$0xff]
        %v600 = vld [vmem:[#allocation7 + $0x8d0] sm:$0xff]
        %v601 = vld [vmem:[#allocation7 + $0x8d8] sm:$0xff]
        %v602 = vld [vmem:[#allocation7 + $0x8e0] sm:$0xff]
        %v603 = vld [vmem:[#allocation7 + $0x8e8] sm:$0xff]
        %v604 = vld [vmem:[#allocation7 + $0x8f0] sm:$0xff]
        %v605 = vld [vmem:[#allocation7 + $0x8f8] sm:$0xff]
        %v606 = vld [vmem:[#allocation7 + $0x900] sm:$0xff]
        %v607 = vld [vmem:[#allocation7 + $0x908] sm:$0xff]
        %v608 = vld [vmem:[#allocation7 + $0x910] sm:$0xff]
        %v609 = vld [vmem:[#allocation7 + $0x918] sm:$0xff]
        %v610 = vld [vmem:[#allocation7 + $0x920] sm:$0xff]
        %v611 = vld [vmem:[#allocation7 + $0x928] sm:$0xff]
        %v612 = vld [vmem:[#allocation7 + $0x930] sm:$0xff]
        %v613 = vld [vmem:[#allocation7 + $0x938] sm:$0xff]
        %v614 = vld [vmem:[#allocation7 + $0x940] sm:$0xff]
        %v615 = vld [vmem:[#allocation7 + $0x948] sm:$0xff]
        %v616 = vld [vmem:[#allocation7 + $0x950] sm:$0xff]
        %v617 = vld [vmem:[#allocation7 + $0x958] sm:$0xff]
        %v618 = vld [vmem:[#allocation7 + $0x960] sm:$0xff]
        %v619 = vld [vmem:[#allocation7 + $0x968] sm:$0xff]
        %v620 = vld [vmem:[#allocation7 + $0x970] sm:$0xff]
        %v621 = vld [vmem:[#allocation7 + $0x978] sm:$0xff]
        %v622 = vld [vmem:[#allocation7 + $0x980] sm:$0xff]
        %v623 = vld [vmem:[#allocation7 + $0x988] sm:$0xff]
        %v624 = vld [vmem:[#allocation7 + $0x990] sm:$0xff]
        %v625 = vld [vmem:[#allocation7 + $0x998] sm:$0xff]
        %v626 = vld [vmem:[#allocation7 + $0x9a0] sm:$0xff]
        %v627 = vld [vmem:[#allocation7 + $0x9a8] sm:$0xff]
        %v628 = vld [vmem:[#allocation7 + $0x9b0] sm:$0xff]
        %v629 = vld [vmem:[#allocation7 + $0x9b8] sm:$0xff]
        %v630 = vld [vmem:[#allocation7 + $0x9c0] sm:$0xff]
        %v631 = vld [vmem:[#allocation7 + $0x9c8] sm:$0xff]
        %v632 = vld [vmem:[#allocation7 + $0x9d0] sm:$0xff]
        %v633 = vld [vmem:[#allocation7 + $0x9d8] sm:$0xff]
        %v634 = vld [vmem:[#allocation7 + $0x9e0] sm:$0xff]
        %v635 = vld [vmem:[#allocation7 + $0x9e8] sm:$0xff]
        %v636 = vld [vmem:[#allocation7 + $0x9f0] sm:$0xff]
        %v637 = vld [vmem:[#allocation7 + $0x9f8] sm:$0xff]
        %v638 = vld [vmem:[#allocation7 + $0xa00] sm:$0xff]
        %v639 = vld [vmem:[#allocation7 + $0xa08] sm:$0xff]
        %v640 = vld [vmem:[#allocation7 + $0xa10] sm:$0xff]
        %v641 = vld [vmem:[#allocation7 + $0xa18] sm:$0xff]
        %v642 = vld [vmem:[#allocation7 + $0xa20] sm:$0xff]
        %v643 = vld [vmem:[#allocation7 + $0xa28] sm:$0xff]
        %v644 = vld [vmem:[#allocation7 + $0xa30] sm:$0xff]
        %v645 = vld [vmem:[#allocation7 + $0xa38] sm:$0xff]
        %v646 = vld [vmem:[#allocation7 + $0xa40] sm:$0xff]
        %v647 = vld [vmem:[#allocation7 + $0xa48] sm:$0xff]
        %v648 = vld [vmem:[#allocation7 + $0xa50] sm:$0xff]
        %v649 = vld [vmem:[#allocation7 + $0xa58] sm:$0xff]
        %v650 = vld [vmem:[#allocation7 + $0xa60] sm:$0xff]
        %v651 = vld [vmem:[#allocation7 + $0xa68] sm:$0xff]
        %v652 = vld [vmem:[#allocation7 + $0xa70] sm:$0xff]
        %v653 = vld [vmem:[#allocation7 + $0xa78] sm:$0xff]
        %v654 = vld [vmem:[#allocation7 + $0xa80] sm:$0xff]
        %v655 = vld [vmem:[#allocation7 + $0xa88] sm:$0xff]
        %v656 = vld [vmem:[#allocation7 + $0xa90] sm:$0xff]
        %v657 = vld [vmem:[#allocation7 + $0xa98] sm:$0xff]
        %v658 = vld [vmem:[#allocation7 + $0xaa0] sm:$0xff]
        %v659 = vld [vmem:[#allocation7 + $0xaa8] sm:$0xff]
        %v660 = vld [vmem:[#allocation7 + $0xab0] sm:$0xff]
        %v661 = vld [vmem:[#allocation7 + $0xab8] sm:$0xff]
        %v662 = vld [vmem:[#allocation7 + $0xac0] sm:$0xff]
        %v663 = vld [vmem:[#allocation7 + $0xac8] sm:$0xff]
        %v664 = vld [vmem:[#allocation7 + $0xad0] sm:$0xff]
        %v665 = vld [vmem:[#allocation7 + $0xad8] sm:$0xff]
        %v666 = vld [vmem:[#allocation7 + $0xae0] sm:$0xff]
        %v667 = vld [vmem:[#allocation7 + $0xae8] sm:$0xff]
        %v668 = vld [vmem:[#allocation7 + $0xaf0] sm:$0xff]
        %v669 = vld [vmem:[#allocation7 + $0xaf8] sm:$0xff]
        %v670 = vld [vmem:[#allocation7 + $0xb00] sm:$0xff]
        %v671 = vld [vmem:[#allocation7 + $0xb08] sm:$0xff]
        %v672 = vld [vmem:[#allocation7 + $0xb10] sm:$0xff]
        %v673 = vld [vmem:[#allocation7 + $0xb18] sm:$0xff]
        %v674 = vld [vmem:[#allocation7 + $0xb20] sm:$0xff]
        %v675 = vld [vmem:[#allocation7 + $0xb28] sm:$0xff]
        %v676 = vld [vmem:[#allocation7 + $0xb30] sm:$0xff]
        %v677 = vld [vmem:[#allocation7 + $0xb38] sm:$0xff]
        %v678 = vld [vmem:[#allocation7 + $0xb40] sm:$0xff]
        %v679 = vld [vmem:[#allocation7 + $0xb48] sm:$0xff]
        %v680 = vld [vmem:[#allocation7 + $0xb50] sm:$0xff]
        %v681 = vld [vmem:[#allocation7 + $0xb58] sm:$0xff]
        %v682 = vld [vmem:[#allocation7 + $0xb60] sm:$0xff]
        %v683 = vld [vmem:[#allocation7 + $0xb68] sm:$0xff]
        %v684 = vld [vmem:[#allocation7 + $0xb70] sm:$0xff]
        %v685 = vld [vmem:[#allocation7 + $0xb78] sm:$0xff]
        %v686 = vld [vmem:[#allocation7 + $0xb80] sm:$0xff]
        %v687 = vld [vmem:[#allocation7 + $0xb88] sm:$0xff]
        %v688 = vld [vmem:[#allocation7 + $0xb90] sm:$0xff]
        %v689 = vld [vmem:[#allocation7 + $0xb98] sm:$0xff]
        %v690 = vld [vmem:[#allocation7 + $0xba0] sm:$0xff]
        %v691 = vld [vmem:[#allocation7 + $0xba8] sm:$0xff]
        %v692 = vld [vmem:[#allocation7 + $0xbb0] sm:$0xff]
        %v693 = vld [vmem:[#allocation7 + $0xbb8] sm:$0xff]
        %v694 = vld [vmem:[#allocation7 + $0xbc0] sm:$0xff]
        %v695 = vld [vmem:[#allocation7 + $0xbc8] sm:$0xff]
        %v696 = vld [vmem:[#allocation7 + $0xbd0] sm:$0xff]
        %v697 = vld [vmem:[#allocation7 + $0xbd8] sm:$0xff]
        %v698 = vld [vmem:[#allocation7 + $0xbe0] sm:$0xff]
        %v699 = vld [vmem:[#allocation7 + $0xbe8] sm:$0xff]
        %v700 = vld [vmem:[#allocation7 + $0xbf0] sm:$0xff]
        %v701 = vld [vmem:[#allocation7 + $0xbf8] sm:$0xff]
        %v702 = vld [vmem:[#allocation7 + $0xc00] sm:$0xff]
        %v703 = vld [vmem:[#allocation7 + $0xc08] sm:$0xff]
        %v704 = vld [vmem:[#allocation7 + $0xc10] sm:$0xff]
        %v705 = vld [vmem:[#allocation7 + $0xc18] sm:$0xff]
        %v706 = vld [vmem:[#allocation7 + $0xc20] sm:$0xff]
        %v707 = vld [vmem:[#allocation7 + $0xc28] sm:$0xff]
        %v708 = vld [vmem:[#allocation7 + $0xc30] sm:$0xff]
        %v709 = vld [vmem:[#allocation7 + $0xc38] sm:$0xff]
        %v710 = vld [vmem:[#allocation7 + $0xc40] sm:$0xff]
        %v711 = vld [vmem:[#allocation7 + $0xc48] sm:$0xff]
        %v712 = vld [vmem:[#allocation7 + $0xc50] sm:$0xff]
        %v713 = vld [vmem:[#allocation7 + $0xc58] sm:$0xff]
        %v714 = vld [vmem:[#allocation7 + $0xc60] sm:$0xff]
        %v715 = vld [vmem:[#allocation7 + $0xc68] sm:$0xff]
        %v716 = vld [vmem:[#allocation7 + $0xc70] sm:$0xff]
        %v717 = vld [vmem:[#allocation7 + $0xc78] sm:$0xff]
        %v718 = vld [vmem:[#allocation7 + $0xc80] sm:$0xff]
        %v719 = vld [vmem:[#allocation7 + $0xc88] sm:$0xff]
        %v720 = vld [vmem:[#allocation7 + $0xc90] sm:$0xff]
        %v721 = vld [vmem:[#allocation7 + $0xc98] sm:$0xff]
        %v722 = vld [vmem:[#allocation7 + $0xca0] sm:$0xff]
        %v723 = vld [vmem:[#allocation7 + $0xca8] sm:$0xff]
        %v724 = vld [vmem:[#allocation7 + $0xcb0] sm:$0xff]
        %v725 = vld [vmem:[#allocation7 + $0xcb8] sm:$0xff]
        %v726 = vld [vmem:[#allocation7 + $0xcc0] sm:$0xff]
        %v727 = vld [vmem:[#allocation7 + $0xcc8] sm:$0xff]
        %v728 = vld [vmem:[#allocation7 + $0xcd0] sm:$0xff]
        %v729 = vld [vmem:[#allocation7 + $0xcd8] sm:$0xff]
        %v730 = vld [vmem:[#allocation7 + $0xce0] sm:$0xff]
        %v731 = vld [vmem:[#allocation7 + $0xce8] sm:$0xff]
        %v732 = vld [vmem:[#allocation7 + $0xcf0] sm:$0xff]
        %v733 = vld [vmem:[#allocation7 + $0xcf8] sm:$0xff]
        %v734 = vld [vmem:[#allocation7 + $0xd00] sm:$0xff]
        %v735 = vld [vmem:[#allocation7 + $0xd08] sm:$0xff]
        %v736 = vld [vmem:[#allocation7 + $0xd10] sm:$0xff]
        %v737 = vld [vmem:[#allocation7 + $0xd18] sm:$0xff]
        %v738 = vld [vmem:[#allocation7 + $0xd20] sm:$0xff]
        %v739 = vld [vmem:[#allocation7 + $0xd28] sm:$0xff]
        %v740 = vld [vmem:[#allocation7 + $0xd30] sm:$0xff]
        %v741 = vld [vmem:[#allocation7 + $0xd38] sm:$0xff]
        %v742 = vld [vmem:[#allocation7 + $0xd40] sm:$0xff]
        %v743 = vld [vmem:[#allocation7 + $0xd48] sm:$0xff]
        %v744 = vld [vmem:[#allocation7 + $0xd50] sm:$0xff]
        %v745 = vld [vmem:[#allocation7 + $0xd58] sm:$0xff]
        %v746 = vld [vmem:[#allocation7 + $0xd60] sm:$0xff]
        %v747 = vld [vmem:[#allocation7 + $0xd68] sm:$0xff]
        %v748 = vld [vmem:[#allocation7 + $0xd70] sm:$0xff]
        %v749 = vld [vmem:[#allocation7 + $0xd78] sm:$0xff]
        %v750 = vld [vmem:[#allocation7 + $0xd80] sm:$0xff]
        %v751 = vld [vmem:[#allocation7 + $0xd88] sm:$0xff]
        %v752 = vld [vmem:[#allocation7 + $0xd90] sm:$0xff]
        %v753 = vld [vmem:[#allocation7 + $0xd98] sm:$0xff]
        %v754 = vld [vmem:[#allocation7 + $0xda0] sm:$0xff]
        %v755 = vld [vmem:[#allocation7 + $0xda8] sm:$0xff]
        %v756 = vld [vmem:[#allocation7 + $0xdb0] sm:$0xff]
        %v757 = vld [vmem:[#allocation7 + $0xdb8] sm:$0xff]
        %v758 = vld [vmem:[#allocation7 + $0xdc0] sm:$0xff]
        %v759 = vld [vmem:[#allocation7 + $0xdc8] sm:$0xff]
        %v760 = vld [vmem:[#allocation7 + $0xdd0] sm:$0xff]
        %v761 = vld [vmem:[#allocation7 + $0xdd8] sm:$0xff]
        %v762 = vld [vmem:[#allocation7 + $0xde0] sm:$0xff]
        %v763 = vld [vmem:[#allocation7 + $0xde8] sm:$0xff]
        %v764 = vld [vmem:[#allocation7 + $0xdf0] sm:$0xff]
        %v765 = vld [vmem:[#allocation7 + $0xdf8] sm:$0xff]
        %v766 = vld [vmem:[#allocation7 + $0xe00] sm:$0xff]
        %v767 = vld [vmem:[#allocation7 + $0xe08] sm:$0xff]
        %v768 = vld [vmem:[#allocation7 + $0xe10] sm:$0xff]
        %v769 = vld [vmem:[#allocation7 + $0xe18] sm:$0xff]
        %v770 = vld [vmem:[#allocation7 + $0xe20] sm:$0xff]
        %v771 = vld [vmem:[#allocation7 + $0xe28] sm:$0xff]
        %v772 = vld [vmem:[#allocation7 + $0xe30] sm:$0xff]
        %v773 = vld [vmem:[#allocation7 + $0xe38] sm:$0xff]
        %v774 = vld [vmem:[#allocation7 + $0xe40] sm:$0xff]
        %v775 = vld [vmem:[#allocation7 + $0xe48] sm:$0xff]
        %v776 = vld [vmem:[#allocation7 + $0xe50] sm:$0xff]
        %v777 = vld [vmem:[#allocation7 + $0xe58] sm:$0xff]
        %v778 = vld [vmem:[#allocation7 + $0xe60] sm:$0xff]
        %v779 = vld [vmem:[#allocation7 + $0xe68] sm:$0xff]
        %v780 = vld [vmem:[#allocation7 + $0xe70] sm:$0xff]
        %v781 = vld [vmem:[#allocation7 + $0xe78] sm:$0xff]
        %v782 = vld [vmem:[#allocation7 + $0xe80] sm:$0xff]
        %v783 = vld [vmem:[#allocation7 + $0xe88] sm:$0xff]
        %v784 = vld [vmem:[#allocation7 + $0xe90] sm:$0xff]
        %v785 = vld [vmem:[#allocation7 + $0xe98] sm:$0xff]
        %v786 = vld [vmem:[#allocation7 + $0xea0] sm:$0xff]
        %v787 = vld [vmem:[#allocation7 + $0xea8] sm:$0xff]
        %v788 = vld [vmem:[#allocation7 + $0xeb0] sm:$0xff]
        %v789 = vld [vmem:[#allocation7 + $0xeb8] sm:$0xff]
        %v790 = vld [vmem:[#allocation7 + $0xec0] sm:$0xff]
        %v791 = vld [vmem:[#allocation7 + $0xec8] sm:$0xff]
        %v792 = vld [vmem:[#allocation7 + $0xed0] sm:$0xff]
        %v793 = vld [vmem:[#allocation7 + $0xed8] sm:$0xff]
        %v794 = vld [vmem:[#allocation7 + $0xee0] sm:$0xff]
        %v795 = vld [vmem:[#allocation7 + $0xee8] sm:$0xff]
        %v796 = vld [vmem:[#allocation7 + $0xef0] sm:$0xff]
        %v797 = vld [vmem:[#allocation7 + $0xef8] sm:$0xff]
        %v798 = vld [vmem:[#allocation7 + $0xf00] sm:$0xff]
        %v799 = vld [vmem:[#allocation7 + $0xf08] sm:$0xff]
        %v800 = vld [vmem:[#allocation7 + $0xf10] sm:$0xff]
        %v801 = vld [vmem:[#allocation7 + $0xf18] sm:$0xff]
        %v802 = vld [vmem:[#allocation7 + $0xf20] sm:$0xff]
        %v803 = vld [vmem:[#allocation7 + $0xf28] sm:$0xff]
        %v804 = vld [vmem:[#allocation7 + $0xf30] sm:$0xff]
        %v805 = vld [vmem:[#allocation7 + $0xf38] sm:$0xff]
        %v806 = vld [vmem:[#allocation7 + $0xf40] sm:$0xff]
        %v807 = vld [vmem:[#allocation7 + $0xf48] sm:$0xff]
        %v808 = vld [vmem:[#allocation7 + $0xf50] sm:$0xff]
        %v809 = vld [vmem:[#allocation7 + $0xf58] sm:$0xff]
        %v810 = vld [vmem:[#allocation7 + $0xf60] sm:$0xff]
        %v811 = vld [vmem:[#allocation7 + $0xf68] sm:$0xff]
        %v812 = vld [vmem:[#allocation7 + $0xf70] sm:$0xff]
        %v813 = vld [vmem:[#allocation7 + $0xf78] sm:$0xff]
        %v814 = vld [vmem:[#allocation7 + $0xf80] sm:$0xff]
        %v815 = vld [vmem:[#allocation7 + $0xf88] sm:$0xff]
        %v816 = vld [vmem:[#allocation7 + $0xf90] sm:$0xff]
        %v817 = vld [vmem:[#allocation7 + $0xf98] sm:$0xff]
        %v818 = vld [vmem:[#allocation7 + $0xfa0] sm:$0xff]
        %v819 = vld [vmem:[#allocation7 + $0xfa8] sm:$0xff]
        %v820 = vld [vmem:[#allocation7 + $0xfb0] sm:$0xff]
        %v821 = vld [vmem:[#allocation7 + $0xfb8] sm:$0xff]
        %v822 = vld [vmem:[#allocation7 + $0xfc0] sm:$0xff]
        %v823 = vld [vmem:[#allocation7 + $0xfc8] sm:$0xff]
        %v824 = vld [vmem:[#allocation7 + $0xfd0] sm:$0xff]
        %v825 = vld [vmem:[#allocation7 + $0xfd8] sm:$0xff]
        %v826 = vld [vmem:[#allocation7 + $0xfe0] sm:$0xff]
        %v827 = vld [vmem:[#allocation7 + $0xfe8] sm:$0xff]
        %v828 = vld [vmem:[#allocation7 + $0xff0] sm:$0xff]
        %v829 = vld [vmem:[#allocation7 + $0xff8] sm:$0xff]
        %v838 = vunpack.c.l.b16 %v310
        %v839 = vunpack.c.h.b16 %v310
        %v840 = vunpack.c.l.b16 %v311
        %v841 = vunpack.c.h.b16 %v311
        %v842 = vunpack.c.l.b16 %v312
        %v843 = vunpack.c.h.b16 %v312
        %v844 = vunpack.c.l.b16 %v313
        %v845 = vunpack.c.h.b16 %v313
        %v846 = vunpack.c.l.b16 %v314
        %v847 = vunpack.c.h.b16 %v314
        %v848 = vunpack.c.l.b16 %v315
        %v849 = vunpack.c.h.b16 %v315
        %v850 = vunpack.c.l.b16 %v316
        %v851 = vunpack.c.h.b16 %v316
        %v852 = vunpack.c.l.b16 %v317
        %v853 = vunpack.c.h.b16 %v317
        %v854 = vpack.c.b16 %v846, %v838
        %v855 = vpack.c.b16 %v847, %v839
        %v856 = vpack.c.b16 %v848, %v840
        %v857 = vpack.c.b16 %v849, %v841
        %v858 = vpack.c.b16 %v850, %v842
        %v859 = vpack.c.b16 %v851, %v843
        %v860 = vpack.c.b16 %v852, %v844
        %v861 = vpack.c.b16 %v853, %v845
        %v1382 = vunpack.c.l.b16 %v318
        %v1383 = vunpack.c.h.b16 %v318
        %v1384 = vunpack.c.l.b16 %v319
        %v1385 = vunpack.c.h.b16 %v319
        %v1386 = vunpack.c.l.b16 %v320
        %v1387 = vunpack.c.h.b16 %v320
        %v1388 = vunpack.c.l.b16 %v321
        %v1389 = vunpack.c.h.b16 %v321
        %v1390 = vunpack.c.l.b16 %v322
        %v1391 = vunpack.c.h.b16 %v322
        %v1392 = vunpack.c.l.b16 %v323
        %v1393 = vunpack.c.h.b16 %v323
        %v1394 = vunpack.c.l.b16 %v324
        %v1395 = vunpack.c.h.b16 %v324
        %v1396 = vunpack.c.l.b16 %v325
        %v1397 = vunpack.c.h.b16 %v325
        %v1398 = vunpack.c.l.b16 %v326
        %v1399 = vunpack.c.h.b16 %v326
        %v1400 = vunpack.c.l.b16 %v327
        %v1401 = vunpack.c.h.b16 %v327
        %v1402 = vunpack.c.l.b16 %v328
        %v1403 = vunpack.c.h.b16 %v328
        %v1404 = vunpack.c.l.b16 %v329
        %v1405 = vunpack.c.h.b16 %v329
        %v1406 = vunpack.c.l.b16 %v330
        %v1407 = vunpack.c.h.b16 %v330
        %v1408 = vunpack.c.l.b16 %v331
        %v1409 = vunpack.c.h.b16 %v331
        %v1410 = vunpack.c.l.b16 %v332
        %v1411 = vunpack.c.h.b16 %v332
        %v1412 = vunpack.c.l.b16 %v333
        %v1413 = vunpack.c.h.b16 %v333
        %v1414 = vunpack.c.l.b16 %v334
        %v1415 = vunpack.c.h.b16 %v334
        %v1416 = vunpack.c.l.b16 %v335
        %v1417 = vunpack.c.h.b16 %v335
        %v1418 = vunpack.c.l.b16 %v336
        %v1419 = vunpack.c.h.b16 %v336
        %v1420 = vunpack.c.l.b16 %v337
        %v1421 = vunpack.c.h.b16 %v337
        %v1422 = vunpack.c.l.b16 %v338
        %v1423 = vunpack.c.h.b16 %v338
        %v1424 = vunpack.c.l.b16 %v339
        %v1425 = vunpack.c.h.b16 %v339
        %v1426 = vunpack.c.l.b16 %v340
        %v1427 = vunpack.c.h.b16 %v340
        %v1428 = vunpack.c.l.b16 %v341
        %v1429 = vunpack.c.h.b16 %v341
        %v1430 = vunpack.c.l.b16 %v342
        %v1431 = vunpack.c.h.b16 %v342
        %v1432 = vunpack.c.l.b16 %v343
        %v1433 = vunpack.c.h.b16 %v343
        %v1434 = vunpack.c.l.b16 %v344
        %v1435 = vunpack.c.h.b16 %v344
        %v1436 = vunpack.c.l.b16 %v345
        %v1437 = vunpack.c.h.b16 %v345
        %v1438 = vunpack.c.l.b16 %v346
        %v1439 = vunpack.c.h.b16 %v346
        %v1440 = vunpack.c.l.b16 %v347
        %v1441 = vunpack.c.h.b16 %v347
        %v1442 = vunpack.c.l.b16 %v348
        %v1443 = vunpack.c.h.b16 %v348
        %v1444 = vunpack.c.l.b16 %v349
        %v1445 = vunpack.c.h.b16 %v349
        %v1446 = vunpack.c.l.b16 %v350
        %v1447 = vunpack.c.h.b16 %v350
        %v1448 = vunpack.c.l.b16 %v351
        %v1449 = vunpack.c.h.b16 %v351
        %v1450 = vunpack.c.l.b16 %v352
        %v1451 = vunpack.c.h.b16 %v352
        %v1452 = vunpack.c.l.b16 %v353
        %v1453 = vunpack.c.h.b16 %v353
        %v1454 = vunpack.c.l.b16 %v354
        %v1455 = vunpack.c.h.b16 %v354
        %v1456 = vunpack.c.l.b16 %v355
        %v1457 = vunpack.c.h.b16 %v355
        %v1458 = vunpack.c.l.b16 %v356
        %v1459 = vunpack.c.h.b16 %v356
        %v1460 = vunpack.c.l.b16 %v357
        %v1461 = vunpack.c.h.b16 %v357
        %v1462 = vunpack.c.l.b16 %v358
        %v1463 = vunpack.c.h.b16 %v358
        %v1464 = vunpack.c.l.b16 %v359
        %v1465 = vunpack.c.h.b16 %v359
        %v1466 = vunpack.c.l.b16 %v360
        %v1467 = vunpack.c.h.b16 %v360
        %v1468 = vunpack.c.l.b16 %v361
        %v1469 = vunpack.c.h.b16 %v361
        %v1470 = vunpack.c.l.b16 %v362
        %v1471 = vunpack.c.h.b16 %v362
        %v1472 = vunpack.c.l.b16 %v363
        %v1473 = vunpack.c.h.b16 %v363
        %v1474 = vunpack.c.l.b16 %v364
        %v1475 = vunpack.c.h.b16 %v364
        %v1476 = vunpack.c.l.b16 %v365
        %v1477 = vunpack.c.h.b16 %v365
        %v1478 = vunpack.c.l.b16 %v366
        %v1479 = vunpack.c.h.b16 %v366
        %v1480 = vunpack.c.l.b16 %v367
        %v1481 = vunpack.c.h.b16 %v367
        %v1482 = vunpack.c.l.b16 %v368
        %v1483 = vunpack.c.h.b16 %v368
        %v1484 = vunpack.c.l.b16 %v369
        %v1485 = vunpack.c.h.b16 %v369
        %v1486 = vunpack.c.l.b16 %v370
        %v1487 = vunpack.c.h.b16 %v370
        %v1488 = vunpack.c.l.b16 %v371
        %v1489 = vunpack.c.h.b16 %v371
        %v1490 = vunpack.c.l.b16 %v372
        %v1491 = vunpack.c.h.b16 %v372
        %v1492 = vunpack.c.l.b16 %v373
        %v1493 = vunpack.c.h.b16 %v373
        %v1494 = vunpack.c.l.b16 %v374
        %v1495 = vunpack.c.h.b16 %v374
        %v1496 = vunpack.c.l.b16 %v375
        %v1497 = vunpack.c.h.b16 %v375
        %v1498 = vunpack.c.l.b16 %v376
        %v1499 = vunpack.c.h.b16 %v376
        %v1500 = vunpack.c.l.b16 %v377
        %v1501 = vunpack.c.h.b16 %v377
        %v1502 = vunpack.c.l.b16 %v378
        %v1503 = vunpack.c.h.b16 %v378
        %v1504 = vunpack.c.l.b16 %v379
        %v1505 = vunpack.c.h.b16 %v379
        %v1506 = vunpack.c.l.b16 %v380
        %v1507 = vunpack.c.h.b16 %v380
        %v1508 = vunpack.c.l.b16 %v381
        %v1509 = vunpack.c.h.b16 %v381
        %v1510 = vunpack.c.l.b16 %v382
        %v1511 = vunpack.c.h.b16 %v382
        %v1512 = vunpack.c.l.b16 %v383
        %v1513 = vunpack.c.h.b16 %v383
        %v1514 = vunpack.c.l.b16 %v384
        %v1515 = vunpack.c.h.b16 %v384
        %v1516 = vunpack.c.l.b16 %v385
        %v1517 = vunpack.c.h.b16 %v385
        %v1518 = vunpack.c.l.b16 %v386
        %v1519 = vunpack.c.h.b16 %v386
        %v1520 = vunpack.c.l.b16 %v387
        %v1521 = vunpack.c.h.b16 %v387
        %v1522 = vunpack.c.l.b16 %v388
        %v1523 = vunpack.c.h.b16 %v388
        %v1524 = vunpack.c.l.b16 %v389
        %v1525 = vunpack.c.h.b16 %v389
        %v1526 = vunpack.c.l.b16 %v390
        %v1527 = vunpack.c.h.b16 %v390
        %v1528 = vunpack.c.l.b16 %v391
        %v1529 = vunpack.c.h.b16 %v391
        %v1530 = vunpack.c.l.b16 %v392
        %v1531 = vunpack.c.h.b16 %v392
        %v1532 = vunpack.c.l.b16 %v393
        %v1533 = vunpack.c.h.b16 %v393
        %v1534 = vunpack.c.l.b16 %v394
        %v1535 = vunpack.c.h.b16 %v394
        %v1536 = vunpack.c.l.b16 %v395
        %v1537 = vunpack.c.h.b16 %v395
        %v1538 = vunpack.c.l.b16 %v396
        %v1539 = vunpack.c.h.b16 %v396
        %v1540 = vunpack.c.l.b16 %v397
        %v1541 = vunpack.c.h.b16 %v397
        %v1542 = vunpack.c.l.b16 %v398
        %v1543 = vunpack.c.h.b16 %v398
        %v1544 = vunpack.c.l.b16 %v399
        %v1545 = vunpack.c.h.b16 %v399
        %v1546 = vunpack.c.l.b16 %v400
        %v1547 = vunpack.c.h.b16 %v400
        %v1548 = vunpack.c.l.b16 %v401
        %v1549 = vunpack.c.h.b16 %v401
        %v1550 = vunpack.c.l.b16 %v402
        %v1551 = vunpack.c.h.b16 %v402
        %v1552 = vunpack.c.l.b16 %v403
        %v1553 = vunpack.c.h.b16 %v403
        %v1554 = vunpack.c.l.b16 %v404
        %v1555 = vunpack.c.h.b16 %v404
        %v1556 = vunpack.c.l.b16 %v405
        %v1557 = vunpack.c.h.b16 %v405
        %v1558 = vunpack.c.l.b16 %v406
        %v1559 = vunpack.c.h.b16 %v406
        %v1560 = vunpack.c.l.b16 %v407
        %v1561 = vunpack.c.h.b16 %v407
        %v1562 = vunpack.c.l.b16 %v408
        %v1563 = vunpack.c.h.b16 %v408
        %v1564 = vunpack.c.l.b16 %v409
        %v1565 = vunpack.c.h.b16 %v409
        %v1566 = vunpack.c.l.b16 %v410
        %v1567 = vunpack.c.h.b16 %v410
        %v1568 = vunpack.c.l.b16 %v411
        %v1569 = vunpack.c.h.b16 %v411
        %v1570 = vunpack.c.l.b16 %v412
        %v1571 = vunpack.c.h.b16 %v412
        %v1572 = vunpack.c.l.b16 %v413
        %v1573 = vunpack.c.h.b16 %v413
        %v1574 = vunpack.c.l.b16 %v414
        %v1575 = vunpack.c.h.b16 %v414
        %v1576 = vunpack.c.l.b16 %v415
        %v1577 = vunpack.c.h.b16 %v415
        %v1578 = vunpack.c.l.b16 %v416
        %v1579 = vunpack.c.h.b16 %v416
        %v1580 = vunpack.c.l.b16 %v417
        %v1581 = vunpack.c.h.b16 %v417
        %v1582 = vunpack.c.l.b16 %v418
        %v1583 = vunpack.c.h.b16 %v418
        %v1584 = vunpack.c.l.b16 %v419
        %v1585 = vunpack.c.h.b16 %v419
        %v1586 = vunpack.c.l.b16 %v420
        %v1587 = vunpack.c.h.b16 %v420
        %v1588 = vunpack.c.l.b16 %v421
        %v1589 = vunpack.c.h.b16 %v421
        %v1590 = vunpack.c.l.b16 %v422
        %v1591 = vunpack.c.h.b16 %v422
        %v1592 = vunpack.c.l.b16 %v423
        %v1593 = vunpack.c.h.b16 %v423
        %v1594 = vunpack.c.l.b16 %v424
        %v1595 = vunpack.c.h.b16 %v424
        %v1596 = vunpack.c.l.b16 %v425
        %v1597 = vunpack.c.h.b16 %v425
        %v1598 = vunpack.c.l.b16 %v426
        %v1599 = vunpack.c.h.b16 %v426
        %v1600 = vunpack.c.l.b16 %v427
        %v1601 = vunpack.c.h.b16 %v427
        %v1602 = vunpack.c.l.b16 %v428
        %v1603 = vunpack.c.h.b16 %v428
        %v1604 = vunpack.c.l.b16 %v429
        %v1605 = vunpack.c.h.b16 %v429
        %v1606 = vunpack.c.l.b16 %v430
        %v1607 = vunpack.c.h.b16 %v430
        %v1608 = vunpack.c.l.b16 %v431
        %v1609 = vunpack.c.h.b16 %v431
        %v1610 = vunpack.c.l.b16 %v432
        %v1611 = vunpack.c.h.b16 %v432
        %v1612 = vunpack.c.l.b16 %v433
        %v1613 = vunpack.c.h.b16 %v433
        %v1614 = vunpack.c.l.b16 %v434
        %v1615 = vunpack.c.h.b16 %v434
        %v1616 = vunpack.c.l.b16 %v435
        %v1617 = vunpack.c.h.b16 %v435
        %v1618 = vunpack.c.l.b16 %v436
        %v1619 = vunpack.c.h.b16 %v436
        %v1620 = vunpack.c.l.b16 %v437
        %v1621 = vunpack.c.h.b16 %v437
        %v1622 = vunpack.c.l.b16 %v438
        %v1623 = vunpack.c.h.b16 %v438
        %v1624 = vunpack.c.l.b16 %v439
        %v1625 = vunpack.c.h.b16 %v439
        %v1626 = vunpack.c.l.b16 %v440
        %v1627 = vunpack.c.h.b16 %v440
        %v1628 = vunpack.c.l.b16 %v441
        %v1629 = vunpack.c.h.b16 %v441
        %v1630 = vunpack.c.l.b16 %v442
        %v1631 = vunpack.c.h.b16 %v442
        %v1632 = vunpack.c.l.b16 %v443
        %v1633 = vunpack.c.h.b16 %v443
        %v1634 = vunpack.c.l.b16 %v444
        %v1635 = vunpack.c.h.b16 %v444
        %v1636 = vunpack.c.l.b16 %v445
        %v1637 = vunpack.c.h.b16 %v445
        %v1638 = vunpack.c.l.b16 %v446
        %v1639 = vunpack.c.h.b16 %v446
        %v1640 = vunpack.c.l.b16 %v447
        %v1641 = vunpack.c.h.b16 %v447
        %v1642 = vunpack.c.l.b16 %v448
        %v1643 = vunpack.c.h.b16 %v448
        %v1644 = vunpack.c.l.b16 %v449
        %v1645 = vunpack.c.h.b16 %v449
        %v1646 = vunpack.c.l.b16 %v450
        %v1647 = vunpack.c.h.b16 %v450
        %v1648 = vunpack.c.l.b16 %v451
        %v1649 = vunpack.c.h.b16 %v451
        %v1650 = vunpack.c.l.b16 %v452
        %v1651 = vunpack.c.h.b16 %v452
        %v1652 = vunpack.c.l.b16 %v453
        %v1653 = vunpack.c.h.b16 %v453
        %v1654 = vunpack.c.l.b16 %v454
        %v1655 = vunpack.c.h.b16 %v454
        %v1656 = vunpack.c.l.b16 %v455
        %v1657 = vunpack.c.h.b16 %v455
        %v1658 = vunpack.c.l.b16 %v456
        %v1659 = vunpack.c.h.b16 %v456
        %v1660 = vunpack.c.l.b16 %v457
        %v1661 = vunpack.c.h.b16 %v457
        %v1662 = vunpack.c.l.b16 %v458
        %v1663 = vunpack.c.h.b16 %v458
        %v1664 = vunpack.c.l.b16 %v459
        %v1665 = vunpack.c.h.b16 %v459
        %v1666 = vunpack.c.l.b16 %v460
        %v1667 = vunpack.c.h.b16 %v460
        %v1668 = vunpack.c.l.b16 %v461
        %v1669 = vunpack.c.h.b16 %v461
        %v1670 = vunpack.c.l.b16 %v462
        %v1671 = vunpack.c.h.b16 %v462
        %v1672 = vunpack.c.l.b16 %v463
        %v1673 = vunpack.c.h.b16 %v463
        %v1674 = vunpack.c.l.b16 %v464
        %v1675 = vunpack.c.h.b16 %v464
        %v1676 = vunpack.c.l.b16 %v465
        %v1677 = vunpack.c.h.b16 %v465
        %v1678 = vunpack.c.l.b16 %v466
        %v1679 = vunpack.c.h.b16 %v466
        %v1680 = vunpack.c.l.b16 %v467
        %v1681 = vunpack.c.h.b16 %v467
        %v1682 = vunpack.c.l.b16 %v468
        %v1683 = vunpack.c.h.b16 %v468
        %v1684 = vunpack.c.l.b16 %v469
        %v1685 = vunpack.c.h.b16 %v469
        %v1686 = vunpack.c.l.b16 %v470
        %v1687 = vunpack.c.h.b16 %v470
        %v1688 = vunpack.c.l.b16 %v471
        %v1689 = vunpack.c.h.b16 %v471
        %v1690 = vunpack.c.l.b16 %v472
        %v1691 = vunpack.c.h.b16 %v472
        %v1692 = vunpack.c.l.b16 %v473
        %v1693 = vunpack.c.h.b16 %v473
        %v1694 = vunpack.c.l.b16 %v474
        %v1695 = vunpack.c.h.b16 %v474
        %v1696 = vunpack.c.l.b16 %v475
        %v1697 = vunpack.c.h.b16 %v475
        %v1698 = vunpack.c.l.b16 %v476
        %v1699 = vunpack.c.h.b16 %v476
        %v1700 = vunpack.c.l.b16 %v477
        %v1701 = vunpack.c.h.b16 %v477
        %v1702 = vunpack.c.l.b16 %v478
        %v1703 = vunpack.c.h.b16 %v478
        %v1704 = vunpack.c.l.b16 %v479
        %v1705 = vunpack.c.h.b16 %v479
        %v1706 = vunpack.c.l.b16 %v480
        %v1707 = vunpack.c.h.b16 %v480
        %v1708 = vunpack.c.l.b16 %v481
        %v1709 = vunpack.c.h.b16 %v481
        %v1710 = vunpack.c.l.b16 %v482
        %v1711 = vunpack.c.h.b16 %v482
        %v1712 = vunpack.c.l.b16 %v483
        %v1713 = vunpack.c.h.b16 %v483
        %v1714 = vunpack.c.l.b16 %v484
        %v1715 = vunpack.c.h.b16 %v484
        %v1716 = vunpack.c.l.b16 %v485
        %v1717 = vunpack.c.h.b16 %v485
        %v1718 = vunpack.c.l.b16 %v486
        %v1719 = vunpack.c.h.b16 %v486
        %v1720 = vunpack.c.l.b16 %v487
        %v1721 = vunpack.c.h.b16 %v487
        %v1722 = vunpack.c.l.b16 %v488
        %v1723 = vunpack.c.h.b16 %v488
        %v1724 = vunpack.c.l.b16 %v489
        %v1725 = vunpack.c.h.b16 %v489
        %v1726 = vunpack.c.l.b16 %v490
        %v1727 = vunpack.c.h.b16 %v490
        %v1728 = vunpack.c.l.b16 %v491
        %v1729 = vunpack.c.h.b16 %v491
        %v1730 = vunpack.c.l.b16 %v492
        %v1731 = vunpack.c.h.b16 %v492
        %v1732 = vunpack.c.l.b16 %v493
        %v1733 = vunpack.c.h.b16 %v493
        %v1734 = vunpack.c.l.b16 %v494
        %v1735 = vunpack.c.h.b16 %v494
        %v1736 = vunpack.c.l.b16 %v495
        %v1737 = vunpack.c.h.b16 %v495
        %v1738 = vunpack.c.l.b16 %v496
        %v1739 = vunpack.c.h.b16 %v496
        %v1740 = vunpack.c.l.b16 %v497
        %v1741 = vunpack.c.h.b16 %v497
        %v1742 = vunpack.c.l.b16 %v498
        %v1743 = vunpack.c.h.b16 %v498
        %v1744 = vunpack.c.l.b16 %v499
        %v1745 = vunpack.c.h.b16 %v499
        %v1746 = vunpack.c.l.b16 %v500
        %v1747 = vunpack.c.h.b16 %v500
        %v1748 = vunpack.c.l.b16 %v501
        %v1749 = vunpack.c.h.b16 %v501
        %v1750 = vunpack.c.l.b16 %v502
        %v1751 = vunpack.c.h.b16 %v502
        %v1752 = vunpack.c.l.b16 %v503
        %v1753 = vunpack.c.h.b16 %v503
        %v1754 = vunpack.c.l.b16 %v504
        %v1755 = vunpack.c.h.b16 %v504
        %v1756 = vunpack.c.l.b16 %v505
        %v1757 = vunpack.c.h.b16 %v505
        %v1758 = vunpack.c.l.b16 %v506
        %v1759 = vunpack.c.h.b16 %v506
        %v1760 = vunpack.c.l.b16 %v507
        %v1761 = vunpack.c.h.b16 %v507
        %v1762 = vunpack.c.l.b16 %v508
        %v1763 = vunpack.c.h.b16 %v508
        %v1764 = vunpack.c.l.b16 %v509
        %v1765 = vunpack.c.h.b16 %v509
        %v1766 = vunpack.c.l.b16 %v510
        %v1767 = vunpack.c.h.b16 %v510
        %v1768 = vunpack.c.l.b16 %v511
        %v1769 = vunpack.c.h.b16 %v511
        %v1770 = vunpack.c.l.b16 %v512
        %v1771 = vunpack.c.h.b16 %v512
        %v1772 = vunpack.c.l.b16 %v513
        %v1773 = vunpack.c.h.b16 %v513
        %v1774 = vunpack.c.l.b16 %v514
        %v1775 = vunpack.c.h.b16 %v514
        %v1776 = vunpack.c.l.b16 %v515
        %v1777 = vunpack.c.h.b16 %v515
        %v1778 = vunpack.c.l.b16 %v516
        %v1779 = vunpack.c.h.b16 %v516
        %v1780 = vunpack.c.l.b16 %v517
        %v1781 = vunpack.c.h.b16 %v517
        %v1782 = vunpack.c.l.b16 %v518
        %v1783 = vunpack.c.h.b16 %v518
        %v1784 = vunpack.c.l.b16 %v519
        %v1785 = vunpack.c.h.b16 %v519
        %v1786 = vunpack.c.l.b16 %v520
        %v1787 = vunpack.c.h.b16 %v520
        %v1788 = vunpack.c.l.b16 %v521
        %v1789 = vunpack.c.h.b16 %v521
        %v1790 = vunpack.c.l.b16 %v522
        %v1791 = vunpack.c.h.b16 %v522
        %v1792 = vunpack.c.l.b16 %v523
        %v1793 = vunpack.c.h.b16 %v523
        %v1794 = vunpack.c.l.b16 %v524
        %v1795 = vunpack.c.h.b16 %v524
        %v1796 = vunpack.c.l.b16 %v525
        %v1797 = vunpack.c.h.b16 %v525
        %v1798 = vunpack.c.l.b16 %v526
        %v1799 = vunpack.c.h.b16 %v526
        %v1800 = vunpack.c.l.b16 %v527
        %v1801 = vunpack.c.h.b16 %v527
        %v1802 = vunpack.c.l.b16 %v528
        %v1803 = vunpack.c.h.b16 %v528
        %v1804 = vunpack.c.l.b16 %v529
        %v1805 = vunpack.c.h.b16 %v529
        %v1806 = vunpack.c.l.b16 %v530
        %v1807 = vunpack.c.h.b16 %v530
        %v1808 = vunpack.c.l.b16 %v531
        %v1809 = vunpack.c.h.b16 %v531
        %v1810 = vunpack.c.l.b16 %v532
        %v1811 = vunpack.c.h.b16 %v532
        %v1812 = vunpack.c.l.b16 %v533
        %v1813 = vunpack.c.h.b16 %v533
        %v1814 = vunpack.c.l.b16 %v534
        %v1815 = vunpack.c.h.b16 %v534
        %v1816 = vunpack.c.l.b16 %v535
        %v1817 = vunpack.c.h.b16 %v535
        %v1818 = vunpack.c.l.b16 %v536
        %v1819 = vunpack.c.h.b16 %v536
        %v1820 = vunpack.c.l.b16 %v537
        %v1821 = vunpack.c.h.b16 %v537
        %v1822 = vunpack.c.l.b16 %v538
        %v1823 = vunpack.c.h.b16 %v538
        %v1824 = vunpack.c.l.b16 %v539
        %v1825 = vunpack.c.h.b16 %v539
        %v1826 = vunpack.c.l.b16 %v540
        %v1827 = vunpack.c.h.b16 %v540
        %v1828 = vunpack.c.l.b16 %v541
        %v1829 = vunpack.c.h.b16 %v541
        %v1830 = vunpack.c.l.b16 %v542
        %v1831 = vunpack.c.h.b16 %v542
        %v1832 = vunpack.c.l.b16 %v543
        %v1833 = vunpack.c.h.b16 %v543
        %v1834 = vunpack.c.l.b16 %v544
        %v1835 = vunpack.c.h.b16 %v544
        %v1836 = vunpack.c.l.b16 %v545
        %v1837 = vunpack.c.h.b16 %v545
        %v1838 = vunpack.c.l.b16 %v546
        %v1839 = vunpack.c.h.b16 %v546
        %v1840 = vunpack.c.l.b16 %v547
        %v1841 = vunpack.c.h.b16 %v547
        %v1842 = vunpack.c.l.b16 %v548
        %v1843 = vunpack.c.h.b16 %v548
        %v1844 = vunpack.c.l.b16 %v549
        %v1845 = vunpack.c.h.b16 %v549
        %v1846 = vunpack.c.l.b16 %v550
        %v1847 = vunpack.c.h.b16 %v550
        %v1848 = vunpack.c.l.b16 %v551
        %v1849 = vunpack.c.h.b16 %v551
        %v1850 = vunpack.c.l.b16 %v552
        %v1851 = vunpack.c.h.b16 %v552
        %v1852 = vunpack.c.l.b16 %v553
        %v1853 = vunpack.c.h.b16 %v553
        %v1854 = vunpack.c.l.b16 %v554
        %v1855 = vunpack.c.h.b16 %v554
        %v1856 = vunpack.c.l.b16 %v555
        %v1857 = vunpack.c.h.b16 %v555
        %v1858 = vunpack.c.l.b16 %v556
        %v1859 = vunpack.c.h.b16 %v556
        %v1860 = vunpack.c.l.b16 %v557
        %v1861 = vunpack.c.h.b16 %v557
        %v1862 = vunpack.c.l.b16 %v558
        %v1863 = vunpack.c.h.b16 %v558
        %v1864 = vunpack.c.l.b16 %v559
        %v1865 = vunpack.c.h.b16 %v559
        %v1866 = vunpack.c.l.b16 %v560
        %v1867 = vunpack.c.h.b16 %v560
        %v1868 = vunpack.c.l.b16 %v561
        %v1869 = vunpack.c.h.b16 %v561
        %v1870 = vunpack.c.l.b16 %v562
        %v1871 = vunpack.c.h.b16 %v562
        %v1872 = vunpack.c.l.b16 %v563
        %v1873 = vunpack.c.h.b16 %v563
        %v1874 = vunpack.c.l.b16 %v564
        %v1875 = vunpack.c.h.b16 %v564
        %v1876 = vunpack.c.l.b16 %v565
        %v1877 = vunpack.c.h.b16 %v565
        %v1878 = vunpack.c.l.b16 %v566
        %v1879 = vunpack.c.h.b16 %v566
        %v1880 = vunpack.c.l.b16 %v567
        %v1881 = vunpack.c.h.b16 %v567
        %v1882 = vunpack.c.l.b16 %v568
        %v1883 = vunpack.c.h.b16 %v568
        %v1884 = vunpack.c.l.b16 %v569
        %v1885 = vunpack.c.h.b16 %v569
        %v1886 = vunpack.c.l.b16 %v570
        %v1887 = vunpack.c.h.b16 %v570
        %v1888 = vunpack.c.l.b16 %v571
        %v1889 = vunpack.c.h.b16 %v571
        %v1890 = vunpack.c.l.b16 %v572
        %v1891 = vunpack.c.h.b16 %v572
        %v1892 = vunpack.c.l.b16 %v573
        %v1893 = vunpack.c.h.b16 %v573
        %v1894 = vunpack.c.l.b16 %v574
        %v1895 = vunpack.c.h.b16 %v574
        %v1896 = vunpack.c.l.b16 %v575
        %v1897 = vunpack.c.h.b16 %v575
        %v1898 = vunpack.c.l.b16 %v576
        %v1899 = vunpack.c.h.b16 %v576
        %v1900 = vunpack.c.l.b16 %v577
        %v1901 = vunpack.c.h.b16 %v577
        %v1902 = vunpack.c.l.b16 %v578
        %v1903 = vunpack.c.h.b16 %v578
        %v1904 = vunpack.c.l.b16 %v579
        %v1905 = vunpack.c.h.b16 %v579
        %v1906 = vunpack.c.l.b16 %v580
        %v1907 = vunpack.c.h.b16 %v580
        %v1908 = vunpack.c.l.b16 %v581
        %v1909 = vunpack.c.h.b16 %v581
        %v1910 = vunpack.c.l.b16 %v582
        %v1911 = vunpack.c.h.b16 %v582
        %v1912 = vunpack.c.l.b16 %v583
        %v1913 = vunpack.c.h.b16 %v583
        %v1914 = vunpack.c.l.b16 %v584
        %v1915 = vunpack.c.h.b16 %v584
        %v1916 = vunpack.c.l.b16 %v585
        %v1917 = vunpack.c.h.b16 %v585
        %v1918 = vunpack.c.l.b16 %v586
        %v1919 = vunpack.c.h.b16 %v586
        %v1920 = vunpack.c.l.b16 %v587
        %v1921 = vunpack.c.h.b16 %v587
        %v1922 = vunpack.c.l.b16 %v588
        %v1923 = vunpack.c.h.b16 %v588
        %v1924 = vunpack.c.l.b16 %v589
        %v1925 = vunpack.c.h.b16 %v589
        %v1926 = vunpack.c.l.b16 %v590
        %v1927 = vunpack.c.h.b16 %v590
        %v1928 = vunpack.c.l.b16 %v591
        %v1929 = vunpack.c.h.b16 %v591
        %v1930 = vunpack.c.l.b16 %v592
        %v1931 = vunpack.c.h.b16 %v592
        %v1932 = vunpack.c.l.b16 %v593
        %v1933 = vunpack.c.h.b16 %v593
        %v1934 = vunpack.c.l.b16 %v594
        %v1935 = vunpack.c.h.b16 %v594
        %v1936 = vunpack.c.l.b16 %v595
        %v1937 = vunpack.c.h.b16 %v595
        %v1938 = vunpack.c.l.b16 %v596
        %v1939 = vunpack.c.h.b16 %v596
        %v1940 = vunpack.c.l.b16 %v597
        %v1941 = vunpack.c.h.b16 %v597
        %v1942 = vunpack.c.l.b16 %v598
        %v1943 = vunpack.c.h.b16 %v598
        %v1944 = vunpack.c.l.b16 %v599
        %v1945 = vunpack.c.h.b16 %v599
        %v1946 = vunpack.c.l.b16 %v600
        %v1947 = vunpack.c.h.b16 %v600
        %v1948 = vunpack.c.l.b16 %v601
        %v1949 = vunpack.c.h.b16 %v601
        %v1950 = vunpack.c.l.b16 %v602
        %v1951 = vunpack.c.h.b16 %v602
        %v1952 = vunpack.c.l.b16 %v603
        %v1953 = vunpack.c.h.b16 %v603
        %v1954 = vunpack.c.l.b16 %v604
        %v1955 = vunpack.c.h.b16 %v604
        %v1956 = vunpack.c.l.b16 %v605
        %v1957 = vunpack.c.h.b16 %v605
        %v1958 = vunpack.c.l.b16 %v606
        %v1959 = vunpack.c.h.b16 %v606
        %v1960 = vunpack.c.l.b16 %v607
        %v1961 = vunpack.c.h.b16 %v607
        %v1962 = vunpack.c.l.b16 %v608
        %v1963 = vunpack.c.h.b16 %v608
        %v1964 = vunpack.c.l.b16 %v609
        %v1965 = vunpack.c.h.b16 %v609
        %v1966 = vunpack.c.l.b16 %v610
        %v1967 = vunpack.c.h.b16 %v610
        %v1968 = vunpack.c.l.b16 %v611
        %v1969 = vunpack.c.h.b16 %v611
        %v1970 = vunpack.c.l.b16 %v612
        %v1971 = vunpack.c.h.b16 %v612
        %v1972 = vunpack.c.l.b16 %v613
        %v1973 = vunpack.c.h.b16 %v613
        %v1974 = vunpack.c.l.b16 %v614
        %v1975 = vunpack.c.h.b16 %v614
        %v1976 = vunpack.c.l.b16 %v615
        %v1977 = vunpack.c.h.b16 %v615
        %v1978 = vunpack.c.l.b16 %v616
        %v1979 = vunpack.c.h.b16 %v616
        %v1980 = vunpack.c.l.b16 %v617
        %v1981 = vunpack.c.h.b16 %v617
        %v1982 = vunpack.c.l.b16 %v618
        %v1983 = vunpack.c.h.b16 %v618
        %v1984 = vunpack.c.l.b16 %v619
        %v1985 = vunpack.c.h.b16 %v619
        %v1986 = vunpack.c.l.b16 %v620
        %v1987 = vunpack.c.h.b16 %v620
        %v1988 = vunpack.c.l.b16 %v621
        %v1989 = vunpack.c.h.b16 %v621
        %v1990 = vunpack.c.l.b16 %v622
        %v1991 = vunpack.c.h.b16 %v622
        %v1992 = vunpack.c.l.b16 %v623
        %v1993 = vunpack.c.h.b16 %v623
        %v1994 = vunpack.c.l.b16 %v624
        %v1995 = vunpack.c.h.b16 %v624
        %v1996 = vunpack.c.l.b16 %v625
        %v1997 = vunpack.c.h.b16 %v625
        %v1998 = vunpack.c.l.b16 %v626
        %v1999 = vunpack.c.h.b16 %v626
        %v2000 = vunpack.c.l.b16 %v627
        %v2001 = vunpack.c.h.b16 %v627
        %v2002 = vunpack.c.l.b16 %v628
        %v2003 = vunpack.c.h.b16 %v628
        %v2004 = vunpack.c.l.b16 %v629
        %v2005 = vunpack.c.h.b16 %v629
        %v2006 = vunpack.c.l.b16 %v630
        %v2007 = vunpack.c.h.b16 %v630
        %v2008 = vunpack.c.l.b16 %v631
        %v2009 = vunpack.c.h.b16 %v631
        %v2010 = vunpack.c.l.b16 %v632
        %v2011 = vunpack.c.h.b16 %v632
        %v2012 = vunpack.c.l.b16 %v633
        %v2013 = vunpack.c.h.b16 %v633
        %v2014 = vunpack.c.l.b16 %v634
        %v2015 = vunpack.c.h.b16 %v634
        %v2016 = vunpack.c.l.b16 %v635
        %v2017 = vunpack.c.h.b16 %v635
        %v2018 = vunpack.c.l.b16 %v636
        %v2019 = vunpack.c.h.b16 %v636
        %v2020 = vunpack.c.l.b16 %v637
        %v2021 = vunpack.c.h.b16 %v637
        %v2022 = vunpack.c.l.b16 %v638
        %v2023 = vunpack.c.h.b16 %v638
        %v2024 = vunpack.c.l.b16 %v639
        %v2025 = vunpack.c.h.b16 %v639
        %v2026 = vunpack.c.l.b16 %v640
        %v2027 = vunpack.c.h.b16 %v640
        %v2028 = vunpack.c.l.b16 %v641
        %v2029 = vunpack.c.h.b16 %v641
        %v2030 = vunpack.c.l.b16 %v642
        %v2031 = vunpack.c.h.b16 %v642
        %v2032 = vunpack.c.l.b16 %v643
        %v2033 = vunpack.c.h.b16 %v643
        %v2034 = vunpack.c.l.b16 %v644
        %v2035 = vunpack.c.h.b16 %v644
        %v2036 = vunpack.c.l.b16 %v645
        %v2037 = vunpack.c.h.b16 %v645
        %v2038 = vunpack.c.l.b16 %v646
        %v2039 = vunpack.c.h.b16 %v646
        %v2040 = vunpack.c.l.b16 %v647
        %v2041 = vunpack.c.h.b16 %v647
        %v2042 = vunpack.c.l.b16 %v648
        %v2043 = vunpack.c.h.b16 %v648
        %v2044 = vunpack.c.l.b16 %v649
        %v2045 = vunpack.c.h.b16 %v649
        %v2046 = vunpack.c.l.b16 %v650
        %v2047 = vunpack.c.h.b16 %v650
        %v2048 = vunpack.c.l.b16 %v651
        %v2049 = vunpack.c.h.b16 %v651
        %v2050 = vunpack.c.l.b16 %v652
        %v2051 = vunpack.c.h.b16 %v652
        %v2052 = vunpack.c.l.b16 %v653
        %v2053 = vunpack.c.h.b16 %v653
        %v2054 = vunpack.c.l.b16 %v654
        %v2055 = vunpack.c.h.b16 %v654
        %v2056 = vunpack.c.l.b16 %v655
        %v2057 = vunpack.c.h.b16 %v655
        %v2058 = vunpack.c.l.b16 %v656
        %v2059 = vunpack.c.h.b16 %v656
        %v2060 = vunpack.c.l.b16 %v657
        %v2061 = vunpack.c.h.b16 %v657
        %v2062 = vunpack.c.l.b16 %v658
        %v2063 = vunpack.c.h.b16 %v658
        %v2064 = vunpack.c.l.b16 %v659
        %v2065 = vunpack.c.h.b16 %v659
        %v2066 = vunpack.c.l.b16 %v660
        %v2067 = vunpack.c.h.b16 %v660
        %v2068 = vunpack.c.l.b16 %v661
        %v2069 = vunpack.c.h.b16 %v661
        %v2070 = vunpack.c.l.b16 %v662
        %v2071 = vunpack.c.h.b16 %v662
        %v2072 = vunpack.c.l.b16 %v663
        %v2073 = vunpack.c.h.b16 %v663
        %v2074 = vunpack.c.l.b16 %v664
        %v2075 = vunpack.c.h.b16 %v664
        %v2076 = vunpack.c.l.b16 %v665
        %v2077 = vunpack.c.h.b16 %v665
        %v2078 = vunpack.c.l.b16 %v666
        %v2079 = vunpack.c.h.b16 %v666
        %v2080 = vunpack.c.l.b16 %v667
        %v2081 = vunpack.c.h.b16 %v667
        %v2082 = vunpack.c.l.b16 %v668
        %v2083 = vunpack.c.h.b16 %v668
        %v2084 = vunpack.c.l.b16 %v669
        %v2085 = vunpack.c.h.b16 %v669
        %v2086 = vunpack.c.l.b16 %v670
        %v2087 = vunpack.c.h.b16 %v670
        %v2088 = vunpack.c.l.b16 %v671
        %v2089 = vunpack.c.h.b16 %v671
        %v2090 = vunpack.c.l.b16 %v672
        %v2091 = vunpack.c.h.b16 %v672
        %v2092 = vunpack.c.l.b16 %v673
        %v2093 = vunpack.c.h.b16 %v673
        %v2094 = vunpack.c.l.b16 %v674
        %v2095 = vunpack.c.h.b16 %v674
        %v2096 = vunpack.c.l.b16 %v675
        %v2097 = vunpack.c.h.b16 %v675
        %v2098 = vunpack.c.l.b16 %v676
        %v2099 = vunpack.c.h.b16 %v676
        %v2100 = vunpack.c.l.b16 %v677
        %v2101 = vunpack.c.h.b16 %v677
        %v2102 = vunpack.c.l.b16 %v678
        %v2103 = vunpack.c.h.b16 %v678
        %v2104 = vunpack.c.l.b16 %v679
        %v2105 = vunpack.c.h.b16 %v679
        %v2106 = vunpack.c.l.b16 %v680
        %v2107 = vunpack.c.h.b16 %v680
        %v2108 = vunpack.c.l.b16 %v681
        %v2109 = vunpack.c.h.b16 %v681
        %v2110 = vunpack.c.l.b16 %v682
        %v2111 = vunpack.c.h.b16 %v682
        %v2112 = vunpack.c.l.b16 %v683
        %v2113 = vunpack.c.h.b16 %v683
        %v2114 = vunpack.c.l.b16 %v684
        %v2115 = vunpack.c.h.b16 %v684
        %v2116 = vunpack.c.l.b16 %v685
        %v2117 = vunpack.c.h.b16 %v685
        %v2118 = vunpack.c.l.b16 %v686
        %v2119 = vunpack.c.h.b16 %v686
        %v2120 = vunpack.c.l.b16 %v687
        %v2121 = vunpack.c.h.b16 %v687
        %v2122 = vunpack.c.l.b16 %v688
        %v2123 = vunpack.c.h.b16 %v688
        %v2124 = vunpack.c.l.b16 %v689
        %v2125 = vunpack.c.h.b16 %v689
        %v2126 = vunpack.c.l.b16 %v690
        %v2127 = vunpack.c.h.b16 %v690
        %v2128 = vunpack.c.l.b16 %v691
        %v2129 = vunpack.c.h.b16 %v691
        %v2130 = vunpack.c.l.b16 %v692
        %v2131 = vunpack.c.h.b16 %v692
        %v2132 = vunpack.c.l.b16 %v693
        %v2133 = vunpack.c.h.b16 %v693
        %v2134 = vunpack.c.l.b16 %v694
        %v2135 = vunpack.c.h.b16 %v694
        %v2136 = vunpack.c.l.b16 %v695
        %v2137 = vunpack.c.h.b16 %v695
        %v2138 = vunpack.c.l.b16 %v696
        %v2139 = vunpack.c.h.b16 %v696
        %v2140 = vunpack.c.l.b16 %v697
        %v2141 = vunpack.c.h.b16 %v697
        %v2142 = vunpack.c.l.b16 %v698
        %v2143 = vunpack.c.h.b16 %v698
        %v2144 = vunpack.c.l.b16 %v699
        %v2145 = vunpack.c.h.b16 %v699
        %v2146 = vunpack.c.l.b16 %v700
        %v2147 = vunpack.c.h.b16 %v700
        %v2148 = vunpack.c.l.b16 %v701
        %v2149 = vunpack.c.h.b16 %v701
        %v2150 = vunpack.c.l.b16 %v702
        %v2151 = vunpack.c.h.b16 %v702
        %v2152 = vunpack.c.l.b16 %v703
        %v2153 = vunpack.c.h.b16 %v703
        %v2154 = vunpack.c.l.b16 %v704
        %v2155 = vunpack.c.h.b16 %v704
        %v2156 = vunpack.c.l.b16 %v705
        %v2157 = vunpack.c.h.b16 %v705
        %v2158 = vunpack.c.l.b16 %v706
        %v2159 = vunpack.c.h.b16 %v706
        %v2160 = vunpack.c.l.b16 %v707
        %v2161 = vunpack.c.h.b16 %v707
        %v2162 = vunpack.c.l.b16 %v708
        %v2163 = vunpack.c.h.b16 %v708
        %v2164 = vunpack.c.l.b16 %v709
        %v2165 = vunpack.c.h.b16 %v709
        %v2166 = vunpack.c.l.b16 %v710
        %v2167 = vunpack.c.h.b16 %v710
        %v2168 = vunpack.c.l.b16 %v711
        %v2169 = vunpack.c.h.b16 %v711
        %v2170 = vunpack.c.l.b16 %v712
        %v2171 = vunpack.c.h.b16 %v712
        %v2172 = vunpack.c.l.b16 %v713
        %v2173 = vunpack.c.h.b16 %v713
        %v2174 = vunpack.c.l.b16 %v714
        %v2175 = vunpack.c.h.b16 %v714
        %v2176 = vunpack.c.l.b16 %v715
        %v2177 = vunpack.c.h.b16 %v715
        %v2178 = vunpack.c.l.b16 %v716
        %v2179 = vunpack.c.h.b16 %v716
        %v2180 = vunpack.c.l.b16 %v717
        %v2181 = vunpack.c.h.b16 %v717
        %v2182 = vunpack.c.l.b16 %v718
        %v2183 = vunpack.c.h.b16 %v718
        %v2184 = vunpack.c.l.b16 %v719
        %v2185 = vunpack.c.h.b16 %v719
        %v2186 = vunpack.c.l.b16 %v720
        %v2187 = vunpack.c.h.b16 %v720
        %v2188 = vunpack.c.l.b16 %v721
        %v2189 = vunpack.c.h.b16 %v721
        %v2190 = vunpack.c.l.b16 %v722
        %v2191 = vunpack.c.h.b16 %v722
        %v2192 = vunpack.c.l.b16 %v723
        %v2193 = vunpack.c.h.b16 %v723
        %v2194 = vunpack.c.l.b16 %v724
        %v2195 = vunpack.c.h.b16 %v724
        %v2196 = vunpack.c.l.b16 %v725
        %v2197 = vunpack.c.h.b16 %v725
        %v2198 = vunpack.c.l.b16 %v726
        %v2199 = vunpack.c.h.b16 %v726
        %v2200 = vunpack.c.l.b16 %v727
        %v2201 = vunpack.c.h.b16 %v727
        %v2202 = vunpack.c.l.b16 %v728
        %v2203 = vunpack.c.h.b16 %v728
        %v2204 = vunpack.c.l.b16 %v729
        %v2205 = vunpack.c.h.b16 %v729
        %v2206 = vunpack.c.l.b16 %v730
        %v2207 = vunpack.c.h.b16 %v730
        %v2208 = vunpack.c.l.b16 %v731
        %v2209 = vunpack.c.h.b16 %v731
        %v2210 = vunpack.c.l.b16 %v732
        %v2211 = vunpack.c.h.b16 %v732
        %v2212 = vunpack.c.l.b16 %v733
        %v2213 = vunpack.c.h.b16 %v733
        %v2214 = vunpack.c.l.b16 %v734
        %v2215 = vunpack.c.h.b16 %v734
        %v2216 = vunpack.c.l.b16 %v735
        %v2217 = vunpack.c.h.b16 %v735
        %v2218 = vunpack.c.l.b16 %v736
        %v2219 = vunpack.c.h.b16 %v736
        %v2220 = vunpack.c.l.b16 %v737
        %v2221 = vunpack.c.h.b16 %v737
        %v2222 = vunpack.c.l.b16 %v738
        %v2223 = vunpack.c.h.b16 %v738
        %v2224 = vunpack.c.l.b16 %v739
        %v2225 = vunpack.c.h.b16 %v739
        %v2226 = vunpack.c.l.b16 %v740
        %v2227 = vunpack.c.h.b16 %v740
        %v2228 = vunpack.c.l.b16 %v741
        %v2229 = vunpack.c.h.b16 %v741
        %v2230 = vunpack.c.l.b16 %v742
        %v2231 = vunpack.c.h.b16 %v742
        %v2232 = vunpack.c.l.b16 %v743
        %v2233 = vunpack.c.h.b16 %v743
        %v2234 = vunpack.c.l.b16 %v744
        %v2235 = vunpack.c.h.b16 %v744
        %v2236 = vunpack.c.l.b16 %v745
        %v2237 = vunpack.c.h.b16 %v745
        %v2238 = vunpack.c.l.b16 %v746
        %v2239 = vunpack.c.h.b16 %v746
        %v2240 = vunpack.c.l.b16 %v747
        %v2241 = vunpack.c.h.b16 %v747
        %v2242 = vunpack.c.l.b16 %v748
        %v2243 = vunpack.c.h.b16 %v748
        %v2244 = vunpack.c.l.b16 %v749
        %v2245 = vunpack.c.h.b16 %v749
        %v2246 = vunpack.c.l.b16 %v750
        %v2247 = vunpack.c.h.b16 %v750
        %v2248 = vunpack.c.l.b16 %v751
        %v2249 = vunpack.c.h.b16 %v751
        %v2250 = vunpack.c.l.b16 %v752
        %v2251 = vunpack.c.h.b16 %v752
        %v2252 = vunpack.c.l.b16 %v753
        %v2253 = vunpack.c.h.b16 %v753
        %v2254 = vunpack.c.l.b16 %v754
        %v2255 = vunpack.c.h.b16 %v754
        %v2256 = vunpack.c.l.b16 %v755
        %v2257 = vunpack.c.h.b16 %v755
        %v2258 = vunpack.c.l.b16 %v756
        %v2259 = vunpack.c.h.b16 %v756
        %v2260 = vunpack.c.l.b16 %v757
        %v2261 = vunpack.c.h.b16 %v757
        %v2262 = vunpack.c.l.b16 %v758
        %v2263 = vunpack.c.h.b16 %v758
        %v2264 = vunpack.c.l.b16 %v759
        %v2265 = vunpack.c.h.b16 %v759
        %v2266 = vunpack.c.l.b16 %v760
        %v2267 = vunpack.c.h.b16 %v760
        %v2268 = vunpack.c.l.b16 %v761
        %v2269 = vunpack.c.h.b16 %v761
        %v2270 = vunpack.c.l.b16 %v762
        %v2271 = vunpack.c.h.b16 %v762
        %v2272 = vunpack.c.l.b16 %v763
        %v2273 = vunpack.c.h.b16 %v763
        %v2274 = vunpack.c.l.b16 %v764
        %v2275 = vunpack.c.h.b16 %v764
        %v2276 = vunpack.c.l.b16 %v765
        %v2277 = vunpack.c.h.b16 %v765
        %v2278 = vunpack.c.l.b16 %v766
        %v2279 = vunpack.c.h.b16 %v766
        %v2280 = vunpack.c.l.b16 %v767
        %v2281 = vunpack.c.h.b16 %v767
        %v2282 = vunpack.c.l.b16 %v768
        %v2283 = vunpack.c.h.b16 %v768
        %v2284 = vunpack.c.l.b16 %v769
        %v2285 = vunpack.c.h.b16 %v769
        %v2286 = vunpack.c.l.b16 %v770
        %v2287 = vunpack.c.h.b16 %v770
        %v2288 = vunpack.c.l.b16 %v771
        %v2289 = vunpack.c.h.b16 %v771
        %v2290 = vunpack.c.l.b16 %v772
        %v2291 = vunpack.c.h.b16 %v772
        %v2292 = vunpack.c.l.b16 %v773
        %v2293 = vunpack.c.h.b16 %v773
        %v2294 = vunpack.c.l.b16 %v774
        %v2295 = vunpack.c.h.b16 %v774
        %v2296 = vunpack.c.l.b16 %v775
        %v2297 = vunpack.c.h.b16 %v775
        %v2298 = vunpack.c.l.b16 %v776
        %v2299 = vunpack.c.h.b16 %v776
        %v2300 = vunpack.c.l.b16 %v777
        %v2301 = vunpack.c.h.b16 %v777
        %v2302 = vunpack.c.l.b16 %v778
        %v2303 = vunpack.c.h.b16 %v778
        %v2304 = vunpack.c.l.b16 %v779
        %v2305 = vunpack.c.h.b16 %v779
        %v2306 = vunpack.c.l.b16 %v780
        %v2307 = vunpack.c.h.b16 %v780
        %v2308 = vunpack.c.l.b16 %v781
        %v2309 = vunpack.c.h.b16 %v781
        %v2310 = vunpack.c.l.b16 %v782
        %v2311 = vunpack.c.h.b16 %v782
        %v2312 = vunpack.c.l.b16 %v783
        %v2313 = vunpack.c.h.b16 %v783
        %v2314 = vunpack.c.l.b16 %v784
        %v2315 = vunpack.c.h.b16 %v784
        %v2316 = vunpack.c.l.b16 %v785
        %v2317 = vunpack.c.h.b16 %v785
        %v2318 = vunpack.c.l.b16 %v786
        %v2319 = vunpack.c.h.b16 %v786
        %v2320 = vunpack.c.l.b16 %v787
        %v2321 = vunpack.c.h.b16 %v787
        %v2322 = vunpack.c.l.b16 %v788
        %v2323 = vunpack.c.h.b16 %v788
        %v2324 = vunpack.c.l.b16 %v789
        %v2325 = vunpack.c.h.b16 %v789
        %v2326 = vunpack.c.l.b16 %v790
        %v2327 = vunpack.c.h.b16 %v790
        %v2328 = vunpack.c.l.b16 %v791
        %v2329 = vunpack.c.h.b16 %v791
        %v2330 = vunpack.c.l.b16 %v792
        %v2331 = vunpack.c.h.b16 %v792
        %v2332 = vunpack.c.l.b16 %v793
        %v2333 = vunpack.c.h.b16 %v793
        %v2334 = vunpack.c.l.b16 %v794
        %v2335 = vunpack.c.h.b16 %v794
        %v2336 = vunpack.c.l.b16 %v795
        %v2337 = vunpack.c.h.b16 %v795
        %v2338 = vunpack.c.l.b16 %v796
        %v2339 = vunpack.c.h.b16 %v796
        %v2340 = vunpack.c.l.b16 %v797
        %v2341 = vunpack.c.h.b16 %v797
        %v2342 = vunpack.c.l.b16 %v798
        %v2343 = vunpack.c.h.b16 %v798
        %v2344 = vunpack.c.l.b16 %v799
        %v2345 = vunpack.c.h.b16 %v799
        %v2346 = vunpack.c.l.b16 %v800
        %v2347 = vunpack.c.h.b16 %v800
        %v2348 = vunpack.c.l.b16 %v801
        %v2349 = vunpack.c.h.b16 %v801
        %v2350 = vunpack.c.l.b16 %v802
        %v2351 = vunpack.c.h.b16 %v802
        %v2352 = vunpack.c.l.b16 %v803
        %v2353 = vunpack.c.h.b16 %v803
        %v2354 = vunpack.c.l.b16 %v804
        %v2355 = vunpack.c.h.b16 %v804
        %v2356 = vunpack.c.l.b16 %v805
        %v2357 = vunpack.c.h.b16 %v805
        %v2358 = vunpack.c.l.b16 %v806
        %v2359 = vunpack.c.h.b16 %v806
        %v2360 = vunpack.c.l.b16 %v807
        %v2361 = vunpack.c.h.b16 %v807
        %v2362 = vunpack.c.l.b16 %v808
        %v2363 = vunpack.c.h.b16 %v808
        %v2364 = vunpack.c.l.b16 %v809
        %v2365 = vunpack.c.h.b16 %v809
        %v2366 = vunpack.c.l.b16 %v810
        %v2367 = vunpack.c.h.b16 %v810
        %v2368 = vunpack.c.l.b16 %v811
        %v2369 = vunpack.c.h.b16 %v811
        %v2370 = vunpack.c.l.b16 %v812
        %v2371 = vunpack.c.h.b16 %v812
        %v2372 = vunpack.c.l.b16 %v813
        %v2373 = vunpack.c.h.b16 %v813
        %v2374 = vunpack.c.l.b16 %v814
        %v2375 = vunpack.c.h.b16 %v814
        %v2376 = vunpack.c.l.b16 %v815
        %v2377 = vunpack.c.h.b16 %v815
        %v2378 = vunpack.c.l.b16 %v816
        %v2379 = vunpack.c.h.b16 %v816
        %v2380 = vunpack.c.l.b16 %v817
        %v2381 = vunpack.c.h.b16 %v817
        %v2382 = vunpack.c.l.b16 %v818
        %v2383 = vunpack.c.h.b16 %v818
        %v2384 = vunpack.c.l.b16 %v819
        %v2385 = vunpack.c.h.b16 %v819
        %v2386 = vunpack.c.l.b16 %v820
        %v2387 = vunpack.c.h.b16 %v820
        %v2388 = vunpack.c.l.b16 %v821
        %v2389 = vunpack.c.h.b16 %v821
        %v2390 = vunpack.c.l.b16 %v822
        %v2391 = vunpack.c.h.b16 %v822
        %v2392 = vunpack.c.l.b16 %v823
        %v2393 = vunpack.c.h.b16 %v823
        %v2394 = vunpack.c.l.b16 %v824
        %v2395 = vunpack.c.h.b16 %v824
        %v2396 = vunpack.c.l.b16 %v825
        %v2397 = vunpack.c.h.b16 %v825
        %v2398 = vunpack.c.l.b16 %v826
        %v2399 = vunpack.c.h.b16 %v826
        %v2400 = vunpack.c.l.b16 %v827
        %v2401 = vunpack.c.h.b16 %v827
        %v2402 = vunpack.c.l.b16 %v828
        %v2403 = vunpack.c.h.b16 %v828
        %v2404 = vunpack.c.l.b16 %v829
        %v2405 = vunpack.c.h.b16 %v829
        %v2406 = vpack.c.b16 %v1390, %v1382
        %v2407 = vpack.c.b16 %v1391, %v1383
        %v2408 = vpack.c.b16 %v1392, %v1384
        %v2409 = vpack.c.b16 %v1393, %v1385
        %v2410 = vpack.c.b16 %v1394, %v1386
        %v2411 = vpack.c.b16 %v1395, %v1387
        %v2412 = vpack.c.b16 %v1396, %v1388
        %v2413 = vpack.c.b16 %v1397, %v1389
        %v2414 = vpack.c.b16 %v1406, %v1398
        %v2415 = vpack.c.b16 %v1407, %v1399
        %v2416 = vpack.c.b16 %v1408, %v1400
        %v2417 = vpack.c.b16 %v1409, %v1401
        %v2418 = vpack.c.b16 %v1410, %v1402
        %v2419 = vpack.c.b16 %v1411, %v1403
        %v2420 = vpack.c.b16 %v1412, %v1404
        %v2421 = vpack.c.b16 %v1413, %v1405
        %v2422 = vpack.c.b16 %v1422, %v1414
        %v2423 = vpack.c.b16 %v1423, %v1415
        %v2424 = vpack.c.b16 %v1424, %v1416
        %v2425 = vpack.c.b16 %v1425, %v1417
        %v2426 = vpack.c.b16 %v1426, %v1418
        %v2427 = vpack.c.b16 %v1427, %v1419
        %v2428 = vpack.c.b16 %v1428, %v1420
        %v2429 = vpack.c.b16 %v1429, %v1421
        %v2430 = vpack.c.b16 %v1438, %v1430
        %v2431 = vpack.c.b16 %v1439, %v1431
        %v2432 = vpack.c.b16 %v1440, %v1432
        %v2433 = vpack.c.b16 %v1441, %v1433
        %v2434 = vpack.c.b16 %v1442, %v1434
        %v2435 = vpack.c.b16 %v1443, %v1435
        %v2436 = vpack.c.b16 %v1444, %v1436
        %v2437 = vpack.c.b16 %v1445, %v1437
        %v2438 = vpack.c.b16 %v1454, %v1446
        %v2439 = vpack.c.b16 %v1455, %v1447
        %v2440 = vpack.c.b16 %v1456, %v1448
        %v2441 = vpack.c.b16 %v1457, %v1449
        %v2442 = vpack.c.b16 %v1458, %v1450
        %v2443 = vpack.c.b16 %v1459, %v1451
        %v2444 = vpack.c.b16 %v1460, %v1452
        %v2445 = vpack.c.b16 %v1461, %v1453
        %v2446 = vpack.c.b16 %v1470, %v1462
        %v2447 = vpack.c.b16 %v1471, %v1463
        %v2448 = vpack.c.b16 %v1472, %v1464
        %v2449 = vpack.c.b16 %v1473, %v1465
        %v2450 = vpack.c.b16 %v1474, %v1466
        %v2451 = vpack.c.b16 %v1475, %v1467
        %v2452 = vpack.c.b16 %v1476, %v1468
        %v2453 = vpack.c.b16 %v1477, %v1469
        %v2454 = vpack.c.b16 %v1486, %v1478
        %v2455 = vpack.c.b16 %v1487, %v1479
        %v2456 = vpack.c.b16 %v1488, %v1480
        %v2457 = vpack.c.b16 %v1489, %v1481
        %v2458 = vpack.c.b16 %v1490, %v1482
        %v2459 = vpack.c.b16 %v1491, %v1483
        %v2460 = vpack.c.b16 %v1492, %v1484
        %v2461 = vpack.c.b16 %v1493, %v1485
        %v2462 = vpack.c.b16 %v1502, %v1494
        %v2463 = vpack.c.b16 %v1503, %v1495
        %v2464 = vpack.c.b16 %v1504, %v1496
        %v2465 = vpack.c.b16 %v1505, %v1497
        %v2466 = vpack.c.b16 %v1506, %v1498
        %v2467 = vpack.c.b16 %v1507, %v1499
        %v2468 = vpack.c.b16 %v1508, %v1500
        %v2469 = vpack.c.b16 %v1509, %v1501
        %v2470 = vpack.c.b16 %v1518, %v1510
        %v2471 = vpack.c.b16 %v1519, %v1511
        %v2472 = vpack.c.b16 %v1520, %v1512
        %v2473 = vpack.c.b16 %v1521, %v1513
        %v2474 = vpack.c.b16 %v1522, %v1514
        %v2475 = vpack.c.b16 %v1523, %v1515
        %v2476 = vpack.c.b16 %v1524, %v1516
        %v2477 = vpack.c.b16 %v1525, %v1517
        %v2478 = vpack.c.b16 %v1534, %v1526
        %v2479 = vpack.c.b16 %v1535, %v1527
        %v2480 = vpack.c.b16 %v1536, %v1528
        %v2481 = vpack.c.b16 %v1537, %v1529
        %v2482 = vpack.c.b16 %v1538, %v1530
        %v2483 = vpack.c.b16 %v1539, %v1531
        %v2484 = vpack.c.b16 %v1540, %v1532
        %v2485 = vpack.c.b16 %v1541, %v1533
        %v2486 = vpack.c.b16 %v1550, %v1542
        %v2487 = vpack.c.b16 %v1551, %v1543
        %v2488 = vpack.c.b16 %v1552, %v1544
        %v2489 = vpack.c.b16 %v1553, %v1545
        %v2490 = vpack.c.b16 %v1554, %v1546
        %v2491 = vpack.c.b16 %v1555, %v1547
        %v2492 = vpack.c.b16 %v1556, %v1548
        %v2493 = vpack.c.b16 %v1557, %v1549
        %v2494 = vpack.c.b16 %v1566, %v1558
        %v2495 = vpack.c.b16 %v1567, %v1559
        %v2496 = vpack.c.b16 %v1568, %v1560
        %v2497 = vpack.c.b16 %v1569, %v1561
        %v2498 = vpack.c.b16 %v1570, %v1562
        %v2499 = vpack.c.b16 %v1571, %v1563
        %v2500 = vpack.c.b16 %v1572, %v1564
        %v2501 = vpack.c.b16 %v1573, %v1565
        %v2502 = vpack.c.b16 %v1582, %v1574
        %v2503 = vpack.c.b16 %v1583, %v1575
        %v2504 = vpack.c.b16 %v1584, %v1576
        %v2505 = vpack.c.b16 %v1585, %v1577
        %v2506 = vpack.c.b16 %v1586, %v1578
        %v2507 = vpack.c.b16 %v1587, %v1579
        %v2508 = vpack.c.b16 %v1588, %v1580
        %v2509 = vpack.c.b16 %v1589, %v1581
        %v2510 = vpack.c.b16 %v1598, %v1590
        %v2511 = vpack.c.b16 %v1599, %v1591
        %v2512 = vpack.c.b16 %v1600, %v1592
        %v2513 = vpack.c.b16 %v1601, %v1593
        %v2514 = vpack.c.b16 %v1602, %v1594
        %v2515 = vpack.c.b16 %v1603, %v1595
        %v2516 = vpack.c.b16 %v1604, %v1596
        %v2517 = vpack.c.b16 %v1605, %v1597
        %v2518 = vpack.c.b16 %v1614, %v1606
        %v2519 = vpack.c.b16 %v1615, %v1607
        %v2520 = vpack.c.b16 %v1616, %v1608
        %v2521 = vpack.c.b16 %v1617, %v1609
        %v2522 = vpack.c.b16 %v1618, %v1610
        %v2523 = vpack.c.b16 %v1619, %v1611
        %v2524 = vpack.c.b16 %v1620, %v1612
        %v2525 = vpack.c.b16 %v1621, %v1613
        %v2526 = vpack.c.b16 %v1630, %v1622
        %v2527 = vpack.c.b16 %v1631, %v1623
        %v2528 = vpack.c.b16 %v1632, %v1624
        %v2529 = vpack.c.b16 %v1633, %v1625
        %v2530 = vpack.c.b16 %v1634, %v1626
        %v2531 = vpack.c.b16 %v1635, %v1627
        %v2532 = vpack.c.b16 %v1636, %v1628
        %v2533 = vpack.c.b16 %v1637, %v1629
        %v2534 = vpack.c.b16 %v1646, %v1638
        %v2535 = vpack.c.b16 %v1647, %v1639
        %v2536 = vpack.c.b16 %v1648, %v1640
        %v2537 = vpack.c.b16 %v1649, %v1641
        %v2538 = vpack.c.b16 %v1650, %v1642
        %v2539 = vpack.c.b16 %v1651, %v1643
        %v2540 = vpack.c.b16 %v1652, %v1644
        %v2541 = vpack.c.b16 %v1653, %v1645
        %v2542 = vpack.c.b16 %v1662, %v1654
        %v2543 = vpack.c.b16 %v1663, %v1655
        %v2544 = vpack.c.b16 %v1664, %v1656
        %v2545 = vpack.c.b16 %v1665, %v1657
        %v2546 = vpack.c.b16 %v1666, %v1658
        %v2547 = vpack.c.b16 %v1667, %v1659
        %v2548 = vpack.c.b16 %v1668, %v1660
        %v2549 = vpack.c.b16 %v1669, %v1661
        %v2550 = vpack.c.b16 %v1678, %v1670
        %v2551 = vpack.c.b16 %v1679, %v1671
        %v2552 = vpack.c.b16 %v1680, %v1672
        %v2553 = vpack.c.b16 %v1681, %v1673
        %v2554 = vpack.c.b16 %v1682, %v1674
        %v2555 = vpack.c.b16 %v1683, %v1675
        %v2556 = vpack.c.b16 %v1684, %v1676
        %v2557 = vpack.c.b16 %v1685, %v1677
        %v2558 = vpack.c.b16 %v1694, %v1686
        %v2559 = vpack.c.b16 %v1695, %v1687
        %v2560 = vpack.c.b16 %v1696, %v1688
        %v2561 = vpack.c.b16 %v1697, %v1689
        %v2562 = vpack.c.b16 %v1698, %v1690
        %v2563 = vpack.c.b16 %v1699, %v1691
        %v2564 = vpack.c.b16 %v1700, %v1692
        %v2565 = vpack.c.b16 %v1701, %v1693
        %v2566 = vpack.c.b16 %v1710, %v1702
        %v2567 = vpack.c.b16 %v1711, %v1703
        %v2568 = vpack.c.b16 %v1712, %v1704
        %v2569 = vpack.c.b16 %v1713, %v1705
        %v2570 = vpack.c.b16 %v1714, %v1706
        %v2571 = vpack.c.b16 %v1715, %v1707
        %v2572 = vpack.c.b16 %v1716, %v1708
        %v2573 = vpack.c.b16 %v1717, %v1709
        %v2574 = vpack.c.b16 %v1726, %v1718
        %v2575 = vpack.c.b16 %v1727, %v1719
        %v2576 = vpack.c.b16 %v1728, %v1720
        %v2577 = vpack.c.b16 %v1729, %v1721
        %v2578 = vpack.c.b16 %v1730, %v1722
        %v2579 = vpack.c.b16 %v1731, %v1723
        %v2580 = vpack.c.b16 %v1732, %v1724
        %v2581 = vpack.c.b16 %v1733, %v1725
        %v2582 = vpack.c.b16 %v1742, %v1734
        %v2583 = vpack.c.b16 %v1743, %v1735
        %v2584 = vpack.c.b16 %v1744, %v1736
        %v2585 = vpack.c.b16 %v1745, %v1737
        %v2586 = vpack.c.b16 %v1746, %v1738
        %v2587 = vpack.c.b16 %v1747, %v1739
        %v2588 = vpack.c.b16 %v1748, %v1740
        %v2589 = vpack.c.b16 %v1749, %v1741
        %v2590 = vpack.c.b16 %v1758, %v1750
        %v2591 = vpack.c.b16 %v1759, %v1751
        %v2592 = vpack.c.b16 %v1760, %v1752
        %v2593 = vpack.c.b16 %v1761, %v1753
        %v2594 = vpack.c.b16 %v1762, %v1754
        %v2595 = vpack.c.b16 %v1763, %v1755
        %v2596 = vpack.c.b16 %v1764, %v1756
        %v2597 = vpack.c.b16 %v1765, %v1757
        %v2598 = vpack.c.b16 %v1774, %v1766
        %v2599 = vpack.c.b16 %v1775, %v1767
        %v2600 = vpack.c.b16 %v1776, %v1768
        %v2601 = vpack.c.b16 %v1777, %v1769
        %v2602 = vpack.c.b16 %v1778, %v1770
        %v2603 = vpack.c.b16 %v1779, %v1771
        %v2604 = vpack.c.b16 %v1780, %v1772
        %v2605 = vpack.c.b16 %v1781, %v1773
        %v2606 = vpack.c.b16 %v1790, %v1782
        %v2607 = vpack.c.b16 %v1791, %v1783
        %v2608 = vpack.c.b16 %v1792, %v1784
        %v2609 = vpack.c.b16 %v1793, %v1785
        %v2610 = vpack.c.b16 %v1794, %v1786
        %v2611 = vpack.c.b16 %v1795, %v1787
        %v2612 = vpack.c.b16 %v1796, %v1788
        %v2613 = vpack.c.b16 %v1797, %v1789
        %v2614 = vpack.c.b16 %v1806, %v1798
        %v2615 = vpack.c.b16 %v1807, %v1799
        %v2616 = vpack.c.b16 %v1808, %v1800
        %v2617 = vpack.c.b16 %v1809, %v1801
        %v2618 = vpack.c.b16 %v1810, %v1802
        %v2619 = vpack.c.b16 %v1811, %v1803
        %v2620 = vpack.c.b16 %v1812, %v1804
        %v2621 = vpack.c.b16 %v1813, %v1805
        %v2622 = vpack.c.b16 %v1822, %v1814
        %v2623 = vpack.c.b16 %v1823, %v1815
        %v2624 = vpack.c.b16 %v1824, %v1816
        %v2625 = vpack.c.b16 %v1825, %v1817
        %v2626 = vpack.c.b16 %v1826, %v1818
        %v2627 = vpack.c.b16 %v1827, %v1819
        %v2628 = vpack.c.b16 %v1828, %v1820
        %v2629 = vpack.c.b16 %v1829, %v1821
        %v2630 = vpack.c.b16 %v1838, %v1830
        %v2631 = vpack.c.b16 %v1839, %v1831
        %v2632 = vpack.c.b16 %v1840, %v1832
        %v2633 = vpack.c.b16 %v1841, %v1833
        %v2634 = vpack.c.b16 %v1842, %v1834
        %v2635 = vpack.c.b16 %v1843, %v1835
        %v2636 = vpack.c.b16 %v1844, %v1836
        %v2637 = vpack.c.b16 %v1845, %v1837
        %v2638 = vpack.c.b16 %v1854, %v1846
        %v2639 = vpack.c.b16 %v1855, %v1847
        %v2640 = vpack.c.b16 %v1856, %v1848
        %v2641 = vpack.c.b16 %v1857, %v1849
        %v2642 = vpack.c.b16 %v1858, %v1850
        %v2643 = vpack.c.b16 %v1859, %v1851
        %v2644 = vpack.c.b16 %v1860, %v1852
        %v2645 = vpack.c.b16 %v1861, %v1853
        %v2646 = vpack.c.b16 %v1870, %v1862
        %v2647 = vpack.c.b16 %v1871, %v1863
        %v2648 = vpack.c.b16 %v1872, %v1864
        %v2649 = vpack.c.b16 %v1873, %v1865
        %v2650 = vpack.c.b16 %v1874, %v1866
        %v2651 = vpack.c.b16 %v1875, %v1867
        %v2652 = vpack.c.b16 %v1876, %v1868
        %v2653 = vpack.c.b16 %v1877, %v1869
        %v2654 = vpack.c.b16 %v1886, %v1878
        %v2655 = vpack.c.b16 %v1887, %v1879
        %v2656 = vpack.c.b16 %v1888, %v1880
        %v2657 = vpack.c.b16 %v1889, %v1881
        %v2658 = vpack.c.b16 %v1890, %v1882
        %v2659 = vpack.c.b16 %v1891, %v1883
        %v2660 = vpack.c.b16 %v1892, %v1884
        %v2661 = vpack.c.b16 %v1893, %v1885
        %v2662 = vpack.c.b16 %v1902, %v1894
        %v2663 = vpack.c.b16 %v1903, %v1895
        %v2664 = vpack.c.b16 %v1904, %v1896
        %v2665 = vpack.c.b16 %v1905, %v1897
        %v2666 = vpack.c.b16 %v1906, %v1898
        %v2667 = vpack.c.b16 %v1907, %v1899
        %v2668 = vpack.c.b16 %v1908, %v1900
        %v2669 = vpack.c.b16 %v1909, %v1901
        %v2670 = vpack.c.b16 %v1918, %v1910
        %v2671 = vpack.c.b16 %v1919, %v1911
        %v2672 = vpack.c.b16 %v1920, %v1912
        %v2673 = vpack.c.b16 %v1921, %v1913
        %v2674 = vpack.c.b16 %v1922, %v1914
        %v2675 = vpack.c.b16 %v1923, %v1915
        %v2676 = vpack.c.b16 %v1924, %v1916
        %v2677 = vpack.c.b16 %v1925, %v1917
        %v2678 = vpack.c.b16 %v1934, %v1926
        %v2679 = vpack.c.b16 %v1935, %v1927
        %v2680 = vpack.c.b16 %v1936, %v1928
        %v2681 = vpack.c.b16 %v1937, %v1929
        %v2682 = vpack.c.b16 %v1938, %v1930
        %v2683 = vpack.c.b16 %v1939, %v1931
        %v2684 = vpack.c.b16 %v1940, %v1932
        %v2685 = vpack.c.b16 %v1941, %v1933
        %v2686 = vpack.c.b16 %v1950, %v1942
        %v2687 = vpack.c.b16 %v1951, %v1943
        %v2688 = vpack.c.b16 %v1952, %v1944
        %v2689 = vpack.c.b16 %v1953, %v1945
        %v2690 = vpack.c.b16 %v1954, %v1946
        %v2691 = vpack.c.b16 %v1955, %v1947
        %v2692 = vpack.c.b16 %v1956, %v1948
        %v2693 = vpack.c.b16 %v1957, %v1949
        %v2694 = vpack.c.b16 %v1966, %v1958
        %v2695 = vpack.c.b16 %v1967, %v1959
        %v2696 = vpack.c.b16 %v1968, %v1960
        %v2697 = vpack.c.b16 %v1969, %v1961
        %v2698 = vpack.c.b16 %v1970, %v1962
        %v2699 = vpack.c.b16 %v1971, %v1963
        %v2700 = vpack.c.b16 %v1972, %v1964
        %v2701 = vpack.c.b16 %v1973, %v1965
        %v2702 = vpack.c.b16 %v1982, %v1974
        %v2703 = vpack.c.b16 %v1983, %v1975
        %v2704 = vpack.c.b16 %v1984, %v1976
        %v2705 = vpack.c.b16 %v1985, %v1977
        %v2706 = vpack.c.b16 %v1986, %v1978
        %v2707 = vpack.c.b16 %v1987, %v1979
        %v2708 = vpack.c.b16 %v1988, %v1980
        %v2709 = vpack.c.b16 %v1989, %v1981
        %v2710 = vpack.c.b16 %v1998, %v1990
        %v2711 = vpack.c.b16 %v1999, %v1991
        %v2712 = vpack.c.b16 %v2000, %v1992
        %v2713 = vpack.c.b16 %v2001, %v1993
        %v2714 = vpack.c.b16 %v2002, %v1994
        %v2715 = vpack.c.b16 %v2003, %v1995
        %v2716 = vpack.c.b16 %v2004, %v1996
        %v2717 = vpack.c.b16 %v2005, %v1997
        %v2718 = vpack.c.b16 %v2014, %v2006
        %v2719 = vpack.c.b16 %v2015, %v2007
        %v2720 = vpack.c.b16 %v2016, %v2008
        %v2721 = vpack.c.b16 %v2017, %v2009
        %v2722 = vpack.c.b16 %v2018, %v2010
        %v2723 = vpack.c.b16 %v2019, %v2011
        %v2724 = vpack.c.b16 %v2020, %v2012
        %v2725 = vpack.c.b16 %v2021, %v2013
        %v2726 = vpack.c.b16 %v2030, %v2022
        %v2727 = vpack.c.b16 %v2031, %v2023
        %v2728 = vpack.c.b16 %v2032, %v2024
        %v2729 = vpack.c.b16 %v2033, %v2025
        %v2730 = vpack.c.b16 %v2034, %v2026
        %v2731 = vpack.c.b16 %v2035, %v2027
        %v2732 = vpack.c.b16 %v2036, %v2028
        %v2733 = vpack.c.b16 %v2037, %v2029
        %v2734 = vpack.c.b16 %v2046, %v2038
        %v2735 = vpack.c.b16 %v2047, %v2039
        %v2736 = vpack.c.b16 %v2048, %v2040
        %v2737 = vpack.c.b16 %v2049, %v2041
        %v2738 = vpack.c.b16 %v2050, %v2042
        %v2739 = vpack.c.b16 %v2051, %v2043
        %v2740 = vpack.c.b16 %v2052, %v2044
        %v2741 = vpack.c.b16 %v2053, %v2045
        %v2742 = vpack.c.b16 %v2062, %v2054
        %v2743 = vpack.c.b16 %v2063, %v2055
        %v2744 = vpack.c.b16 %v2064, %v2056
        %v2745 = vpack.c.b16 %v2065, %v2057
        %v2746 = vpack.c.b16 %v2066, %v2058
        %v2747 = vpack.c.b16 %v2067, %v2059
        %v2748 = vpack.c.b16 %v2068, %v2060
        %v2749 = vpack.c.b16 %v2069, %v2061
        %v2750 = vpack.c.b16 %v2078, %v2070
        %v2751 = vpack.c.b16 %v2079, %v2071
        %v2752 = vpack.c.b16 %v2080, %v2072
        %v2753 = vpack.c.b16 %v2081, %v2073
        %v2754 = vpack.c.b16 %v2082, %v2074
        %v2755 = vpack.c.b16 %v2083, %v2075
        %v2756 = vpack.c.b16 %v2084, %v2076
        %v2757 = vpack.c.b16 %v2085, %v2077
        %v2758 = vpack.c.b16 %v2094, %v2086
        %v2759 = vpack.c.b16 %v2095, %v2087
        %v2760 = vpack.c.b16 %v2096, %v2088
        %v2761 = vpack.c.b16 %v2097, %v2089
        %v2762 = vpack.c.b16 %v2098, %v2090
        %v2763 = vpack.c.b16 %v2099, %v2091
        %v2764 = vpack.c.b16 %v2100, %v2092
        %v2765 = vpack.c.b16 %v2101, %v2093
        %v2766 = vpack.c.b16 %v2110, %v2102
        %v2767 = vpack.c.b16 %v2111, %v2103
        %v2768 = vpack.c.b16 %v2112, %v2104
        %v2769 = vpack.c.b16 %v2113, %v2105
        %v2770 = vpack.c.b16 %v2114, %v2106
        %v2771 = vpack.c.b16 %v2115, %v2107
        %v2772 = vpack.c.b16 %v2116, %v2108
        %v2773 = vpack.c.b16 %v2117, %v2109
        %v2774 = vpack.c.b16 %v2126, %v2118
        %v2775 = vpack.c.b16 %v2127, %v2119
        %v2776 = vpack.c.b16 %v2128, %v2120
        %v2777 = vpack.c.b16 %v2129, %v2121
        %v2778 = vpack.c.b16 %v2130, %v2122
        %v2779 = vpack.c.b16 %v2131, %v2123
        %v2780 = vpack.c.b16 %v2132, %v2124
        %v2781 = vpack.c.b16 %v2133, %v2125
        %v2782 = vpack.c.b16 %v2142, %v2134
        %v2783 = vpack.c.b16 %v2143, %v2135
        %v2784 = vpack.c.b16 %v2144, %v2136
        %v2785 = vpack.c.b16 %v2145, %v2137
        %v2786 = vpack.c.b16 %v2146, %v2138
        %v2787 = vpack.c.b16 %v2147, %v2139
        %v2788 = vpack.c.b16 %v2148, %v2140
        %v2789 = vpack.c.b16 %v2149, %v2141
        %v2790 = vpack.c.b16 %v2158, %v2150
        %v2791 = vpack.c.b16 %v2159, %v2151
        %v2792 = vpack.c.b16 %v2160, %v2152
        %v2793 = vpack.c.b16 %v2161, %v2153
        %v2794 = vpack.c.b16 %v2162, %v2154
        %v2795 = vpack.c.b16 %v2163, %v2155
        %v2796 = vpack.c.b16 %v2164, %v2156
        %v2797 = vpack.c.b16 %v2165, %v2157
        %v2798 = vpack.c.b16 %v2174, %v2166
        %v2799 = vpack.c.b16 %v2175, %v2167
        %v2800 = vpack.c.b16 %v2176, %v2168
        %v2801 = vpack.c.b16 %v2177, %v2169
        %v2802 = vpack.c.b16 %v2178, %v2170
        %v2803 = vpack.c.b16 %v2179, %v2171
        %v2804 = vpack.c.b16 %v2180, %v2172
        %v2805 = vpack.c.b16 %v2181, %v2173
        %v2806 = vpack.c.b16 %v2190, %v2182
        %v2807 = vpack.c.b16 %v2191, %v2183
        %v2808 = vpack.c.b16 %v2192, %v2184
        %v2809 = vpack.c.b16 %v2193, %v2185
        %v2810 = vpack.c.b16 %v2194, %v2186
        %v2811 = vpack.c.b16 %v2195, %v2187
        %v2812 = vpack.c.b16 %v2196, %v2188
        %v2813 = vpack.c.b16 %v2197, %v2189
        %v2814 = vpack.c.b16 %v2206, %v2198
        %v2815 = vpack.c.b16 %v2207, %v2199
        %v2816 = vpack.c.b16 %v2208, %v2200
        %v2817 = vpack.c.b16 %v2209, %v2201
        %v2818 = vpack.c.b16 %v2210, %v2202
        %v2819 = vpack.c.b16 %v2211, %v2203
        %v2820 = vpack.c.b16 %v2212, %v2204
        %v2821 = vpack.c.b16 %v2213, %v2205
        %v2822 = vpack.c.b16 %v2222, %v2214
        %v2823 = vpack.c.b16 %v2223, %v2215
        %v2824 = vpack.c.b16 %v2224, %v2216
        %v2825 = vpack.c.b16 %v2225, %v2217
        %v2826 = vpack.c.b16 %v2226, %v2218
        %v2827 = vpack.c.b16 %v2227, %v2219
        %v2828 = vpack.c.b16 %v2228, %v2220
        %v2829 = vpack.c.b16 %v2229, %v2221
        %v2830 = vpack.c.b16 %v2238, %v2230
        %v2831 = vpack.c.b16 %v2239, %v2231
        %v2832 = vpack.c.b16 %v2240, %v2232
        %v2833 = vpack.c.b16 %v2241, %v2233
        %v2834 = vpack.c.b16 %v2242, %v2234
        %v2835 = vpack.c.b16 %v2243, %v2235
        %v2836 = vpack.c.b16 %v2244, %v2236
        %v2837 = vpack.c.b16 %v2245, %v2237
        %v2838 = vpack.c.b16 %v2254, %v2246
        %v2839 = vpack.c.b16 %v2255, %v2247
        %v2840 = vpack.c.b16 %v2256, %v2248
        %v2841 = vpack.c.b16 %v2257, %v2249
        %v2842 = vpack.c.b16 %v2258, %v2250
        %v2843 = vpack.c.b16 %v2259, %v2251
        %v2844 = vpack.c.b16 %v2260, %v2252
        %v2845 = vpack.c.b16 %v2261, %v2253
        %v2846 = vpack.c.b16 %v2270, %v2262
        %v2847 = vpack.c.b16 %v2271, %v2263
        %v2848 = vpack.c.b16 %v2272, %v2264
        %v2849 = vpack.c.b16 %v2273, %v2265
        %v2850 = vpack.c.b16 %v2274, %v2266
        %v2851 = vpack.c.b16 %v2275, %v2267
        %v2852 = vpack.c.b16 %v2276, %v2268
        %v2853 = vpack.c.b16 %v2277, %v2269
        %v2854 = vpack.c.b16 %v2286, %v2278
        %v2855 = vpack.c.b16 %v2287, %v2279
        %v2856 = vpack.c.b16 %v2288, %v2280
        %v2857 = vpack.c.b16 %v2289, %v2281
        %v2858 = vpack.c.b16 %v2290, %v2282
        %v2859 = vpack.c.b16 %v2291, %v2283
        %v2860 = vpack.c.b16 %v2292, %v2284
        %v2861 = vpack.c.b16 %v2293, %v2285
        %v2862 = vpack.c.b16 %v2302, %v2294
        %v2863 = vpack.c.b16 %v2303, %v2295
        %v2864 = vpack.c.b16 %v2304, %v2296
        %v2865 = vpack.c.b16 %v2305, %v2297
        %v2866 = vpack.c.b16 %v2306, %v2298
        %v2867 = vpack.c.b16 %v2307, %v2299
        %v2868 = vpack.c.b16 %v2308, %v2300
        %v2869 = vpack.c.b16 %v2309, %v2301
        %v2870 = vpack.c.b16 %v2318, %v2310
        %v2871 = vpack.c.b16 %v2319, %v2311
        %v2872 = vpack.c.b16 %v2320, %v2312
        %v2873 = vpack.c.b16 %v2321, %v2313
        %v2874 = vpack.c.b16 %v2322, %v2314
        %v2875 = vpack.c.b16 %v2323, %v2315
        %v2876 = vpack.c.b16 %v2324, %v2316
        %v2877 = vpack.c.b16 %v2325, %v2317
        %v2878 = vpack.c.b16 %v2334, %v2326
        %v2879 = vpack.c.b16 %v2335, %v2327
        %v2880 = vpack.c.b16 %v2336, %v2328
        %v2881 = vpack.c.b16 %v2337, %v2329
        %v2882 = vpack.c.b16 %v2338, %v2330
        %v2883 = vpack.c.b16 %v2339, %v2331
        %v2884 = vpack.c.b16 %v2340, %v2332
        %v2885 = vpack.c.b16 %v2341, %v2333
        %v2886 = vpack.c.b16 %v2350, %v2342
        %v2887 = vpack.c.b16 %v2351, %v2343
        %v2888 = vpack.c.b16 %v2352, %v2344
        %v2889 = vpack.c.b16 %v2353, %v2345
        %v2890 = vpack.c.b16 %v2354, %v2346
        %v2891 = vpack.c.b16 %v2355, %v2347
        %v2892 = vpack.c.b16 %v2356, %v2348
        %v2893 = vpack.c.b16 %v2357, %v2349
        %v2894 = vpack.c.b16 %v2366, %v2358
        %v2895 = vpack.c.b16 %v2367, %v2359
        %v2896 = vpack.c.b16 %v2368, %v2360
        %v2897 = vpack.c.b16 %v2369, %v2361
        %v2898 = vpack.c.b16 %v2370, %v2362
        %v2899 = vpack.c.b16 %v2371, %v2363
        %v2900 = vpack.c.b16 %v2372, %v2364
        %v2901 = vpack.c.b16 %v2373, %v2365
        %v2902 = vpack.c.b16 %v2382, %v2374
        %v2903 = vpack.c.b16 %v2383, %v2375
        %v2904 = vpack.c.b16 %v2384, %v2376
        %v2905 = vpack.c.b16 %v2385, %v2377
        %v2906 = vpack.c.b16 %v2386, %v2378
        %v2907 = vpack.c.b16 %v2387, %v2379
        %v2908 = vpack.c.b16 %v2388, %v2380
        %v2909 = vpack.c.b16 %v2389, %v2381
        %v2910 = vpack.c.b16 %v2398, %v2390
        %v2911 = vpack.c.b16 %v2399, %v2391
        %v2912 = vpack.c.b16 %v2400, %v2392
        %v2913 = vpack.c.b16 %v2401, %v2393
        %v2914 = vpack.c.b16 %v2402, %v2394
        %v2915 = vpack.c.b16 %v2403, %v2395
        %v2916 = vpack.c.b16 %v2404, %v2396
        %v2917 = vpack.c.b16 %v2405, %v2397
        %3430 = vmatprep.subr.bf16.mxu0 %v2407
        %3431 = vmatpush1.bf16.msra.mxu0 %v2406
        %3432 = vmatprep.subr.bf16.mxu0 %v2415
        %3433 = vmatpush1.bf16.msra.mxu0 %v2414
        %3434 = vmatprep.subr.bf16.mxu0 %v2423
        %3435 = vmatpush1.bf16.msra.mxu0 %v2422
        %3436 = vmatprep.subr.bf16.mxu0 %v2431
        %3437 = vmatpush1.bf16.msra.mxu0 %v2430
        %3438 = vmatprep.subr.bf16.mxu0 %v2439
        %3439 = vmatpush1.bf16.msra.mxu0 %v2438
        %3440 = vmatprep.subr.bf16.mxu0 %v2447
        %3441 = vmatpush1.bf16.msra.mxu0 %v2446
        %3442 = vmatprep.subr.bf16.mxu0 %v2455
        %3443 = vmatpush1.bf16.msra.mxu0 %v2454
        %3444 = vmatprep.subr.bf16.mxu0 %v2463
        %3445 = vmatpush1.bf16.msra.mxu0 %v2462
        %3446 = vmatprep.subr.bf16.mxu0 %v2471
        %3447 = vmatpush1.bf16.msra.mxu0 %v2470
        %3448 = vmatprep.subr.bf16.mxu0 %v2479
        %3449 = vmatpush1.bf16.msra.mxu0 %v2478
        %3450 = vmatprep.subr.bf16.mxu0 %v2487
        %3451 = vmatpush1.bf16.msra.mxu0 %v2486
        %3452 = vmatprep.subr.bf16.mxu0 %v2495
        %3453 = vmatpush1.bf16.msra.mxu0 %v2494
        %3454 = vmatprep.subr.bf16.mxu0 %v2503
        %3455 = vmatpush1.bf16.msra.mxu0 %v2502
        %3456 = vmatprep.subr.bf16.mxu0 %v2511
        %3457 = vmatpush1.bf16.msra.mxu0 %v2510
        %3458 = vmatprep.subr.bf16.mxu0 %v2519
        %3459 = vmatpush1.bf16.msra.mxu0 %v2518
        %3460 = vmatprep.subr.bf16.mxu0 %v2527
        %3461 = vmatpush1.bf16.msra.mxu0 %v2526
        %3462 = vmatprep.mubr.bf16.mxu0 %v855
        %3463 = vmatmul.mubr.bf16.gmra.mrb[0].mxu0 %v854
        %v3464 = vpop.f32.mrb[0].mxu0
        %v3465 = vadd.f32 0.0, %v3464
        %v3466 = vpop.f32.mrb[0].mxu0
        %v3467 = vadd.f32 0.0, %v3466
        %v3468 = vpop.f32.mrb[0].mxu0
        %v3469 = vadd.f32 0.0, %v3468
        %v3470 = vpop.f32.mrb[0].mxu0
        %v3471 = vadd.f32 0.0, %v3470
        %3472 = vdwg.mxu0
        %3473 = vmatprep.subr.bf16.mxu0 %v2535
        %3474 = vmatpush1.bf16.msra.mxu0 %v2534
        %3475 = vmatprep.subr.bf16.mxu0 %v2543
        %3476 = vmatpush1.bf16.msra.mxu0 %v2542
        %3477 = vmatprep.subr.bf16.mxu0 %v2551
        %3478 = vmatpush1.bf16.msra.mxu0 %v2550
        %3479 = vmatprep.subr.bf16.mxu0 %v2559
        %3480 = vmatpush1.bf16.msra.mxu0 %v2558
        %3481 = vmatprep.subr.bf16.mxu0 %v2567
        %3482 = vmatpush1.bf16.msra.mxu0 %v2566
        %3483 = vmatprep.subr.bf16.mxu0 %v2575
        %3484 = vmatpush1.bf16.msra.mxu0 %v2574
        %3485 = vmatprep.subr.bf16.mxu0 %v2583
        %3486 = vmatpush1.bf16.msra.mxu0 %v2582
        %3487 = vmatprep.subr.bf16.mxu0 %v2591
        %3488 = vmatpush1.bf16.msra.mxu0 %v2590
        %3489 = vmatprep.subr.bf16.mxu0 %v2599
        %3490 = vmatpush1.bf16.msra.mxu0 %v2598
        %3491 = vmatprep.subr.bf16.mxu0 %v2607
        %3492 = vmatpush1.bf16.msra.mxu0 %v2606
        %3493 = vmatprep.subr.bf16.mxu0 %v2615
        %3494 = vmatpush1.bf16.msra.mxu0 %v2614
        %3495 = vmatprep.subr.bf16.mxu0 %v2623
        %3496 = vmatpush1.bf16.msra.mxu0 %v2622
        %3497 = vmatprep.subr.bf16.mxu0 %v2631
        %3498 = vmatpush1.bf16.msra.mxu0 %v2630
        %3499 = vmatprep.subr.bf16.mxu0 %v2639
        %3500 = vmatpush1.bf16.msra.mxu0 %v2638
        %3501 = vmatprep.subr.bf16.mxu0 %v2647
        %3502 = vmatpush1.bf16.msra.mxu0 %v2646
        %3503 = vmatprep.subr.bf16.mxu0 %v2655
        %3504 = vmatpush1.bf16.msra.mxu0 %v2654
        %3505 = vmatprep.mubr.bf16.mxu0 %v857
        %3506 = vmatmul.mubr.bf16.gmra.mrb[0].mxu0 %v856
        %v3507 = vpop.f32.mrb[0].mxu0
        %v3508 = vadd.f32 %v3465, %v3507
        %v3509 = vpop.f32.mrb[0].mxu0
        %v3510 = vadd.f32 %v3467, %v3509
        %v3511 = vpop.f32.mrb[0].mxu0
        %v3512 = vadd.f32 %v3469, %v3511
        %v3513 = vpop.f32.mrb[0].mxu0
        %v3514 = vadd.f32 %v3471, %v3513
        %3515 = vdwg.mxu0
        %3516 = vmatprep.subr.bf16.mxu0 %v2663
        %3517 = vmatpush1.bf16.msra.mxu0 %v2662
        %3518 = vmatprep.subr.bf16.mxu0 %v2671
        %3519 = vmatpush1.bf16.msra.mxu0 %v2670
        %3520 = vmatprep.subr.bf16.mxu0 %v2679
        %3521 = vmatpush1.bf16.msra.mxu0 %v2678
        %3522 = vmatprep.subr.bf16.mxu0 %v2687
        %3523 = vmatpush1.bf16.msra.mxu0 %v2686
        %3524 = vmatprep.subr.bf16.mxu0 %v2695
        %3525 = vmatpush1.bf16.msra.mxu0 %v2694
        %3526 = vmatprep.subr.bf16.mxu0 %v2703
        %3527 = vmatpush1.bf16.msra.mxu0 %v2702
        %3528 = vmatprep.subr.bf16.mxu0 %v2711
        %3529 = vmatpush1.bf16.msra.mxu0 %v2710
        %3530 = vmatprep.subr.bf16.mxu0 %v2719
        %3531 = vmatpush1.bf16.msra.mxu0 %v2718
        %3532 = vmatprep.subr.bf16.mxu0 %v2727
        %3533 = vmatpush1.bf16.msra.mxu0 %v2726
        %3534 = vmatprep.subr.bf16.mxu0 %v2735
        %3535 = vmatpush1.bf16.msra.mxu0 %v2734
        %3536 = vmatprep.subr.bf16.mxu0 %v2743
        %3537 = vmatpush1.bf16.msra.mxu0 %v2742
        %3538 = vmatprep.subr.bf16.mxu0 %v2751
        %3539 = vmatpush1.bf16.msra.mxu0 %v2750
        %3540 = vmatprep.subr.bf16.mxu0 %v2759
        %3541 = vmatpush1.bf16.msra.mxu0 %v2758
        %3542 = vmatprep.subr.bf16.mxu0 %v2767
        %3543 = vmatpush1.bf16.msra.mxu0 %v2766
        %3544 = vmatprep.subr.bf16.mxu0 %v2775
        %3545 = vmatpush1.bf16.msra.mxu0 %v2774
        %3546 = vmatprep.subr.bf16.mxu0 %v2783
        %3547 = vmatpush1.bf16.msra.mxu0 %v2782
        %3548 = vmatprep.mubr.bf16.mxu0 %v859
        %3549 = vmatmul.mubr.bf16.gmra.mrb[0].mxu0 %v858
        %v3550 = vpop.f32.mrb[0].mxu0
        %v3551 = vadd.f32 %v3508, %v3550
        %v3552 = vpop.f32.mrb[0].mxu0
        %v3553 = vadd.f32 %v3510, %v3552
        %v3554 = vpop.f32.mrb[0].mxu0
        %v3555 = vadd.f32 %v3512, %v3554
        %v3556 = vpop.f32.mrb[0].mxu0
        %v3557 = vadd.f32 %v3514, %v3556
        %3558 = vdwg.mxu0
        %3559 = vmatprep.subr.bf16.mxu0 %v2791
        %3560 = vmatpush1.bf16.msra.mxu0 %v2790
        %3561 = vmatprep.subr.bf16.mxu0 %v2799
        %3562 = vmatpush1.bf16.msra.mxu0 %v2798
        %3563 = vmatprep.subr.bf16.mxu0 %v2807
        %3564 = vmatpush1.bf16.msra.mxu0 %v2806
        %3565 = vmatprep.subr.bf16.mxu0 %v2815
        %3566 = vmatpush1.bf16.msra.mxu0 %v2814
        %3567 = vmatprep.subr.bf16.mxu0 %v2823
        %3568 = vmatpush1.bf16.msra.mxu0 %v2822
        %3569 = vmatprep.subr.bf16.mxu0 %v2831
        %3570 = vmatpush1.bf16.msra.mxu0 %v2830
        %3571 = vmatprep.subr.bf16.mxu0 %v2839
        %3572 = vmatpush1.bf16.msra.mxu0 %v2838
        %3573 = vmatprep.subr.bf16.mxu0 %v2847
        %3574 = vmatpush1.bf16.msra.mxu0 %v2846
        %3575 = vmatprep.subr.bf16.mxu0 %v2855
        %3576 = vmatpush1.bf16.msra.mxu0 %v2854
        %3577 = vmatprep.subr.bf16.mxu0 %v2863
        %3578 = vmatpush1.bf16.msra.mxu0 %v2862
        %3579 = vmatprep.subr.bf16.mxu0 %v2871
        %3580 = vmatpush1.bf16.msra.mxu0 %v2870
        %3581 = vmatprep.subr.bf16.mxu0 %v2879
        %3582 = vmatpush1.bf16.msra.mxu0 %v2878
        %3583 = vmatprep.subr.bf16.mxu0 %v2887
        %3584 = vmatpush1.bf16.msra.mxu0 %v2886
        %3585 = vmatprep.subr.bf16.mxu0 %v2895
        %3586 = vmatpush1.bf16.msra.mxu0 %v2894
        %3587 = vmatprep.subr.bf16.mxu0 %v2903
        %3588 = vmatpush1.bf16.msra.mxu0 %v2902
        %3589 = vmatprep.subr.bf16.mxu0 %v2911
        %3590 = vmatpush1.bf16.msra.mxu0 %v2910
        %3591 = vmatprep.mubr.bf16.mxu0 %v861
        %3592 = vmatmul.mubr.bf16.gmra.mrb[0].mxu0 %v860
        %v3593 = vpop.f32.mrb[0].mxu0
        %v3594 = vadd.f32 %v3551, %v3593
        %v3595 = vpop.f32.mrb[0].mxu0
        %v3596 = vadd.f32 %v3553, %v3595
        %v3597 = vpop.f32.mrb[0].mxu0
        %v3598 = vadd.f32 %v3555, %v3597
        %v3599 = vpop.f32.mrb[0].mxu0
        %v3600 = vadd.f32 %v3557, %v3599
        %3601 = vdwg.mxu0
        %3602 = vmatprep.subr.bf16.mxu0 %v2409
        %3603 = vmatpush1.bf16.msra.mxu0 %v2408
        %3604 = vmatprep.subr.bf16.mxu0 %v2417
        %3605 = vmatpush1.bf16.msra.mxu0 %v2416
        %3606 = vmatprep.subr.bf16.mxu0 %v2425
        %3607 = vmatpush1.bf16.msra.mxu0 %v2424
        %3608 = vmatprep.subr.bf16.mxu0 %v2433
        %3609 = vmatpush1.bf16.msra.mxu0 %v2432
        %3610 = vmatprep.subr.bf16.mxu0 %v2441
        %3611 = vmatpush1.bf16.msra.mxu0 %v2440
        %3612 = vmatprep.subr.bf16.mxu0 %v2449
        %3613 = vmatpush1.bf16.msra.mxu0 %v2448
        %3614 = vmatprep.subr.bf16.mxu0 %v2457
        %3615 = vmatpush1.bf16.msra.mxu0 %v2456
        %3616 = vmatprep.subr.bf16.mxu0 %v2465
        %3617 = vmatpush1.bf16.msra.mxu0 %v2464
        %3618 = vmatprep.subr.bf16.mxu0 %v2473
        %3619 = vmatpush1.bf16.msra.mxu0 %v2472
        %3620 = vmatprep.subr.bf16.mxu0 %v2481
        %3621 = vmatpush1.bf16.msra.mxu0 %v2480
        %3622 = vmatprep.subr.bf16.mxu0 %v2489
        %3623 = vmatpush1.bf16.msra.mxu0 %v2488
        %3624 = vmatprep.subr.bf16.mxu0 %v2497
        %3625 = vmatpush1.bf16.msra.mxu0 %v2496
        %3626 = vmatprep.subr.bf16.mxu0 %v2505
        %3627 = vmatpush1.bf16.msra.mxu0 %v2504
        %3628 = vmatprep.subr.bf16.mxu0 %v2513
        %3629 = vmatpush1.bf16.msra.mxu0 %v2512
        %3630 = vmatprep.subr.bf16.mxu0 %v2521
        %3631 = vmatpush1.bf16.msra.mxu0 %v2520
        %3632 = vmatprep.subr.bf16.mxu0 %v2529
        %3633 = vmatpush1.bf16.msra.mxu0 %v2528
        %3634 = vmatprep.mubr.bf16.mxu0 %v855
        %3635 = vmatmul.mubr.bf16.gmra.mrb[0].mxu0 %v854
        %v3636 = vpop.f32.mrb[0].mxu0
        %v3637 = vadd.f32 0.0, %v3636
        %v3638 = vpop.f32.mrb[0].mxu0
        %v3639 = vadd.f32 0.0, %v3638
        %v3640 = vpop.f32.mrb[0].mxu0
        %v3641 = vadd.f32 0.0, %v3640
        %v3642 = vpop.f32.mrb[0].mxu0
        %v3643 = vadd.f32 0.0, %v3642
        %3644 = vdwg.mxu0
        %3645 = vmatprep.subr.bf16.mxu0 %v2537
        %3646 = vmatpush1.bf16.msra.mxu0 %v2536
        %3647 = vmatprep.subr.bf16.mxu0 %v2545
        %3648 = vmatpush1.bf16.msra.mxu0 %v2544
        %3649 = vmatprep.subr.bf16.mxu0 %v2553
        %3650 = vmatpush1.bf16.msra.mxu0 %v2552
        %3651 = vmatprep.subr.bf16.mxu0 %v2561
        %3652 = vmatpush1.bf16.msra.mxu0 %v2560
        %3653 = vmatprep.subr.bf16.mxu0 %v2569
        %3654 = vmatpush1.bf16.msra.mxu0 %v2568
        %3655 = vmatprep.subr.bf16.mxu0 %v2577
        %3656 = vmatpush1.bf16.msra.mxu0 %v2576
        %3657 = vmatprep.subr.bf16.mxu0 %v2585
        %3658 = vmatpush1.bf16.msra.mxu0 %v2584
        %3659 = vmatprep.subr.bf16.mxu0 %v2593
        %3660 = vmatpush1.bf16.msra.mxu0 %v2592
        %3661 = vmatprep.subr.bf16.mxu0 %v2601
        %3662 = vmatpush1.bf16.msra.mxu0 %v2600
        %3663 = vmatprep.subr.bf16.mxu0 %v2609
        %3664 = vmatpush1.bf16.msra.mxu0 %v2608
        %3665 = vmatprep.subr.bf16.mxu0 %v2617
        %3666 = vmatpush1.bf16.msra.mxu0 %v2616
        %3667 = vmatprep.subr.bf16.mxu0 %v2625
        %3668 = vmatpush1.bf16.msra.mxu0 %v2624
        %3669 = vmatprep.subr.bf16.mxu0 %v2633
        %3670 = vmatpush1.bf16.msra.mxu0 %v2632
        %3671 = vmatprep.subr.bf16.mxu0 %v2641
        %3672 = vmatpush1.bf16.msra.mxu0 %v2640
        %3673 = vmatprep.subr.bf16.mxu0 %v2649
        %3674 = vmatpush1.bf16.msra.mxu0 %v2648
        %3675 = vmatprep.subr.bf16.mxu0 %v2657
        %3676 = vmatpush1.bf16.msra.mxu0 %v2656
        %3677 = vmatprep.mubr.bf16.mxu0 %v857
        %3678 = vmatmul.mubr.bf16.gmra.mrb[0].mxu0 %v856
        %v3679 = vpop.f32.mrb[0].mxu0
        %v3680 = vadd.f32 %v3637, %v3679
        %v3681 = vpop.f32.mrb[0].mxu0
        %v3682 = vadd.f32 %v3639, %v3681
        %v3683 = vpop.f32.mrb[0].mxu0
        %v3684 = vadd.f32 %v3641, %v3683
        %v3685 = vpop.f32.mrb[0].mxu0
        %v3686 = vadd.f32 %v3643, %v3685
        %3687 = vdwg.mxu0
        %3688 = vmatprep.subr.bf16.mxu0 %v2665
        %3689 = vmatpush1.bf16.msra.mxu0 %v2664
        %3690 = vmatprep.subr.bf16.mxu0 %v2673
        %3691 = vmatpush1.bf16.msra.mxu0 %v2672
        %3692 = vmatprep.subr.bf16.mxu0 %v2681
        %3693 = vmatpush1.bf16.msra.mxu0 %v2680
        %3694 = vmatprep.subr.bf16.mxu0 %v2689
        %3695 = vmatpush1.bf16.msra.mxu0 %v2688
        %3696 = vmatprep.subr.bf16.mxu0 %v2697
        %3697 = vmatpush1.bf16.msra.mxu0 %v2696
        %3698 = vmatprep.subr.bf16.mxu0 %v2705
        %3699 = vmatpush1.bf16.msra.mxu0 %v2704
        %3700 = vmatprep.subr.bf16.mxu0 %v2713
        %3701 = vmatpush1.bf16.msra.mxu0 %v2712
        %3702 = vmatprep.subr.bf16.mxu0 %v2721
        %3703 = vmatpush1.bf16.msra.mxu0 %v2720
        %3704 = vmatprep.subr.bf16.mxu0 %v2729
        %3705 = vmatpush1.bf16.msra.mxu0 %v2728
        %3706 = vmatprep.subr.bf16.mxu0 %v2737
        %3707 = vmatpush1.bf16.msra.mxu0 %v2736
        %3708 = vmatprep.subr.bf16.mxu0 %v2745
        %3709 = vmatpush1.bf16.msra.mxu0 %v2744
        %3710 = vmatprep.subr.bf16.mxu0 %v2753
        %3711 = vmatpush1.bf16.msra.mxu0 %v2752
        %3712 = vmatprep.subr.bf16.mxu0 %v2761
        %3713 = vmatpush1.bf16.msra.mxu0 %v2760
        %3714 = vmatprep.subr.bf16.mxu0 %v2769
        %3715 = vmatpush1.bf16.msra.mxu0 %v2768
        %3716 = vmatprep.subr.bf16.mxu0 %v2777
        %3717 = vmatpush1.bf16.msra.mxu0 %v2776
        %3718 = vmatprep.subr.bf16.mxu0 %v2785
        %3719 = vmatpush1.bf16.msra.mxu0 %v2784
        %3720 = vmatprep.mubr.bf16.mxu0 %v859
        %3721 = vmatmul.mubr.bf16.gmra.mrb[0].mxu0 %v858
        %v3722 = vpop.f32.mrb[0].mxu0
        %v3723 = vadd.f32 %v3680, %v3722
        %v3724 = vpop.f32.mrb[0].mxu0
        %v3725 = vadd.f32 %v3682, %v3724
        %v3726 = vpop.f32.mrb[0].mxu0
        %v3727 = vadd.f32 %v3684, %v3726
        %v3728 = vpop.f32.mrb[0].mxu0
        %v3729 = vadd.f32 %v3686, %v3728
        %3730 = vdwg.mxu0
        %3731 = vmatprep.subr.bf16.mxu0 %v2793
        %3732 = vmatpush1.bf16.msra.mxu0 %v2792
        %3733 = vmatprep.subr.bf16.mxu0 %v2801
        %3734 = vmatpush1.bf16.msra.mxu0 %v2800
        %3735 = vmatprep.subr.bf16.mxu0 %v2809
        %3736 = vmatpush1.bf16.msra.mxu0 %v2808
        %3737 = vmatprep.subr.bf16.mxu0 %v2817
        %3738 = vmatpush1.bf16.msra.mxu0 %v2816
        %3739 = vmatprep.subr.bf16.mxu0 %v2825
        %3740 = vmatpush1.bf16.msra.mxu0 %v2824
        %3741 = vmatprep.subr.bf16.mxu0 %v2833
        %3742 = vmatpush1.bf16.msra.mxu0 %v2832
        %3743 = vmatprep.subr.bf16.mxu0 %v2841
        %3744 = vmatpush1.bf16.msra.mxu0 %v2840
        %3745 = vmatprep.subr.bf16.mxu0 %v2849
        %3746 = vmatpush1.bf16.msra.mxu0 %v2848
        %3747 = vmatprep.subr.bf16.mxu0 %v2857
        %3748 = vmatpush1.bf16.msra.mxu0 %v2856
        %3749 = vmatprep.subr.bf16.mxu0 %v2865
        %3750 = vmatpush1.bf16.msra.mxu0 %v2864
        %3751 = vmatprep.subr.bf16.mxu0 %v2873
        %3752 = vmatpush1.bf16.msra.mxu0 %v2872
        %3753 = vmatprep.subr.bf16.mxu0 %v2881
        %3754 = vmatpush1.bf16.msra.mxu0 %v2880
        %3755 = vmatprep.subr.bf16.mxu0 %v2889
        %3756 = vmatpush1.bf16.msra.mxu0 %v2888
        %3757 = vmatprep.subr.bf16.mxu0 %v2897
        %3758 = vmatpush1.bf16.msra.mxu0 %v2896
        %3759 = vmatprep.subr.bf16.mxu0 %v2905
        %3760 = vmatpush1.bf16.msra.mxu0 %v2904
        %3761 = vmatprep.subr.bf16.mxu0 %v2913
        %3762 = vmatpush1.bf16.msra.mxu0 %v2912
        %3763 = vmatprep.mubr.bf16.mxu0 %v861
        %3764 = vmatmul.mubr.bf16.gmra.mrb[0].mxu0 %v860
        %v3765 = vpop.f32.mrb[0].mxu0
        %v3766 = vadd.f32 %v3723, %v3765
        %v3767 = vpop.f32.mrb[0].mxu0
        %v3768 = vadd.f32 %v3725, %v3767
        %v3769 = vpop.f32.mrb[0].mxu0
        %v3770 = vadd.f32 %v3727, %v3769
        %v3771 = vpop.f32.mrb[0].mxu0
        %v3772 = vadd.f32 %v3729, %v3771
        %3773 = vdwg.mxu0
        %3774 = vmatprep.subr.bf16.mxu0 %v2411
        %3775 = vmatpush1.bf16.msra.mxu0 %v2410
        %3776 = vmatprep.subr.bf16.mxu0 %v2419
        %3777 = vmatpush1.bf16.msra.mxu0 %v2418
        %3778 = vmatprep.subr.bf16.mxu0 %v2427
        %3779 = vmatpush1.bf16.msra.mxu0 %v2426
        %3780 = vmatprep.subr.bf16.mxu0 %v2435
        %3781 = vmatpush1.bf16.msra.mxu0 %v2434
        %3782 = vmatprep.subr.bf16.mxu0 %v2443
        %3783 = vmatpush1.bf16.msra.mxu0 %v2442
        %3784 = vmatprep.subr.bf16.mxu0 %v2451
        %3785 = vmatpush1.bf16.msra.mxu0 %v2450
        %3786 = vmatprep.subr.bf16.mxu0 %v2459
        %3787 = vmatpush1.bf16.msra.mxu0 %v2458
        %3788 = vmatprep.subr.bf16.mxu0 %v2467
        %3789 = vmatpush1.bf16.msra.mxu0 %v2466
        %3790 = vmatprep.subr.bf16.mxu0 %v2475
        %3791 = vmatpush1.bf16.msra.mxu0 %v2474
        %3792 = vmatprep.subr.bf16.mxu0 %v2483
        %3793 = vmatpush1.bf16.msra.mxu0 %v2482
        %3794 = vmatprep.subr.bf16.mxu0 %v2491
        %3795 = vmatpush1.bf16.msra.mxu0 %v2490
        %3796 = vmatprep.subr.bf16.mxu0 %v2499
        %3797 = vmatpush1.bf16.msra.mxu0 %v2498
        %3798 = vmatprep.subr.bf16.mxu0 %v2507
        %3799 = vmatpush1.bf16.msra.mxu0 %v2506
        %3800 = vmatprep.subr.bf16.mxu0 %v2515
        %3801 = vmatpush1.bf16.msra.mxu0 %v2514
        %3802 = vmatprep.subr.bf16.mxu0 %v2523
        %3803 = vmatpush1.bf16.msra.mxu0 %v2522
        %3804 = vmatprep.subr.bf16.mxu0 %v2531
        %3805 = vmatpush1.bf16.msra.mxu0 %v2530
        %3806 = vmatprep.mubr.bf16.mxu0 %v855
        %3807 = vmatmul.mubr.bf16.gmra.mrb[0].mxu0 %v854
        %v3808 = vpop.f32.mrb[0].mxu0
        %v3809 = vadd.f32 0.0, %v3808
        %v3810 = vpop.f32.mrb[0].mxu0
        %v3811 = vadd.f32 0.0, %v3810
        %v3812 = vpop.f32.mrb[0].mxu0
        %v3813 = vadd.f32 0.0, %v3812
        %v3814 = vpop.f32.mrb[0].mxu0
        %v3815 = vadd.f32 0.0, %v3814
        %3816 = vdwg.mxu0
        %3817 = vmatprep.subr.bf16.mxu0 %v2539
        %3818 = vmatpush1.bf16.msra.mxu0 %v2538
        %3819 = vmatprep.subr.bf16.mxu0 %v2547
        %3820 = vmatpush1.bf16.msra.mxu0 %v2546
        %3821 = vmatprep.subr.bf16.mxu0 %v2555
        %3822 = vmatpush1.bf16.msra.mxu0 %v2554
        %3823 = vmatprep.subr.bf16.mxu0 %v2563
        %3824 = vmatpush1.bf16.msra.mxu0 %v2562
        %3825 = vmatprep.subr.bf16.mxu0 %v2571
        %3826 = vmatpush1.bf16.msra.mxu0 %v2570
        %3827 = vmatprep.subr.bf16.mxu0 %v2579
        %3828 = vmatpush1.bf16.msra.mxu0 %v2578
        %3829 = vmatprep.subr.bf16.mxu0 %v2587
        %3830 = vmatpush1.bf16.msra.mxu0 %v2586
        %3831 = vmatprep.subr.bf16.mxu0 %v2595
        %3832 = vmatpush1.bf16.msra.mxu0 %v2594
        %3833 = vmatprep.subr.bf16.mxu0 %v2603
        %3834 = vmatpush1.bf16.msra.mxu0 %v2602
        %3835 = vmatprep.subr.bf16.mxu0 %v2611
        %3836 = vmatpush1.bf16.msra.mxu0 %v2610
        %3837 = vmatprep.subr.bf16.mxu0 %v2619
        %3838 = vmatpush1.bf16.msra.mxu0 %v2618
        %3839 = vmatprep.subr.bf16.mxu0 %v2627
        %3840 = vmatpush1.bf16.msra.mxu0 %v2626
        %3841 = vmatprep.subr.bf16.mxu0 %v2635
        %3842 = vmatpush1.bf16.msra.mxu0 %v2634
        %3843 = vmatprep.subr.bf16.mxu0 %v2643
        %3844 = vmatpush1.bf16.msra.mxu0 %v2642
        %3845 = vmatprep.subr.bf16.mxu0 %v2651
        %3846 = vmatpush1.bf16.msra.mxu0 %v2650
        %3847 = vmatprep.subr.bf16.mxu0 %v2659
        %3848 = vmatpush1.bf16.msra.mxu0 %v2658
        %3849 = vmatprep.mubr.bf16.mxu0 %v857
        %3850 = vmatmul.mubr.bf16.gmra.mrb[0].mxu0 %v856
        %v3851 = vpop.f32.mrb[0].mxu0
        %v3852 = vadd.f32 %v3809, %v3851
        %v3853 = vpop.f32.mrb[0].mxu0
        %v3854 = vadd.f32 %v3811, %v3853
        %v3855 = vpop.f32.mrb[0].mxu0
        %v3856 = vadd.f32 %v3813, %v3855
        %v3857 = vpop.f32.mrb[0].mxu0
        %v3858 = vadd.f32 %v3815, %v3857
        %3859 = vdwg.mxu0
        %3860 = vmatprep.subr.bf16.mxu0 %v2667
        %3861 = vmatpush1.bf16.msra.mxu0 %v2666
        %3862 = vmatprep.subr.bf16.mxu0 %v2675
        %3863 = vmatpush1.bf16.msra.mxu0 %v2674
        %3864 = vmatprep.subr.bf16.mxu0 %v2683
        %3865 = vmatpush1.bf16.msra.mxu0 %v2682
        %3866 = vmatprep.subr.bf16.mxu0 %v2691
        %3867 = vmatpush1.bf16.msra.mxu0 %v2690
        %3868 = vmatprep.subr.bf16.mxu0 %v2699
        %3869 = vmatpush1.bf16.msra.mxu0 %v2698
        %3870 = vmatprep.subr.bf16.mxu0 %v2707
        %3871 = vmatpush1.bf16.msra.mxu0 %v2706
        %3872 = vmatprep.subr.bf16.mxu0 %v2715
        %3873 = vmatpush1.bf16.msra.mxu0 %v2714
        %3874 = vmatprep.subr.bf16.mxu0 %v2723
        %3875 = vmatpush1.bf16.msra.mxu0 %v2722
        %3876 = vmatprep.subr.bf16.mxu0 %v2731
        %3877 = vmatpush1.bf16.msra.mxu0 %v2730
        %3878 = vmatprep.subr.bf16.mxu0 %v2739
        %3879 = vmatpush1.bf16.msra.mxu0 %v2738
        %3880 = vmatprep.subr.bf16.mxu0 %v2747
        %3881 = vmatpush1.bf16.msra.mxu0 %v2746
        %3882 = vmatprep.subr.bf16.mxu0 %v2755
        %3883 = vmatpush1.bf16.msra.mxu0 %v2754
        %3884 = vmatprep.subr.bf16.mxu0 %v2763
        %3885 = vmatpush1.bf16.msra.mxu0 %v2762
        %3886 = vmatprep.subr.bf16.mxu0 %v2771
        %3887 = vmatpush1.bf16.msra.mxu0 %v2770
        %3888 = vmatprep.subr.bf16.mxu0 %v2779
        %3889 = vmatpush1.bf16.msra.mxu0 %v2778
        %3890 = vmatprep.subr.bf16.mxu0 %v2787
        %3891 = vmatpush1.bf16.msra.mxu0 %v2786
        %3892 = vmatprep.mubr.bf16.mxu0 %v859
        %3893 = vmatmul.mubr.bf16.gmra.mrb[0].mxu0 %v858
        %v3894 = vpop.f32.mrb[0].mxu0
        %v3895 = vadd.f32 %v3852, %v3894
        %v3896 = vpop.f32.mrb[0].mxu0
        %v3897 = vadd.f32 %v3854, %v3896
        %v3898 = vpop.f32.mrb[0].mxu0
        %v3899 = vadd.f32 %v3856, %v3898
        %v3900 = vpop.f32.mrb[0].mxu0
        %v3901 = vadd.f32 %v3858, %v3900
        %3902 = vdwg.mxu0
        %3903 = vmatprep.subr.bf16.mxu0 %v2795
        %3904 = vmatpush1.bf16.msra.mxu0 %v2794
        %3905 = vmatprep.subr.bf16.mxu0 %v2803
        %3906 = vmatpush1.bf16.msra.mxu0 %v2802
        %3907 = vmatprep.subr.bf16.mxu0 %v2811
        %3908 = vmatpush1.bf16.msra.mxu0 %v2810
        %3909 = vmatprep.subr.bf16.mxu0 %v2819
        %3910 = vmatpush1.bf16.msra.mxu0 %v2818
        %3911 = vmatprep.subr.bf16.mxu0 %v2827
        %3912 = vmatpush1.bf16.msra.mxu0 %v2826
        %3913 = vmatprep.subr.bf16.mxu0 %v2835
        %3914 = vmatpush1.bf16.msra.mxu0 %v2834
        %3915 = vmatprep.subr.bf16.mxu0 %v2843
        %3916 = vmatpush1.bf16.msra.mxu0 %v2842
        %3917 = vmatprep.subr.bf16.mxu0 %v2851
        %3918 = vmatpush1.bf16.msra.mxu0 %v2850
        %3919 = vmatprep.subr.bf16.mxu0 %v2859
        %3920 = vmatpush1.bf16.msra.mxu0 %v2858
        %3921 = vmatprep.subr.bf16.mxu0 %v2867
        %3922 = vmatpush1.bf16.msra.mxu0 %v2866
        %3923 = vmatprep.subr.bf16.mxu0 %v2875
        %3924 = vmatpush1.bf16.msra.mxu0 %v2874
        %3925 = vmatprep.subr.bf16.mxu0 %v2883
        %3926 = vmatpush1.bf16.msra.mxu0 %v2882
        %3927 = vmatprep.subr.bf16.mxu0 %v2891
        %3928 = vmatpush1.bf16.msra.mxu0 %v2890
        %3929 = vmatprep.subr.bf16.mxu0 %v2899
        %3930 = vmatpush1.bf16.msra.mxu0 %v2898
        %3931 = vmatprep.subr.bf16.mxu0 %v2907
        %3932 = vmatpush1.bf16.msra.mxu0 %v2906
        %3933 = vmatprep.subr.bf16.mxu0 %v2915
        %3934 = vmatpush1.bf16.msra.mxu0 %v2914
        %3935 = vmatprep.mubr.bf16.mxu0 %v861
        %3936 = vmatmul.mubr.bf16.gmra.mrb[0].mxu0 %v860
        %v3937 = vpop.f32.mrb[0].mxu0
        %v3938 = vadd.f32 %v3895, %v3937
        %v3939 = vpop.f32.mrb[0].mxu0
        %v3940 = vadd.f32 %v3897, %v3939
        %v3941 = vpop.f32.mrb[0].mxu0
        %v3942 = vadd.f32 %v3899, %v3941
        %v3943 = vpop.f32.mrb[0].mxu0
        %v3944 = vadd.f32 %v3901, %v3943
        %3945 = vdwg.mxu0
        %3946 = vmatprep.subr.bf16.mxu0 %v2413
        %3947 = vmatpush1.bf16.msra.mxu0 %v2412
        %3948 = vmatprep.subr.bf16.mxu0 %v2421
        %3949 = vmatpush1.bf16.msra.mxu0 %v2420
        %3950 = vmatprep.subr.bf16.mxu0 %v2429
        %3951 = vmatpush1.bf16.msra.mxu0 %v2428
        %3952 = vmatprep.subr.bf16.mxu0 %v2437
        %3953 = vmatpush1.bf16.msra.mxu0 %v2436
        %3954 = vmatprep.subr.bf16.mxu0 %v2445
        %3955 = vmatpush1.bf16.msra.mxu0 %v2444
        %3956 = vmatprep.subr.bf16.mxu0 %v2453
        %3957 = vmatpush1.bf16.msra.mxu0 %v2452
        %3958 = vmatprep.subr.bf16.mxu0 %v2461
        %3959 = vmatpush1.bf16.msra.mxu0 %v2460
        %3960 = vmatprep.subr.bf16.mxu0 %v2469
        %3961 = vmatpush1.bf16.msra.mxu0 %v2468
        %3962 = vmatprep.subr.bf16.mxu0 %v2477
        %3963 = vmatpush1.bf16.msra.mxu0 %v2476
        %3964 = vmatprep.subr.bf16.mxu0 %v2485
        %3965 = vmatpush1.bf16.msra.mxu0 %v2484
        %3966 = vmatprep.subr.bf16.mxu0 %v2493
        %3967 = vmatpush1.bf16.msra.mxu0 %v2492
        %3968 = vmatprep.subr.bf16.mxu0 %v2501
        %3969 = vmatpush1.bf16.msra.mxu0 %v2500
        %3970 = vmatprep.subr.bf16.mxu0 %v2509
        %3971 = vmatpush1.bf16.msra.mxu0 %v2508
        %3972 = vmatprep.subr.bf16.mxu0 %v2517
        %3973 = vmatpush1.bf16.msra.mxu0 %v2516
        %3974 = vmatprep.subr.bf16.mxu0 %v2525
        %3975 = vmatpush1.bf16.msra.mxu0 %v2524
        %3976 = vmatprep.subr.bf16.mxu0 %v2533
        %3977 = vmatpush1.bf16.msra.mxu0 %v2532
        %3978 = vmatprep.mubr.bf16.mxu0 %v855
        %3979 = vmatmul.mubr.bf16.gmra.mrb[0].mxu0 %v854
        %v3980 = vpop.f32.mrb[0].mxu0
        %v3981 = vadd.f32 0.0, %v3980
        %v3982 = vpop.f32.mrb[0].mxu0
        %v3983 = vadd.f32 0.0, %v3982
        %v3984 = vpop.f32.mrb[0].mxu0
        %v3985 = vadd.f32 0.0, %v3984
        %v3986 = vpop.f32.mrb[0].mxu0
        %v3987 = vadd.f32 0.0, %v3986
        %3988 = vdwg.mxu0
        %3989 = vmatprep.subr.bf16.mxu0 %v2541
        %3990 = vmatpush1.bf16.msra.mxu0 %v2540
        %3991 = vmatprep.subr.bf16.mxu0 %v2549
        %3992 = vmatpush1.bf16.msra.mxu0 %v2548
        %3993 = vmatprep.subr.bf16.mxu0 %v2557
        %3994 = vmatpush1.bf16.msra.mxu0 %v2556
        %3995 = vmatprep.subr.bf16.mxu0 %v2565
        %3996 = vmatpush1.bf16.msra.mxu0 %v2564
        %3997 = vmatprep.subr.bf16.mxu0 %v2573
        %3998 = vmatpush1.bf16.msra.mxu0 %v2572
        %3999 = vmatprep.subr.bf16.mxu0 %v2581
        %4000 = vmatpush1.bf16.msra.mxu0 %v2580
        %4001 = vmatprep.subr.bf16.mxu0 %v2589
        %4002 = vmatpush1.bf16.msra.mxu0 %v2588
        %4003 = vmatprep.subr.bf16.mxu0 %v2597
        %4004 = vmatpush1.bf16.msra.mxu0 %v2596
        %4005 = vmatprep.subr.bf16.mxu0 %v2605
        %4006 = vmatpush1.bf16.msra.mxu0 %v2604
        %4007 = vmatprep.subr.bf16.mxu0 %v2613
        %4008 = vmatpush1.bf16.msra.mxu0 %v2612
        %4009 = vmatprep.subr.bf16.mxu0 %v2621
        %4010 = vmatpush1.bf16.msra.mxu0 %v2620
        %4011 = vmatprep.subr.bf16.mxu0 %v2629
        %4012 = vmatpush1.bf16.msra.mxu0 %v2628
        %4013 = vmatprep.subr.bf16.mxu0 %v2637
        %4014 = vmatpush1.bf16.msra.mxu0 %v2636
        %4015 = vmatprep.subr.bf16.mxu0 %v2645
        %4016 = vmatpush1.bf16.msra.mxu0 %v2644
        %4017 = vmatprep.subr.bf16.mxu0 %v2653
        %4018 = vmatpush1.bf16.msra.mxu0 %v2652
        %4019 = vmatprep.subr.bf16.mxu0 %v2661
        %4020 = vmatpush1.bf16.msra.mxu0 %v2660
        %4021 = vmatprep.mubr.bf16.mxu0 %v857
        %4022 = vmatmul.mubr.bf16.gmra.mrb[0].mxu0 %v856
        %v4023 = vpop.f32.mrb[0].mxu0
        %v4024 = vadd.f32 %v3981, %v4023
        %v4025 = vpop.f32.mrb[0].mxu0
        %v4026 = vadd.f32 %v3983, %v4025
        %v4027 = vpop.f32.mrb[0].mxu0
        %v4028 = vadd.f32 %v3985, %v4027
        %v4029 = vpop.f32.mrb[0].mxu0
        %v4030 = vadd.f32 %v3987, %v4029
        %4031 = vdwg.mxu0
        %4032 = vmatprep.subr.bf16.mxu0 %v2669
        %4033 = vmatpush1.bf16.msra.mxu0 %v2668
        %4034 = vmatprep.subr.bf16.mxu0 %v2677
        %4035 = vmatpush1.bf16.msra.mxu0 %v2676
        %4036 = vmatprep.subr.bf16.mxu0 %v2685
        %4037 = vmatpush1.bf16.msra.mxu0 %v2684
        %4038 = vmatprep.subr.bf16.mxu0 %v2693
        %4039 = vmatpush1.bf16.msra.mxu0 %v2692
        %4040 = vmatprep.subr.bf16.mxu0 %v2701
        %4041 = vmatpush1.bf16.msra.mxu0 %v2700
        %4042 = vmatprep.subr.bf16.mxu0 %v2709
        %4043 = vmatpush1.bf16.msra.mxu0 %v2708
        %4044 = vmatprep.subr.bf16.mxu0 %v2717
        %4045 = vmatpush1.bf16.msra.mxu0 %v2716
        %4046 = vmatprep.subr.bf16.mxu0 %v2725
        %4047 = vmatpush1.bf16.msra.mxu0 %v2724
        %4048 = vmatprep.subr.bf16.mxu0 %v2733
        %4049 = vmatpush1.bf16.msra.mxu0 %v2732
        %4050 = vmatprep.subr.bf16.mxu0 %v2741
        %4051 = vmatpush1.bf16.msra.mxu0 %v2740
        %4052 = vmatprep.subr.bf16.mxu0 %v2749
        %4053 = vmatpush1.bf16.msra.mxu0 %v2748
        %4054 = vmatprep.subr.bf16.mxu0 %v2757
        %4055 = vmatpush1.bf16.msra.mxu0 %v2756
        %4056 = vmatprep.subr.bf16.mxu0 %v2765
        %4057 = vmatpush1.bf16.msra.mxu0 %v2764
        %4058 = vmatprep.subr.bf16.mxu0 %v2773
        %4059 = vmatpush1.bf16.msra.mxu0 %v2772
        %4060 = vmatprep.subr.bf16.mxu0 %v2781
        %4061 = vmatpush1.bf16.msra.mxu0 %v2780
        %4062 = vmatprep.subr.bf16.mxu0 %v2789
        %4063 = vmatpush1.bf16.msra.mxu0 %v2788
        %4064 = vmatprep.mubr.bf16.mxu0 %v859
        %4065 = vmatmul.mubr.bf16.gmra.mrb[0].mxu0 %v858
        %v4066 = vpop.f32.mrb[0].mxu0
        %v4067 = vadd.f32 %v4024, %v4066
        %v4068 = vpop.f32.mrb[0].mxu0
        %v4069 = vadd.f32 %v4026, %v4068
        %v4070 = vpop.f32.mrb[0].mxu0
        %v4071 = vadd.f32 %v4028, %v4070
        %v4072 = vpop.f32.mrb[0].mxu0
        %v4073 = vadd.f32 %v4030, %v4072
        %4074 = vdwg.mxu0
        %4075 = vmatprep.subr.bf16.mxu0 %v2797
        %4076 = vmatpush1.bf16.msra.mxu0 %v2796
        %4077 = vmatprep.subr.bf16.mxu0 %v2805
        %4078 = vmatpush1.bf16.msra.mxu0 %v2804
        %4079 = vmatprep.subr.bf16.mxu0 %v2813
        %4080 = vmatpush1.bf16.msra.mxu0 %v2812
        %4081 = vmatprep.subr.bf16.mxu0 %v2821
        %4082 = vmatpush1.bf16.msra.mxu0 %v2820
        %4083 = vmatprep.subr.bf16.mxu0 %v2829
        %4084 = vmatpush1.bf16.msra.mxu0 %v2828
        %4085 = vmatprep.subr.bf16.mxu0 %v2837
        %4086 = vmatpush1.bf16.msra.mxu0 %v2836
        %4087 = vmatprep.subr.bf16.mxu0 %v2845
        %4088 = vmatpush1.bf16.msra.mxu0 %v2844
        %4089 = vmatprep.subr.bf16.mxu0 %v2853
        %4090 = vmatpush1.bf16.msra.mxu0 %v2852
        %4091 = vmatprep.subr.bf16.mxu0 %v2861
        %4092 = vmatpush1.bf16.msra.mxu0 %v2860
        %4093 = vmatprep.subr.bf16.mxu0 %v2869
        %4094 = vmatpush1.bf16.msra.mxu0 %v2868
        %4095 = vmatprep.subr.bf16.mxu0 %v2877
        %4096 = vmatpush1.bf16.msra.mxu0 %v2876
        %4097 = vmatprep.subr.bf16.mxu0 %v2885
        %4098 = vmatpush1.bf16.msra.mxu0 %v2884
        %4099 = vmatprep.subr.bf16.mxu0 %v2893
        %4100 = vmatpush1.bf16.msra.mxu0 %v2892
        %4101 = vmatprep.subr.bf16.mxu0 %v2901
        %4102 = vmatpush1.bf16.msra.mxu0 %v2900
        %4103 = vmatprep.subr.bf16.mxu0 %v2909
        %4104 = vmatpush1.bf16.msra.mxu0 %v2908
        %4105 = vmatprep.subr.bf16.mxu0 %v2917
        %4106 = vmatpush1.bf16.msra.mxu0 %v2916
        %4107 = vmatprep.mubr.bf16.mxu0 %v861
        %4108 = vmatmul.mubr.bf16.gmra.mrb[0].mxu0 %v860
        %v4109 = vpop.f32.mrb[0].mxu0
        %v4110 = vadd.f32 %v4067, %v4109
        %v4111 = vpop.f32.mrb[0].mxu0
        %v4112 = vadd.f32 %v4069, %v4111
        %v4113 = vpop.f32.mrb[0].mxu0
        %v4114 = vadd.f32 %v4071, %v4113
        %v4115 = vpop.f32.mrb[0].mxu0
        %v4116 = vadd.f32 %v4073, %v4115
        %4117 = vdwg.mxu0
        %v4118 = vmul.f32 %v3594, %v3594
        %v4119 = vmul.f32 %v3596, %v3596
        %v4120 = vmul.f32 %v3766, %v3766
        %v4121 = vmul.f32 %v3768, %v3768
        %v4122 = vmul.f32 %v3938, %v3938
        %v4123 = vmul.f32 %v3940, %v3940
        %v4124 = vmul.f32 %v4110, %v4110
        %v4125 = vmul.f32 %v4112, %v4112
        %v4126 = vmul.f32 %v3598, %v3598
        %v4127 = vmul.f32 %v3600, %v3600
        %v4128 = vmul.f32 %v3770, %v3770
        %v4129 = vmul.f32 %v3772, %v3772
        %v4130 = vmul.f32 %v3942, %v3942
        %v4131 = vmul.f32 %v3944, %v3944
        %v4132 = vmul.f32 %v4114, %v4114
        %v4133 = vmul.f32 %v4116, %v4116
        %v4134 = vpack.c.bf16 %v4126, %v4118
        %v4135 = vpack.c.bf16 %v4127, %v4119
        %v4136 = vpack.c.bf16 %v4128, %v4120
        %v4137 = vpack.c.bf16 %v4129, %v4121
        %v4138 = vpack.c.bf16 %v4130, %v4122
        %v4139 = vpack.c.bf16 %v4131, %v4123
        %v4140 = vpack.c.bf16 %v4132, %v4124
        %v4141 = vpack.c.bf16 %v4133, %v4125
        %v4142 = vld [vmem:[#allocation9] sm:$0xf]
        %v4143 = vld [vmem:[#allocation9 + $0x4] sm:$0xf]
        %v4144 = vld [vmem:[#allocation9 + $0x8] sm:$0xf]
        %v4145 = vld [vmem:[#allocation9 + $0xc] sm:$0xf]
        %v4146 = vld [vmem:[#allocation9 + $0x10] sm:$0xf]
        %v4147 = vld [vmem:[#allocation9 + $0x14] sm:$0xf]
        %v4148 = vld [vmem:[#allocation9 + $0x18] sm:$0xf]
        %v4149 = vld [vmem:[#allocation9 + $0x1c] sm:$0xf]
        %v4150 = vld [vmem:[#allocation9 + $0x20] sm:$0xf]
        %v4151 = vld [vmem:[#allocation9 + $0x24] sm:$0xf]
        %v4152 = vld [vmem:[#allocation9 + $0x28] sm:$0xf]
        %v4153 = vld [vmem:[#allocation9 + $0x2c] sm:$0xf]
        %v4154 = vld [vmem:[#allocation9 + $0x30] sm:$0xf]
        %v4155 = vld [vmem:[#allocation9 + $0x34] sm:$0xf]
        %v4156 = vld [vmem:[#allocation9 + $0x38] sm:$0xf]
        %v4157 = vld [vmem:[#allocation9 + $0x3c] sm:$0xf]
        %v4158 = vld [vmem:[#allocation9 + $0x40] sm:$0xf]
        %v4159 = vld [vmem:[#allocation9 + $0x44] sm:$0xf]
        %v4160 = vld [vmem:[#allocation9 + $0x48] sm:$0xf]
        %v4161 = vld [vmem:[#allocation9 + $0x4c] sm:$0xf]
        %v4162 = vld [vmem:[#allocation9 + $0x50] sm:$0xf]
        %v4163 = vld [vmem:[#allocation9 + $0x54] sm:$0xf]
        %v4164 = vld [vmem:[#allocation9 + $0x58] sm:$0xf]
        %v4165 = vld [vmem:[#allocation9 + $0x5c] sm:$0xf]
        %v4166 = vld [vmem:[#allocation9 + $0x60] sm:$0xf]
        %v4167 = vld [vmem:[#allocation9 + $0x64] sm:$0xf]
        %v4168 = vld [vmem:[#allocation9 + $0x68] sm:$0xf]
        %v4169 = vld [vmem:[#allocation9 + $0x6c] sm:$0xf]
        %v4170 = vld [vmem:[#allocation9 + $0x70] sm:$0xf]
        %v4171 = vld [vmem:[#allocation9 + $0x74] sm:$0xf]
        %v4172 = vld [vmem:[#allocation9 + $0x78] sm:$0xf]
        %v4173 = vld [vmem:[#allocation9 + $0x7c] sm:$0xf]
        %v4174 = vld [vmem:[#allocation9 + $0x80] sm:$0xf]
        %v4175 = vld [vmem:[#allocation9 + $0x84] sm:$0xf]
        %v4176 = vld [vmem:[#allocation9 + $0x88] sm:$0xf]
        %v4177 = vld [vmem:[#allocation9 + $0x8c] sm:$0xf]
        %v4178 = vld [vmem:[#allocation9 + $0x90] sm:$0xf]
        %v4179 = vld [vmem:[#allocation9 + $0x94] sm:$0xf]
        %v4180 = vld [vmem:[#allocation9 + $0x98] sm:$0xf]
        %v4181 = vld [vmem:[#allocation9 + $0x9c] sm:$0xf]
        %v4182 = vld [vmem:[#allocation9 + $0xa0] sm:$0xf]
        %v4183 = vld [vmem:[#allocation9 + $0xa4] sm:$0xf]
        %v4184 = vld [vmem:[#allocation9 + $0xa8] sm:$0xf]
        %v4185 = vld [vmem:[#allocation9 + $0xac] sm:$0xf]
        %v4186 = vld [vmem:[#allocation9 + $0xb0] sm:$0xf]
        %v4187 = vld [vmem:[#allocation9 + $0xb4] sm:$0xf]
        %v4188 = vld [vmem:[#allocation9 + $0xb8] sm:$0xf]
        %v4189 = vld [vmem:[#allocation9 + $0xbc] sm:$0xf]
        %v4190 = vld [vmem:[#allocation9 + $0xc0] sm:$0xf]
        %v4191 = vld [vmem:[#allocation9 + $0xc4] sm:$0xf]
        %v4192 = vld [vmem:[#allocation9 + $0xc8] sm:$0xf]
        %v4193 = vld [vmem:[#allocation9 + $0xcc] sm:$0xf]
        %v4194 = vld [vmem:[#allocation9 + $0xd0] sm:$0xf]
        %v4195 = vld [vmem:[#allocation9 + $0xd4] sm:$0xf]
        %v4196 = vld [vmem:[#allocation9 + $0xd8] sm:$0xf]
        %v4197 = vld [vmem:[#allocation9 + $0xdc] sm:$0xf]
        %v4198 = vld [vmem:[#allocation9 + $0xe0] sm:$0xf]
        %v4199 = vld [vmem:[#allocation9 + $0xe4] sm:$0xf]
        %v4200 = vld [vmem:[#allocation9 + $0xe8] sm:$0xf]
        %v4201 = vld [vmem:[#allocation9 + $0xec] sm:$0xf]
        %v4202 = vld [vmem:[#allocation9 + $0xf0] sm:$0xf]
        %v4203 = vld [vmem:[#allocation9 + $0xf4] sm:$0xf]
        %v4204 = vld [vmem:[#allocation9 + $0xf8] sm:$0xf]
        %v4205 = vld [vmem:[#allocation9 + $0xfc] sm:$0xf]
        %v4206 = vld [vmem:[#allocation9 + $0x100] sm:$0xf]
        %v4207 = vld [vmem:[#allocation9 + $0x104] sm:$0xf]
        %v4208 = vld [vmem:[#allocation9 + $0x108] sm:$0xf]
        %v4209 = vld [vmem:[#allocation9 + $0x10c] sm:$0xf]
        %v4210 = vld [vmem:[#allocation9 + $0x110] sm:$0xf]
        %v4211 = vld [vmem:[#allocation9 + $0x114] sm:$0xf]
        %v4212 = vld [vmem:[#allocation9 + $0x118] sm:$0xf]
        %v4213 = vld [vmem:[#allocation9 + $0x11c] sm:$0xf]
        %v4214 = vld [vmem:[#allocation9 + $0x120] sm:$0xf]
        %v4215 = vld [vmem:[#allocation9 + $0x124] sm:$0xf]
        %v4216 = vld [vmem:[#allocation9 + $0x128] sm:$0xf]
        %v4217 = vld [vmem:[#allocation9 + $0x12c] sm:$0xf]
        %v4218 = vld [vmem:[#allocation9 + $0x130] sm:$0xf]
        %v4219 = vld [vmem:[#allocation9 + $0x134] sm:$0xf]
        %v4220 = vld [vmem:[#allocation9 + $0x138] sm:$0xf]
        %v4221 = vld [vmem:[#allocation9 + $0x13c] sm:$0xf]
        %v4222 = vld [vmem:[#allocation9 + $0x140] sm:$0xf]
        %v4223 = vld [vmem:[#allocation9 + $0x144] sm:$0xf]
        %v4224 = vld [vmem:[#allocation9 + $0x148] sm:$0xf]
        %v4225 = vld [vmem:[#allocation9 + $0x14c] sm:$0xf]
        %v4226 = vld [vmem:[#allocation9 + $0x150] sm:$0xf]
        %v4227 = vld [vmem:[#allocation9 + $0x154] sm:$0xf]
        %v4228 = vld [vmem:[#allocation9 + $0x158] sm:$0xf]
        %v4229 = vld [vmem:[#allocation9 + $0x15c] sm:$0xf]
        %v4230 = vld [vmem:[#allocation9 + $0x160] sm:$0xf]
        %v4231 = vld [vmem:[#allocation9 + $0x164] sm:$0xf]
        %v4232 = vld [vmem:[#allocation9 + $0x168] sm:$0xf]
        %v4233 = vld [vmem:[#allocation9 + $0x16c] sm:$0xf]
        %v4234 = vld [vmem:[#allocation9 + $0x170] sm:$0xf]
        %v4235 = vld [vmem:[#allocation9 + $0x174] sm:$0xf]
        %v4236 = vld [vmem:[#allocation9 + $0x178] sm:$0xf]
        %v4237 = vld [vmem:[#allocation9 + $0x17c] sm:$0xf]
        %v4238 = vld [vmem:[#allocation9 + $0x180] sm:$0xf]
        %v4239 = vld [vmem:[#allocation9 + $0x184] sm:$0xf]
        %v4240 = vld [vmem:[#allocation9 + $0x188] sm:$0xf]
        %v4241 = vld [vmem:[#allocation9 + $0x18c] sm:$0xf]
        %v4242 = vld [vmem:[#allocation9 + $0x190] sm:$0xf]
        %v4243 = vld [vmem:[#allocation9 + $0x194] sm:$0xf]
        %v4244 = vld [vmem:[#allocation9 + $0x198] sm:$0xf]
        %v4245 = vld [vmem:[#allocation9 + $0x19c] sm:$0xf]
        %v4246 = vld [vmem:[#allocation9 + $0x1a0] sm:$0xf]
        %v4247 = vld [vmem:[#allocation9 + $0x1a4] sm:$0xf]
        %v4248 = vld [vmem:[#allocation9 + $0x1a8] sm:$0xf]
        %v4249 = vld [vmem:[#allocation9 + $0x1ac] sm:$0xf]
        %v4250 = vld [vmem:[#allocation9 + $0x1b0] sm:$0xf]
        %v4251 = vld [vmem:[#allocation9 + $0x1b4] sm:$0xf]
        %v4252 = vld [vmem:[#allocation9 + $0x1b8] sm:$0xf]
        %v4253 = vld [vmem:[#allocation9 + $0x1bc] sm:$0xf]
        %v4254 = vld [vmem:[#allocation9 + $0x1c0] sm:$0xf]
        %v4255 = vld [vmem:[#allocation9 + $0x1c4] sm:$0xf]
        %v4256 = vld [vmem:[#allocation9 + $0x1c8] sm:$0xf]
        %v4257 = vld [vmem:[#allocation9 + $0x1cc] sm:$0xf]
        %v4258 = vld [vmem:[#allocation9 + $0x1d0] sm:$0xf]
        %v4259 = vld [vmem:[#allocation9 + $0x1d4] sm:$0xf]
        %v4260 = vld [vmem:[#allocation9 + $0x1d8] sm:$0xf]
        %v4261 = vld [vmem:[#allocation9 + $0x1dc] sm:$0xf]
        %v4262 = vld [vmem:[#allocation9 + $0x1e0] sm:$0xf]
        %v4263 = vld [vmem:[#allocation9 + $0x1e4] sm:$0xf]
        %v4264 = vld [vmem:[#allocation9 + $0x1e8] sm:$0xf]
        %v4265 = vld [vmem:[#allocation9 + $0x1ec] sm:$0xf]
        %v4266 = vld [vmem:[#allocation9 + $0x1f0] sm:$0xf]
        %v4267 = vld [vmem:[#allocation9 + $0x1f4] sm:$0xf]
        %v4268 = vld [vmem:[#allocation9 + $0x1f8] sm:$0xf]
        %v4269 = vld [vmem:[#allocation9 + $0x1fc] sm:$0xf]
        %v4398 = vunpack.c.l.b16 %v4142
        %v4399 = vunpack.c.l.b16 %v4143
        %v4400 = vunpack.c.l.b16 %v4144
        %v4401 = vunpack.c.l.b16 %v4145
        %v4402 = vunpack.c.l.b16 %v4146
        %v4403 = vunpack.c.l.b16 %v4147
        %v4404 = vunpack.c.l.b16 %v4148
        %v4405 = vunpack.c.l.b16 %v4149
        %v4406 = vunpack.c.l.b16 %v4150
        %v4407 = vunpack.c.l.b16 %v4151
        %v4408 = vunpack.c.l.b16 %v4152
        %v4409 = vunpack.c.l.b16 %v4153
        %v4410 = vunpack.c.l.b16 %v4154
        %v4411 = vunpack.c.l.b16 %v4155
        %v4412 = vunpack.c.l.b16 %v4156
        %v4413 = vunpack.c.l.b16 %v4157
        %v4414 = vunpack.c.l.b16 %v4158
        %v4415 = vunpack.c.l.b16 %v4159
        %v4416 = vunpack.c.l.b16 %v4160
        %v4417 = vunpack.c.l.b16 %v4161
        %v4418 = vunpack.c.l.b16 %v4162
        %v4419 = vunpack.c.l.b16 %v4163
        %v4420 = vunpack.c.l.b16 %v4164
        %v4421 = vunpack.c.l.b16 %v4165
        %v4422 = vunpack.c.l.b16 %v4166
        %v4423 = vunpack.c.l.b16 %v4167
        %v4424 = vunpack.c.l.b16 %v4168
        %v4425 = vunpack.c.l.b16 %v4169
        %v4426 = vunpack.c.l.b16 %v4170
        %v4427 = vunpack.c.l.b16 %v4171
        %v4428 = vunpack.c.l.b16 %v4172
        %v4429 = vunpack.c.l.b16 %v4173
        %v4430 = vunpack.c.l.b16 %v4174
        %v4431 = vunpack.c.l.b16 %v4175
        %v4432 = vunpack.c.l.b16 %v4176
        %v4433 = vunpack.c.l.b16 %v4177
        %v4434 = vunpack.c.l.b16 %v4178
        %v4435 = vunpack.c.l.b16 %v4179
        %v4436 = vunpack.c.l.b16 %v4180
        %v4437 = vunpack.c.l.b16 %v4181
        %v4438 = vunpack.c.l.b16 %v4182
        %v4439 = vunpack.c.l.b16 %v4183
        %v4440 = vunpack.c.l.b16 %v4184
        %v4441 = vunpack.c.l.b16 %v4185
        %v4442 = vunpack.c.l.b16 %v4186
        %v4443 = vunpack.c.l.b16 %v4187
        %v4444 = vunpack.c.l.b16 %v4188
        %v4445 = vunpack.c.l.b16 %v4189
        %v4446 = vunpack.c.l.b16 %v4190
        %v4447 = vunpack.c.l.b16 %v4191
        %v4448 = vunpack.c.l.b16 %v4192
        %v4449 = vunpack.c.l.b16 %v4193
        %v4450 = vunpack.c.l.b16 %v4194
        %v4451 = vunpack.c.l.b16 %v4195
        %v4452 = vunpack.c.l.b16 %v4196
        %v4453 = vunpack.c.l.b16 %v4197
        %v4454 = vunpack.c.l.b16 %v4198
        %v4455 = vunpack.c.l.b16 %v4199
        %v4456 = vunpack.c.l.b16 %v4200
        %v4457 = vunpack.c.l.b16 %v4201
        %v4458 = vunpack.c.l.b16 %v4202
        %v4459 = vunpack.c.l.b16 %v4203
        %v4460 = vunpack.c.l.b16 %v4204
        %v4461 = vunpack.c.l.b16 %v4205
        %v4462 = vunpack.c.l.b16 %v4206
        %v4463 = vunpack.c.l.b16 %v4207
        %v4464 = vunpack.c.l.b16 %v4208
        %v4465 = vunpack.c.l.b16 %v4209
        %v4466 = vunpack.c.l.b16 %v4210
        %v4467 = vunpack.c.l.b16 %v4211
        %v4468 = vunpack.c.l.b16 %v4212
        %v4469 = vunpack.c.l.b16 %v4213
        %v4470 = vunpack.c.l.b16 %v4214
        %v4471 = vunpack.c.l.b16 %v4215
        %v4472 = vunpack.c.l.b16 %v4216
        %v4473 = vunpack.c.l.b16 %v4217
        %v4474 = vunpack.c.l.b16 %v4218
        %v4475 = vunpack.c.l.b16 %v4219
        %v4476 = vunpack.c.l.b16 %v4220
        %v4477 = vunpack.c.l.b16 %v4221
        %v4478 = vunpack.c.l.b16 %v4222
        %v4479 = vunpack.c.l.b16 %v4223
        %v4480 = vunpack.c.l.b16 %v4224
        %v4481 = vunpack.c.l.b16 %v4225
        %v4482 = vunpack.c.l.b16 %v4226
        %v4483 = vunpack.c.l.b16 %v4227
        %v4484 = vunpack.c.l.b16 %v4228
        %v4485 = vunpack.c.l.b16 %v4229
        %v4486 = vunpack.c.l.b16 %v4230
        %v4487 = vunpack.c.l.b16 %v4231
        %v4488 = vunpack.c.l.b16 %v4232
        %v4489 = vunpack.c.l.b16 %v4233
        %v4490 = vunpack.c.l.b16 %v4234
        %v4491 = vunpack.c.l.b16 %v4235
        %v4492 = vunpack.c.l.b16 %v4236
        %v4493 = vunpack.c.l.b16 %v4237
        %v4494 = vunpack.c.l.b16 %v4238
        %v4495 = vunpack.c.l.b16 %v4239
        %v4496 = vunpack.c.l.b16 %v4240
        %v4497 = vunpack.c.l.b16 %v4241
        %v4498 = vunpack.c.l.b16 %v4242
        %v4499 = vunpack.c.l.b16 %v4243
        %v4500 = vunpack.c.l.b16 %v4244
        %v4501 = vunpack.c.l.b16 %v4245
        %v4502 = vunpack.c.l.b16 %v4246
        %v4503 = vunpack.c.l.b16 %v4247
        %v4504 = vunpack.c.l.b16 %v4248
        %v4505 = vunpack.c.l.b16 %v4249
        %v4506 = vunpack.c.l.b16 %v4250
        %v4507 = vunpack.c.l.b16 %v4251
        %v4508 = vunpack.c.l.b16 %v4252
        %v4509 = vunpack.c.l.b16 %v4253
        %v4510 = vunpack.c.l.b16 %v4254
        %v4511 = vunpack.c.l.b16 %v4255
        %v4512 = vunpack.c.l.b16 %v4256
        %v4513 = vunpack.c.l.b16 %v4257
        %v4514 = vunpack.c.l.b16 %v4258
        %v4515 = vunpack.c.l.b16 %v4259
        %v4516 = vunpack.c.l.b16 %v4260
        %v4517 = vunpack.c.l.b16 %v4261
        %v4518 = vunpack.c.l.b16 %v4262
        %v4519 = vunpack.c.l.b16 %v4263
        %v4520 = vunpack.c.l.b16 %v4264
        %v4521 = vunpack.c.l.b16 %v4265
        %v4522 = vunpack.c.l.b16 %v4266
        %v4523 = vunpack.c.l.b16 %v4267
        %v4524 = vunpack.c.l.b16 %v4268
        %v4525 = vunpack.c.l.b16 %v4269
        %v4526 = vpack.c.b16 %v4399, %v4398
        %v4527 = vpack.c.b16 %v4401, %v4400
        %v4528 = vpack.c.b16 %v4403, %v4402
        %v4529 = vpack.c.b16 %v4405, %v4404
        %v4530 = vpack.c.b16 %v4407, %v4406
        %v4531 = vpack.c.b16 %v4409, %v4408
        %v4532 = vpack.c.b16 %v4411, %v4410
        %v4533 = vpack.c.b16 %v4413, %v4412
        %v4534 = vpack.c.b16 %v4415, %v4414
        %v4535 = vpack.c.b16 %v4417, %v4416
        %v4536 = vpack.c.b16 %v4419, %v4418
        %v4537 = vpack.c.b16 %v4421, %v4420
        %v4538 = vpack.c.b16 %v4423, %v4422
        %v4539 = vpack.c.b16 %v4425, %v4424
        %v4540 = vpack.c.b16 %v4427, %v4426
        %v4541 = vpack.c.b16 %v4429, %v4428
        %v4542 = vpack.c.b16 %v4431, %v4430
        %v4543 = vpack.c.b16 %v4433, %v4432
        %v4544 = vpack.c.b16 %v4435, %v4434
        %v4545 = vpack.c.b16 %v4437, %v4436
        %v4546 = vpack.c.b16 %v4439, %v4438
        %v4547 = vpack.c.b16 %v4441, %v4440
        %v4548 = vpack.c.b16 %v4443, %v4442
        %v4549 = vpack.c.b16 %v4445, %v4444
        %v4550 = vpack.c.b16 %v4447, %v4446
        %v4551 = vpack.c.b16 %v4449, %v4448
        %v4552 = vpack.c.b16 %v4451, %v4450
        %v4553 = vpack.c.b16 %v4453, %v4452
        %v4554 = vpack.c.b16 %v4455, %v4454
        %v4555 = vpack.c.b16 %v4457, %v4456
        %v4556 = vpack.c.b16 %v4459, %v4458
        %v4557 = vpack.c.b16 %v4461, %v4460
        %v4558 = vpack.c.b16 %v4463, %v4462
        %v4559 = vpack.c.b16 %v4465, %v4464
        %v4560 = vpack.c.b16 %v4467, %v4466
        %v4561 = vpack.c.b16 %v4469, %v4468
        %v4562 = vpack.c.b16 %v4471, %v4470
        %v4563 = vpack.c.b16 %v4473, %v4472
        %v4564 = vpack.c.b16 %v4475, %v4474
        %v4565 = vpack.c.b16 %v4477, %v4476
        %v4566 = vpack.c.b16 %v4479, %v4478
        %v4567 = vpack.c.b16 %v4481, %v4480
        %v4568 = vpack.c.b16 %v4483, %v4482
        %v4569 = vpack.c.b16 %v4485, %v4484
        %v4570 = vpack.c.b16 %v4487, %v4486
        %v4571 = vpack.c.b16 %v4489, %v4488
        %v4572 = vpack.c.b16 %v4491, %v4490
        %v4573 = vpack.c.b16 %v4493, %v4492
        %v4574 = vpack.c.b16 %v4495, %v4494
        %v4575 = vpack.c.b16 %v4497, %v4496
        %v4576 = vpack.c.b16 %v4499, %v4498
        %v4577 = vpack.c.b16 %v4501, %v4500
        %v4578 = vpack.c.b16 %v4503, %v4502
        %v4579 = vpack.c.b16 %v4505, %v4504
        %v4580 = vpack.c.b16 %v4507, %v4506
        %v4581 = vpack.c.b16 %v4509, %v4508
        %v4582 = vpack.c.b16 %v4511, %v4510
        %v4583 = vpack.c.b16 %v4513, %v4512
        %v4584 = vpack.c.b16 %v4515, %v4514
        %v4585 = vpack.c.b16 %v4517, %v4516
        %v4586 = vpack.c.b16 %v4519, %v4518
        %v4587 = vpack.c.b16 %v4521, %v4520
        %v4588 = vpack.c.b16 %v4523, %v4522
        %v4589 = vpack.c.b16 %v4525, %v4524
        %4654 = vmatprep.subr.bf16.mxu0 0
        %4655 = vmatpush1.bf16.msra.mxu0 %v4526
        %4656 = vmatprep.subr.bf16.mxu0 0
        %4657 = vmatpush1.bf16.msra.mxu0 %v4527
        %4658 = vmatprep.subr.bf16.mxu0 0
        %4659 = vmatpush1.bf16.msra.mxu0 %v4528
        %4660 = vmatprep.subr.bf16.mxu0 0
        %4661 = vmatpush1.bf16.msra.mxu0 %v4529
        %4662 = vmatprep.subr.bf16.mxu0 0
        %4663 = vmatpush1.bf16.msra.mxu0 %v4530
        %4664 = vmatprep.subr.bf16.mxu0 0
        %4665 = vmatpush1.bf16.msra.mxu0 %v4531
        %4666 = vmatprep.subr.bf16.mxu0 0
        %4667 = vmatpush1.bf16.msra.mxu0 %v4532
        %4668 = vmatprep.subr.bf16.mxu0 0
        %4669 = vmatpush1.bf16.msra.mxu0 %v4533
        %4670 = vmatprep.subr.bf16.mxu0 0
        %4671 = vmatpush1.bf16.msra.mxu0 %v4534
        %4672 = vmatprep.subr.bf16.mxu0 0
        %4673 = vmatpush1.bf16.msra.mxu0 %v4535
        %4674 = vmatprep.subr.bf16.mxu0 0
        %4675 = vmatpush1.bf16.msra.mxu0 %v4536
        %4676 = vmatprep.subr.bf16.mxu0 0
        %4677 = vmatpush1.bf16.msra.mxu0 %v4537
        %4678 = vmatprep.subr.bf16.mxu0 0
        %4679 = vmatpush1.bf16.msra.mxu0 %v4538
        %4680 = vmatprep.subr.bf16.mxu0 0
        %4681 = vmatpush1.bf16.msra.mxu0 %v4539
        %4682 = vmatprep.subr.bf16.mxu0 0
        %4683 = vmatpush1.bf16.msra.mxu0 %v4540
        %4684 = vmatprep.subr.bf16.mxu0 0
        %4685 = vmatpush1.bf16.msra.mxu0 %v4541
        %4686 = vmatprep.mubr.bf16.mxu0 %v4135
        %4687 = vmatmul.mubr.bf16.gmra.mrb[0].mxu0 %v4134
        %v4688 = vpop.f32.mrb[0].mxu0
        %v4689 = vadd.f32 0.0, %v4688
        %v4690 = vpop.f32.mrb[0].mxu0
        %v4691 = vpop.f32.mrb[0].mxu0
        %v4692 = vadd.f32 0.0, %v4691
        %v4693 = vpop.f32.mrb[0].mxu0
        %4694 = vdwg.mxu0
        %4695 = vmatprep.subr.bf16.mxu0 0
        %4696 = vmatpush1.bf16.msra.mxu0 %v4542
        %4697 = vmatprep.subr.bf16.mxu0 0
        %4698 = vmatpush1.bf16.msra.mxu0 %v4543
        %4699 = vmatprep.subr.bf16.mxu0 0
        %4700 = vmatpush1.bf16.msra.mxu0 %v4544
        %4701 = vmatprep.subr.bf16.mxu0 0
        %4702 = vmatpush1.bf16.msra.mxu0 %v4545
        %4703 = vmatprep.subr.bf16.mxu0 0
        %4704 = vmatpush1.bf16.msra.mxu0 %v4546
        %4705 = vmatprep.subr.bf16.mxu0 0
        %4706 = vmatpush1.bf16.msra.mxu0 %v4547
        %4707 = vmatprep.subr.bf16.mxu0 0
        %4708 = vmatpush1.bf16.msra.mxu0 %v4548
        %4709 = vmatprep.subr.bf16.mxu0 0
        %4710 = vmatpush1.bf16.msra.mxu0 %v4549
        %4711 = vmatprep.subr.bf16.mxu0 0
        %4712 = vmatpush1.bf16.msra.mxu0 %v4550
        %4713 = vmatprep.subr.bf16.mxu0 0
        %4714 = vmatpush1.bf16.msra.mxu0 %v4551
        %4715 = vmatprep.subr.bf16.mxu0 0
        %4716 = vmatpush1.bf16.msra.mxu0 %v4552
        %4717 = vmatprep.subr.bf16.mxu0 0
        %4718 = vmatpush1.bf16.msra.mxu0 %v4553
        %4719 = vmatprep.subr.bf16.mxu0 0
        %4720 = vmatpush1.bf16.msra.mxu0 %v4554
        %4721 = vmatprep.subr.bf16.mxu0 0
        %4722 = vmatpush1.bf16.msra.mxu0 %v4555
        %4723 = vmatprep.subr.bf16.mxu0 0
        %4724 = vmatpush1.bf16.msra.mxu0 %v4556
        %4725 = vmatprep.subr.bf16.mxu0 0
        %4726 = vmatpush1.bf16.msra.mxu0 %v4557
        %4727 = vmatprep.mubr.bf16.mxu0 %v4137
        %4728 = vmatmul.mubr.bf16.gmra.mrb[0].mxu0 %v4136
        %v4729 = vpop.f32.mrb[0].mxu0
        %v4730 = vadd.f32 %v4689, %v4729
        %v4731 = vpop.f32.mrb[0].mxu0
        %v4732 = vpop.f32.mrb[0].mxu0
        %v4733 = vadd.f32 %v4692, %v4732
        %v4734 = vpop.f32.mrb[0].mxu0
        %4735 = vdwg.mxu0
        %4736 = vmatprep.subr.bf16.mxu0 0
        %4737 = vmatpush1.bf16.msra.mxu0 %v4558
        %4738 = vmatprep.subr.bf16.mxu0 0
        %4739 = vmatpush1.bf16.msra.mxu0 %v4559
        %4740 = vmatprep.subr.bf16.mxu0 0
        %4741 = vmatpush1.bf16.msra.mxu0 %v4560
        %4742 = vmatprep.subr.bf16.mxu0 0
        %4743 = vmatpush1.bf16.msra.mxu0 %v4561
        %4744 = vmatprep.subr.bf16.mxu0 0
        %4745 = vmatpush1.bf16.msra.mxu0 %v4562
        %4746 = vmatprep.subr.bf16.mxu0 0
        %4747 = vmatpush1.bf16.msra.mxu0 %v4563
        %4748 = vmatprep.subr.bf16.mxu0 0
        %4749 = vmatpush1.bf16.msra.mxu0 %v4564
        %4750 = vmatprep.subr.bf16.mxu0 0
        %4751 = vmatpush1.bf16.msra.mxu0 %v4565
        %4752 = vmatprep.subr.bf16.mxu0 0
        %4753 = vmatpush1.bf16.msra.mxu0 %v4566
        %4754 = vmatprep.subr.bf16.mxu0 0
        %4755 = vmatpush1.bf16.msra.mxu0 %v4567
        %4756 = vmatprep.subr.bf16.mxu0 0
        %4757 = vmatpush1.bf16.msra.mxu0 %v4568
        %4758 = vmatprep.subr.bf16.mxu0 0
        %4759 = vmatpush1.bf16.msra.mxu0 %v4569
        %4760 = vmatprep.subr.bf16.mxu0 0
        %4761 = vmatpush1.bf16.msra.mxu0 %v4570
        %4762 = vmatprep.subr.bf16.mxu0 0
        %4763 = vmatpush1.bf16.msra.mxu0 %v4571
        %4764 = vmatprep.subr.bf16.mxu0 0
        %4765 = vmatpush1.bf16.msra.mxu0 %v4572
        %4766 = vmatprep.subr.bf16.mxu0 0
        %4767 = vmatpush1.bf16.msra.mxu0 %v4573
        %4768 = vmatprep.mubr.bf16.mxu0 %v4139
        %4769 = vmatmul.mubr.bf16.gmra.mrb[0].mxu0 %v4138
        %v4770 = vpop.f32.mrb[0].mxu0
        %v4771 = vadd.f32 %v4730, %v4770
        %v4772 = vpop.f32.mrb[0].mxu0
        %v4773 = vpop.f32.mrb[0].mxu0
        %v4774 = vadd.f32 %v4733, %v4773
        %v4775 = vpop.f32.mrb[0].mxu0
        %4776 = vdwg.mxu0
        %4777 = vmatprep.subr.bf16.mxu0 0
        %4778 = vmatpush1.bf16.msra.mxu0 %v4574
        %4779 = vmatprep.subr.bf16.mxu0 0
        %4780 = vmatpush1.bf16.msra.mxu0 %v4575
        %4781 = vmatprep.subr.bf16.mxu0 0
        %4782 = vmatpush1.bf16.msra.mxu0 %v4576
        %4783 = vmatprep.subr.bf16.mxu0 0
        %4784 = vmatpush1.bf16.msra.mxu0 %v4577
        %4785 = vmatprep.subr.bf16.mxu0 0
        %4786 = vmatpush1.bf16.msra.mxu0 %v4578
        %4787 = vmatprep.subr.bf16.mxu0 0
        %4788 = vmatpush1.bf16.msra.mxu0 %v4579
        %4789 = vmatprep.subr.bf16.mxu0 0
        %4790 = vmatpush1.bf16.msra.mxu0 %v4580
        %4791 = vmatprep.subr.bf16.mxu0 0
        %4792 = vmatpush1.bf16.msra.mxu0 %v4581
        %4793 = vmatprep.subr.bf16.mxu0 0
        %4794 = vmatpush1.bf16.msra.mxu0 %v4582
        %4795 = vmatprep.subr.bf16.mxu0 0
        %4796 = vmatpush1.bf16.msra.mxu0 %v4583
        %4797 = vmatprep.subr.bf16.mxu0 0
        %4798 = vmatpush1.bf16.msra.mxu0 %v4584
        %4799 = vmatprep.subr.bf16.mxu0 0
        %4800 = vmatpush1.bf16.msra.mxu0 %v4585
        %4801 = vmatprep.subr.bf16.mxu0 0
        %4802 = vmatpush1.bf16.msra.mxu0 %v4586
        %4803 = vmatprep.subr.bf16.mxu0 0
        %4804 = vmatpush1.bf16.msra.mxu0 %v4587
        %4805 = vmatprep.subr.bf16.mxu0 0
        %4806 = vmatpush1.bf16.msra.mxu0 %v4588
        %4807 = vmatprep.subr.bf16.mxu0 0
        %4808 = vmatpush1.bf16.msra.mxu0 %v4589
        %4809 = vmatprep.mubr.bf16.mxu0 %v4141
        %4810 = vmatmul.mubr.bf16.gmra.mrb[0].mxu0 %v4140
        %v4811 = vpop.f32.mrb[0].mxu0
        %v4812 = vadd.f32 %v4771, %v4811
        %v4813 = vpop.f32.mrb[0].mxu0
        %v4814 = vpop.f32.mrb[0].mxu0
        %v4815 = vadd.f32 %v4774, %v4814
        %v4816 = vpop.f32.mrb[0].mxu0
        %4817 = vdwg.mxu0
        %4818 = vst [vmem:[%s294] sm:$0xff] %v4812
        %4819 = vst [vmem:[%s294 + $0x8] sm:$0xff] %v4815
        %s4820 = smul.u32 %s32, 16
        %v4821 = vlaneseq
        %v4822 = vshrl.u32 %v4821, 7
        %v4823 = vadd.s32 %v4822, 8
        %v4824 = vstv %s4820
        %v4825 = vadd.s32 %v4824, %v4822
        %v4826 = vadd.s32 %v4824, %v4823
        %vm4827 = vcmp.lt.s32.totalorder %v4825, 11
        %vm4828 = vcmp.lt.s32.totalorder %v4826, 11
        %v4829 = vsel %vm4827, 1, 0
        %v4830 = vsel %vm4828, 1, 0
        %vm4831 = vcmp.eq.s32.totalorder %v4829, 1
        %vm4832 = vcmp.eq.s32.totalorder %v4830, 1
        %v4833 = vsel %vm4831, %v4812, 0.0
        %v4834 = vsel %vm4832, %v4815, 0.0
        %p4835 = scmp.eq.s32.totalorder %s32, 0
        // Predicated region
        $region45: #{tpu_custom_call.1} parent=31 // pred_check
          %p4836 = pneg %p4835
        $region46: #{tpu_custom_call.1} parent=31 // pred_check_branch
          %4838 = sbr.rel (%p4836) target = $region48
        $region47: #{tpu_custom_call.1} parent=31 // pred_region
          %4839 = vst [vmem:[#allocation2] sm:$0x1] 0.0
          %4840 = vst [vmem:[#allocation3] sm:$0x1] 0.0
        $region48: #{tpu_custom_call.1} parent=31 // pred_fallthru
          _
        %v4841 = vld [vmem:[#allocation2] sm:$0x1]
        %v4842 = vadd.f32 %v4833, %v4834
        %v4843 = vrot.slane %v4842, 4
        %v4844 = vadd.f32 %v4842, %v4843
        %v4845 = vrot.slane %v4844, 2
        %v4846 = vadd.f32 %v4844, %v4845
        %v4847 = vrot.slane %v4846, 1
        %v4848 = vadd.f32 %v4846, %v4847
        %v4849 = vadd.f32 %v4841, %v4848
        %4850 = vst [vmem:[#allocation2] sm:$0x1] %v4849
        %v4851 = vld [vmem:[#allocation3] sm:$0x1]
        %v4852 = vmul.f32 %v4833, %v4833
        %v4853 = vmul.f32 %v4834, %v4834
        %v4854 = vadd.f32 %v4852, %v4853
        %v4855 = vrot.slane %v4854, 4
        %v4856 = vadd.f32 %v4854, %v4855
        %v4857 = vrot.slane %v4856, 2
        %v4858 = vadd.f32 %v4856, %v4857
        %v4859 = vrot.slane %v4858, 1
        %v4860 = vadd.f32 %v4858, %v4859
        %v4861 = vadd.f32 %v4851, %v4860
        %4862 = vst [vmem:[#allocation3] sm:$0x1] %v4861
        // Predicated region
        $region49: #{tpu_custom_call.1} parent=31 // pred_check
          %p4863 = pneg %p4835
        $region50: #{tpu_custom_call.1} parent=31 // pred_check_branch
          %4865 = sbr.rel (%p4863) target = $region52
        $region51: #{tpu_custom_call.1} parent=31 // pred_region
          %v4866 = vld [vmem:[#allocation2] sm:$0x1]
          %v4867 = vrcp.pop 11.0
          %v4868 = vmul.f32 %v4866, %v4867
          %v4869 = vld [vmem:[#allocation3] sm:$0x1]
          %v4870 = vmul.f32 %v4866, %v4868
          %v4871 = vsub.f32 %v4869, %v4870
          %v4872 = vmax.f32 %v4871, 0.0
          %v4873 = vrcp.pop 10.0
          %v4874 = vmul.f32 %v4872, %v4873
          %4875 = vst [vmem:[%s300] sm:$0x1] %v4868
          %v4876 = vrsqrt.pop %v4874
          %v4877 = vmul.f32 %v4874, %v4876
          %vm4878 = vcmp.eq.f32.partialorder %v4874, inf
          %v4879 = vsel %vm4878, %v4874, %v4877
          %vm4880 = vcmp.eq.f32.partialorder %v4874, 0.0
          %v4881 = vand.u32 %v4874, 2147483648
          %v4882 = vsel %vm4880, %v4881, %v4879
          %v4883 = vadd.f32 %v4882, 1e-05
          %v4884 = vrcp.pop %v4883
          %v4885 = vmul.f32 1.0, %v4884
          %4886 = vst [vmem:[%s306] sm:$0x1] %v4885
        $region52: #{tpu_custom_call.1} parent=31 // pred_fallthru
          _
        %s4887 = sand.u32 %s119, 1
        %s4888 = scalar_lea.sflag [#allocation6], %s4887
        %s4889 = sand.u32 %s119, 1
        %s4890 = smul.addr %s4889, 16
        %s4891 = scalar_lea.vmem [#allocation10], %s4890
        %s4892 = sand.u32 %s27, 1
        %s4893 = scalar_lea.sflag [#allocation12], %s4892
        %s4894 = sand.u32 %s145, 1
        %s4895 = scalar_lea.vmem [#allocation11], %s4894
        %s4896 = sand.u32 %s27, 1
        %s4897 = scalar_lea.sflag [#allocation12], %s4896
        %s4898 = sand.u32 %s171, 1
        %s4899 = scalar_lea.vmem [#allocation13], %s4898
        // Predicated region
        $region53: #{tpu_custom_call.1} parent=31 // pred_check
          %p4900 = pneg %p129
        $region54: #{tpu_custom_call.1} parent=31 // pred_check_branch
          %4902 = sbr.rel (%p4900) target = $region56
        $region55: #{tpu_custom_call.1} parent=31 // pred_region
          %s4903 = smul.u32 2, %s32
          %s4905 = ssub.s32 256, 256
          %4906 = vsyncadd %s4888, %s4905
          %s4907 = smul.addr %s31, 2
          %s4908 = sadd.s32 %s4903, %s4907
          %s4909 = smul.addr %s4908, 128
          %s4910 = scalar_lea.hbm %s3, %s4909
          %s4911 = sshll.u32 %s4891, 4
          %s4912 = int_to_ptr.vmem [resolvable:$true] %s4911
          %4917 = dma.vmem_to_hbm [thread:$0]  %s4912, 256, %s4910, %s4888, 128, 128, 8
        $region56: #{tpu_custom_call.1} parent=31 // pred_fallthru
          _
        // Predicated region
        $region57: #{tpu_custom_call.1} parent=31 // pred_check
          %p4918 = pneg %p155
        $region58: #{tpu_custom_call.1} parent=31 // pred_check_branch
          %4920 = sbr.rel (%p4918) target = $region60
        $region59: #{tpu_custom_call.1} parent=31 // pred_region
          %s4922 = ssub.s32 16, 16
          %4923 = vsyncadd %s4893, %s4922
          %s4924 = smul.addr %s31, 16
          %s4925 = scalar_lea.hbm %s4, %s4924
          %s4927 = sshll.u32 %s4895, 4
          %s4928 = int_to_ptr.vmem [resolvable:$true] %s4927
          %4930 = dma.vmem_to_hbm [thread:$0]  %s4928, 16, %s4925, %s4893
        $region60: #{tpu_custom_call.1} parent=31 // pred_fallthru
          _
        // Predicated region
        $region61: #{tpu_custom_call.1} parent=31 // pred_check
          %p4931 = pneg %p181
        $region62: #{tpu_custom_call.1} parent=31 // pred_check_branch
          %4933 = sbr.rel (%p4931) target = $region64
        $region63: #{tpu_custom_call.1} parent=31 // pred_region
          %s4935 = ssub.s32 16, 16
          %4936 = vsyncadd %s4897, %s4935
          %s4937 = smul.addr %s31, 16
          %s4938 = scalar_lea.hbm %s5, %s4937
          %s4940 = sshll.u32 %s4899, 4
          %s4941 = int_to_ptr.vmem [resolvable:$true] %s4940
          %4943 = dma.vmem_to_hbm [thread:$0]  %s4941, 16, %s4938, %s4897
        $region64: #{tpu_custom_call.1} parent=31 // pred_fallthru
          _
      $region32: #{tpu_custom_call.1} parent=5 // pred_fallthru
        _
      %p4944 = scmp.le.s32.totalorder 2, %s22
      // Predicated region
      $region65: #{tpu_custom_call.1} parent=5 // pred_check
        %p4945 = pneg %p4944
      $region66: #{tpu_custom_call.1} parent=5 // pred_check_branch
        %4947 = sbr.rel (%p4945) target = $region68
      $region67: #{tpu_custom_call.1} parent=5 // pred_region
        %s4948 = ssub.s32 %s22, 2
        // Predicated region
        $region69: #{tpu_custom_call.1} parent=67 // pred_check
          %p4949 = pneg %p135
        $region70: #{tpu_custom_call.1} parent=67 // pred_check_branch
          %4951 = sbr.rel (%p4949) target = $region72
        $region71: #{tpu_custom_call.1} parent=67 // pred_region
          %s4952 = sand.u32 %s120, 1
          %s4953 = scalar_lea.sflag [#allocation6], %s4952
          %s4954 = sand.u32 %s120, 1
          %s4955 = smul.addr %s4954, 16
          %s4956 = scalar_lea.vmem [#allocation10], %s4955
          %4957 = dma.done %s4953, 256
        $region72: #{tpu_custom_call.1} parent=67 // pred_fallthru
          _
        // Predicated region
        $region73: #{tpu_custom_call.1} parent=67 // pred_check
          %p4958 = pneg %p161
        $region74: #{tpu_custom_call.1} parent=67 // pred_check_branch
          %4960 = sbr.rel (%p4958) target = $region76
        $region75: #{tpu_custom_call.1} parent=67 // pred_region
          %s4961 = sand.u32 %s28, 1
          %s4962 = scalar_lea.sflag [#allocation12], %s4961
          %s4963 = sand.u32 %s146, 1
          %s4964 = scalar_lea.vmem [#allocation11], %s4963
          %4965 = dma.done %s4962, 16
        $region76: #{tpu_custom_call.1} parent=67 // pred_fallthru
          _
        // Predicated region
        $region77: #{tpu_custom_call.1} parent=67 // pred_check
          %p4966 = pneg %p187
        $region78: #{tpu_custom_call.1} parent=67 // pred_check_branch
          %4968 = sbr.rel (%p4966) target = $region80
        $region79: #{tpu_custom_call.1} parent=67 // pred_region
          %s4969 = sand.u32 %s28, 1
          %s4970 = scalar_lea.sflag [#allocation12], %s4969
          %s4971 = sand.u32 %s172, 1
          %s4972 = scalar_lea.vmem [#allocation13], %s4971
          %4973 = dma.done %s4970, 16
        $region80: #{tpu_custom_call.1} parent=67 // pred_fallthru
          _
      $region68: #{tpu_custom_call.1} parent=5 // pred_fallthru
        _
    $region6: #{tpu_custom_call.1} parent=1 // loop_footer
      %s26 = sadd.s32 1, %s22
    $region7: #{tpu_custom_call.1} parent=1 // loop_footer_branch
      %21 = sbr.rel target = $region3
    $region8: #{tpu_custom_call.1} parent=1 // loop_exit
      _
    %4974 = vsyncpa [#allocation5], 1
    %s4975 = scalar_lea.sflag [#allocation5], 1
    %4976 = vsyncpa %s4975, 1
    %4977 = vsyncpa [#allocation8], 1
    %4978 = vsyncpa [#allocation6], 1
    %s4979 = scalar_lea.sflag [#allocation6], 1
    %4980 = vsyncpa %s4979, 1
    %4981 = vsyncpa [#allocation12], 1
    %s4982 = scalar_lea.sflag [#allocation12], 1
    %4983 = vsyncpa %s4982, 1

</llo_original>
